<compile_context>
chip_gen: v6e
topology: v6e:2x2x1
jax: 0.10.0
libtpu: 0.0.40
codegen_flags: <defaults>
</compile_context>

<pallas_src>
import math

import jax
import jax.numpy as jnp
from jax import lax
from jax.experimental import pallas as pl
from jax.experimental.pallas import tpu as pltpu


_LANE = 128


def _row_tile(n, cap=512):
    """Largest row tile <= cap dividing n (multiples of 8 when actually tiling)."""
    if n <= cap:
        return n
    t = cap
    while t >= 8:
        if n % t == 0:
            return t
        t //= 2
    return n


# ------------------------- fused Set-Abstraction kernel ----------------------

def _make_sa_kernel(n_layers, k, vpu_first):
    def kernel(*refs):
        feat_ref = refs[0]                                 # (tm*k, cin) f32
        o_ref = refs[-1]                                   # (tm, cout) f32
        wb = refs[1:-1]                                    # (w0,b0,w1,b1,...)
        h = feat_ref[...]
        for li in range(n_layers):
            w = wb[2 * li][...]                            # (cin_l, cout_l) bf16
            b = wb[2 * li + 1][...]                        # (1, cout_l) f32
            if li == 0 and vpu_first:
                # Tiny contraction dim (e.g. 3): a few VPU broadcast-FMAs beat
                # an almost-empty MXU pass.  Keep elementwise math in f32.
                w32 = w.astype(jnp.float32)
                y = h[:, 0:1] * w32[0:1, :]
                for j in range(1, w.shape[0]):
                    y = y + h[:, j:j + 1] * w32[j:j + 1, :]
                y = y + b
            else:
                y = jnp.dot(h.astype(jnp.bfloat16), w,
                            preferred_element_type=jnp.float32) + b
            h = jnp.maximum(y, 0.0)                        # SA MLP layers all ReLU
        cm = h.shape[-1]
        tm = h.shape[0] // k
        o_ref[...] = jnp.max(h.reshape(tm, k, cm), axis=1).astype(o_ref.dtype)
    return kernel


def fused_sa_mlp_max(feat2d, layers, m, k):
    """Shared per-point MLP chain + neighborhood max in a single pallas_call.

    feat2d: (m*k, cin) grouped features.  layers: list of (w, b) in f32.
    Returns (m, cout_last) f32.
    """
    _, cin = feat2d.shape
    cout = layers[-1][0].shape[1]
    tm = _row_tile(m)
    grid = (m // tm,)
    vpu_first = layers[0][0].shape[0] <= 4

    args = [feat2d]
    in_specs = [pl.BlockSpec((tm * k, cin), lambda i: (i, 0))]
    for (w, b) in layers:
        w16 = w.astype(jnp.bfloat16)                       # halve weight DMA volume
        args.extend([w16, b])
        in_specs.extend([
            pl.BlockSpec(w16.shape, lambda i: (0, 0)),     # resident across grid
            pl.BlockSpec(b.shape, lambda i: (0, 0)),
        ])

    return pl.pallas_call(
        _make_sa_kernel(len(layers), k, vpu_first),
        out_shape=jax.ShapeDtypeStruct((m, cout), jnp.float32),
        grid=grid,
        in_specs=in_specs,
        out_specs=pl.BlockSpec((tm, cout), lambda i: (i, 0)),
        compiler_params=pltpu.CompilerParams(dimension_semantics=("parallel",)),
    )(*args)


# ------------------------ fused Feature-Propagation kernel -------------------

def _make_fp_kernel(knn, nc, has_skip, relu_flags):
    n_layers = len(relu_flags)

    def kernel(*refs):
        idx_ref, wgt_ref, xc_ref = refs[0], refs[1], refs[2]
        base = 4 if has_skip else 3
        o_ref = refs[-1]
        wb = refs[base:-1]
        tnf = idx_ref.shape[0]

        # 3-NN inverse-distance interpolation as a one-hot weighted matmul,
        # built entirely in VMEM (no O(Nf*Nc) scatter materialized host-side).
        col = lax.broadcasted_iota(jnp.int32, (tnf, nc), 1)
        idx = idx_ref[...]
        wgt = wgt_ref[...]
        interp_mat = jnp.zeros((tnf, nc), jnp.float32)
        for j in range(knn):
            sel = (idx[:, j:j + 1] == col).astype(jnp.float32)
            interp_mat = interp_mat + wgt[:, j:j + 1] * sel
        interp = jnp.dot(interp_mat, xc_ref[...].astype(jnp.float32),
                         preferred_element_type=jnp.float32)      # (tnf, cc)

        # First MLP layer; split-weight form avoids a lane concat [skip, interp].
        if has_skip:
            skip = refs[3][...]
            w_sk, w_in, b0 = wb[0][...], wb[1][...], wb[2][...]
            y = (jnp.dot(skip.astype(jnp.bfloat16), w_sk,
                         preferred_element_type=jnp.float32)
                 + jnp.dot(interp.astype(jnp.bfloat16), w_in,
                           preferred_element_type=jnp.float32) + b0)
            wi = 3
        else:
            w0, b0 = wb[0][...], wb[1][...]
            y = jnp.dot(interp.astype(jnp.bfloat16), w0,
                        preferred_element_type=jnp.float32) + b0
            wi = 2
        h = jnp.maximum(y, 0.0) if relu_flags[0] else y

        for li in range(1, n_layers):
            w, b = wb[wi][...], wb[wi + 1][...]
            wi += 2
            y = jnp.dot(h.astype(jnp.bfloat16), w,
                        preferred_element_type=jnp.float32) + b
            h = jnp.maximum(y, 0.0) if relu_flags[li] else y

        o_ref[...] = h.astype(o_ref.dtype)

    return kernel


def pairwise_sqdist(a, b):
    """a:(M,3) b:(N,3) -> (M,N) squared distances."""
    return (jnp.sum(a * a, -1)[:, None] + jnp.sum(b * b, -1)[None, :]
            - 2.0 * (a @ b.T))


def feature_propagation(x_coarse, pos_coarse, x_skip, pos_fine, layers, knn=3):
    """3-NN interpolation + optional skip + MLP chain fused in one pallas_call.

    layers: list of (w, b, relu).  For the first layer, w rows are ordered
    [skip channels ; interpolated channels] (same as concat([x_skip, interp])).
    """
    nf = pos_fine.shape[0]
    nc, cc = x_coarse.shape

    d2 = pairwise_sqdist(pos_fine, pos_coarse)
    neg_d2, idx = lax.top_k(-d2, knn)
    # Keep the clamp: d2 can go slightly negative from cancellation.
    w = 1.0 / (jnp.maximum(-neg_d2, 0.0) + 1e-8)
    w = w / jnp.sum(w, axis=-1, keepdims=True)
    idx = idx.astype(jnp.int32)
    w = w.astype(jnp.float32)

    has_skip = x_skip is not None
    relu_flags = tuple(bool(r) for (_, _, r) in layers)
    cout = layers[-1][0].shape[1]

    tnf = _row_tile(nf)
    grid = (nf // tnf,)

    args = [idx, w, x_coarse]
    in_specs = [
        pl.BlockSpec((tnf, knn), lambda i: (i, 0)),
        pl.BlockSpec((tnf, knn), lambda i: (i, 0)),
        pl.BlockSpec((nc, cc), lambda i: (0, 0)),          # coarse feats resident
    ]
    if has_skip:
        cs = x_skip.shape[1]
        args.append(x_skip)
        in_specs.append(pl.BlockSpec((tnf, cs), lambda i: (i, 0)))

    for li, (wl, bl, _) in enumerate(layers):
        wl16 = wl.astype(jnp.bfloat16)
        if li == 0 and has_skip:
            cs = x_skip.shape[1]
            w_sk, w_in = wl16[:cs], wl16[cs:]
            args.extend([w_sk, w_in, bl])
            in_specs.extend([
                pl.BlockSpec(w_sk.shape, lambda i: (0, 0)),
                pl.BlockSpec(w_in.shape, lambda i: (0, 0)),
                pl.BlockSpec(bl.shape, lambda i: (0, 0)),
            ])
        else:
            args.extend([wl16, bl])
            in_specs.extend([
                pl.BlockSpec(wl16.shape, lambda i: (0, 0)),
                pl.BlockSpec(bl.shape, lambda i: (0, 0)),
            ])

    return pl.pallas_call(
        _make_fp_kernel(knn, nc, has_skip, relu_flags),
        out_shape=jax.ShapeDtypeStruct((nf, cout), jnp.float32),
        grid=grid,
        in_specs=in_specs,
        out_specs=pl.BlockSpec((tnf, cout), lambda i: (i, 0)),
        compiler_params=pltpu.CompilerParams(dimension_semantics=("parallel",)),
    )(*args)


# ------------------------------ JAX glue ops --------------------------------

def farthest_point_sample(pos, m):
    """Deterministic FPS starting from point 0; returns (m,) int32 indices."""
    # TODO(synk): sequential data-dependent argmax loop; stays in plain JAX.
    n = pos.shape[0]

    def body(i, carry):
        dists, idxs, last = carry
        d = jnp.sum((pos - pos[last]) ** 2, axis=-1)
        dists = jnp.minimum(dists, d)
        nxt = jnp.argmax(dists).astype(jnp.int32)
        idxs = idxs.at[i].set(nxt)
        return dists, idxs, nxt

    dists0 = jnp.full((n,), jnp.inf, jnp.float32)
    idxs0 = jnp.zeros((m,), jnp.int32)
    _, idxs, _ = lax.fori_loop(1, m, body, (dists0, idxs0, jnp.int32(0)))
    return idxs


def set_abstraction(x, pos, mlp_params, m, k):
    """PointNet++ Set Abstraction: FPS -> kNN group -> fused (MLP + max) kernel."""
    idx = farthest_point_sample(pos, m)
    centers = pos[idx]                                   # (m, 3)
    d2 = pairwise_sqdist(centers, pos)                   # (m, N)
    _, nn_idx = lax.top_k(-d2, k)                        # (m, k)
    nbr_pos = pos[nn_idx]                                # (m, k, 3)
    rel = nbr_pos - centers[:, None, :]                  # (m, k, 3)
    if x is None:
        feat = rel
    else:
        feat = jnp.concatenate([x[nn_idx], rel], axis=-1)
    feat2d = feat.reshape(m * k, feat.shape[-1])
    out = fused_sa_mlp_max(feat2d, mlp_params, m, k)     # one Pallas kernel
    return out, centers


# --------------------------- parameters / model -----------------------------

def _init_layer(key, cin, cout):
    w = jax.random.normal(key, (cin, cout), jnp.float32) / math.sqrt(float(cin))
    b = jnp.zeros((1, cout), jnp.float32)
    return (w, b)


def init_params(key):
    ks = jax.random.split(key, 7)
    return {
        # SA1: 3 (rel pos) -> 16 -> 32
        "sa1": [_init_layer(ks[0], 3, 16), _init_layer(ks[1], 16, 32)],
        # SA2: 32 + 3 -> 64
        "sa2": [_init_layer(ks[2], 35, 64)],
        # FP1: 32 (skip) + 64 (interp) -> 64
        "fp1": [_init_layer(ks[3], 96, 64)],
        # FP2: 64 (interp, no skip features at level 0) -> 64
        "fp2": [_init_layer(ks[4], 64, 64)],
        # Linear head: 64 -> 32 -> 4 classes
        "lin": [_init_layer(ks[5], 64, 32), _init_layer(ks[6], 32, 4)],
    }


def pointnet2_segment_forward(params, pos, batch):
    """Mirrors PointNet2Segment.forward (eval mode) for a single point cloud.

    Downsampling: (None,pos) -> SA1 -> SA2 ; Upsampling: FP1 -> FP2 ;
    Head: Linear -> ReLU -> Dropout(eval=identity) -> Linear (fused into FP2).
    """
    # TODO(synk): multi-graph batching (per-sample FPS/kNN segmentation by
    # `batch`) not implemented; this synthetic setup uses a single batch id.
    del batch
    x0, pos0 = None, pos
    x1, pos1 = set_abstraction(x0, pos0, params["sa1"], m=32, k=8)
    x2, pos2 = set_abstraction(x1, pos1, params["sa2"], m=16, k=8)

    u1 = feature_propagation(x2, pos2, x1, pos1,
                             [(w, b, True) for (w, b) in params["fp1"]])

    # FP2 fused with the linear head; F.dropout(p=0.5) is identity in eval mode.
    n_classes = params["lin"][-1][0].shape[1]
    head_layers = [(w, b, True) for (w, b) in params["fp2"]]
    n_lin = len(params["lin"])
    for i, (w, b) in enumerate(params["lin"]):
        if i < n_lin - 1:
            head_layers.append((w, b, True))
        else:
            # Pad the narrow class dim to a full 128-lane slab -> unmasked stores;
            # slice back to n_classes in the wrapper.
            wp = jnp.zeros((w.shape[0], _LANE), jnp.float32).at[:, :w.shape[1]].set(w)
            bp = jnp.zeros((1, _LANE), jnp.float32).at[:, :b.shape[1]].set(b)
            head_layers.append((wp, bp, False))

    out_padded = feature_propagation(u1, pos1, x0, pos0, head_layers)
    return out_padded[:, :n_classes]


# --------------------------------- main --------------------------------------

if __name__ == "__main__":
    key = jax.random.PRNGKey(0)
    k_pos, k_par = jax.random.split(key)

    N = 64
    pos = jax.random.normal(k_pos, (N, 3), jnp.float32)
    batch = jnp.zeros((N,), jnp.int32)
    params = init_params(k_par)

    fwd = jax.jit(pointnet2_segment_forward)
    out = fwd(params, pos, batch)
    jax.block_until_ready(out)

    assert out.shape == (N, 4), out.shape
    assert out.dtype == jnp.float32
    assert bool(jnp.all(jnp.isfinite(out)))
    print("KERNEL_OK")
</pallas_src>

<mosaic_0001>
module attributes {stable_mosaic.version = 11 : i64} {
  func.func @kernel(%arg0: i32, %arg1: memref<256x3xf32, #tpu.memory_space<vmem>>, %arg2: memref<3x16xbf16, #tpu.memory_space<vmem>>, %arg3: memref<1x16xf32, #tpu.memory_space<vmem>>, %arg4: memref<16x32xbf16, #tpu.memory_space<vmem>>, %arg5: memref<1x32xf32, #tpu.memory_space<vmem>>, %arg6: memref<32x32xf32, #tpu.memory_space<vmem>>) attributes {dimension_semantics = [#tpu.dimension_semantics<parallel>], iteration_bounds = array<i64: 1>, scalar_prefetch = 0 : i64, scratch_operands = 0 : i64, tpu.core_type = #tpu.core_type<tc>, window_params = [{transform_indices = @transform_0, window_bounds = array<i64: 256, 3>}, {pipeline_mode = #tpu.pipeline_mode<synchronous>, transform_indices = @transform_1, window_bounds = array<i64: 3, 16>}, {pipeline_mode = #tpu.pipeline_mode<synchronous>, transform_indices = @transform_2, window_bounds = array<i64: 1, 16>}, {pipeline_mode = #tpu.pipeline_mode<synchronous>, transform_indices = @transform_3, window_bounds = array<i64: 16, 32>}, {pipeline_mode = #tpu.pipeline_mode<synchronous>, transform_indices = @transform_4, window_bounds = array<i64: 1, 32>}, {transform_indices = @transform_5, window_bounds = array<i64: 32, 32>}]} {
    %c0 = arith.constant 0 : index
    %c0_0 = arith.constant 0 : index
    %0 = vector.load %arg1[%c0, %c0_0] : memref<256x3xf32, #tpu.memory_space<vmem>>, vector<256x3xf32>
    %c0_1 = arith.constant 0 : index
    %c0_2 = arith.constant 0 : index
    %1 = vector.load %arg2[%c0_1, %c0_2] : memref<3x16xbf16, #tpu.memory_space<vmem>>, vector<3x16xbf16>
    %c0_3 = arith.constant 0 : index
    %c0_4 = arith.constant 0 : index
    %2 = vector.load %arg3[%c0_3, %c0_4] : memref<1x16xf32, #tpu.memory_space<vmem>>, vector<1x16xf32>
    %3 = arith.extf %1 : vector<3x16xbf16> to vector<3x16xf32>
    %4 = vector.extract_strided_slice %0 {offsets = [0, 0], sizes = [256, 1], strides = [1, 1]} : vector<256x3xf32> to vector<256x1xf32>
    %5 = vector.extract_strided_slice %3 {offsets = [0, 0], sizes = [1, 16], strides = [1, 1]} : vector<3x16xf32> to vector<1x16xf32>
    %6 = vector.broadcast %4 : vector<256x1xf32> to vector<256x16xf32>
    %7 = vector.broadcast %5 : vector<1x16xf32> to vector<256x16xf32>
    %8 = arith.mulf %6, %7 : vector<256x16xf32>
    %9 = vector.extract_strided_slice %0 {offsets = [0, 1], sizes = [256, 1], strides = [1, 1]} : vector<256x3xf32> to vector<256x1xf32>
    %10 = vector.extract_strided_slice %3 {offsets = [1, 0], sizes = [1, 16], strides = [1, 1]} : vector<3x16xf32> to vector<1x16xf32>
    %11 = vector.broadcast %9 : vector<256x1xf32> to vector<256x16xf32>
    %12 = vector.broadcast %10 : vector<1x16xf32> to vector<256x16xf32>
    %13 = arith.mulf %11, %12 : vector<256x16xf32>
    %14 = arith.addf %8, %13 : vector<256x16xf32>
    %15 = vector.extract_strided_slice %0 {offsets = [0, 2], sizes = [256, 1], strides = [1, 1]} : vector<256x3xf32> to vector<256x1xf32>
    %16 = vector.extract_strided_slice %3 {offsets = [2, 0], sizes = [1, 16], strides = [1, 1]} : vector<3x16xf32> to vector<1x16xf32>
    %17 = vector.broadcast %15 : vector<256x1xf32> to vector<256x16xf32>
    %18 = vector.broadcast %16 : vector<1x16xf32> to vector<256x16xf32>
    %19 = arith.mulf %17, %18 : vector<256x16xf32>
    %20 = arith.addf %14, %19 : vector<256x16xf32>
    %21 = vector.broadcast %2 : vector<1x16xf32> to vector<256x16xf32>
    %22 = arith.addf %20, %21 : vector<256x16xf32>
    %cst = arith.constant 0.000000e+00 : f32
    %23 = vector.broadcast %cst : f32 to vector<256x16xf32>
    %24 = arith.maximumf %22, %23 : vector<256x16xf32>
    %c0_5 = arith.constant 0 : index
    %c0_6 = arith.constant 0 : index
    %25 = vector.load %arg4[%c0_5, %c0_6] : memref<16x32xbf16, #tpu.memory_space<vmem>>, vector<16x32xbf16>
    %c0_7 = arith.constant 0 : index
    %c0_8 = arith.constant 0 : index
    %26 = vector.load %arg5[%c0_7, %c0_8] : memref<1x32xf32, #tpu.memory_space<vmem>>, vector<1x32xf32>
    %27 = arith.truncf %24 : vector<256x16xf32> to vector<256x16xbf16>
    %cst_9 = arith.constant dense<0.000000e+00> : vector<256x32xf32>
    %28 = tpu.matmul %27, %25, %cst_9 {dimension_numbers = #tpu.dot_dimension_numbers<[1], [0], [0], [1], [0, 0, 1, 1], [], []>} : vector<256x16xbf16>, vector<16x32xbf16>, vector<256x32xf32> -> vector<256x32xf32>
    %29 = vector.broadcast %26 : vector<1x32xf32> to vector<256x32xf32>
    %30 = arith.addf %28, %29 : vector<256x32xf32>
    %cst_10 = arith.constant 0.000000e+00 : f32
    %31 = vector.broadcast %cst_10 : f32 to vector<256x32xf32>
    %32 = arith.maximumf %30, %31 : vector<256x32xf32>
    %33 = vector.shape_cast %32 : vector<256x32xf32> to vector<32x8x32xf32>
    %cst_11 = arith.constant dense<0xFF800000> : vector<32x32xf32>
    %34 = vector.multi_reduction <maximumf>, %33, %cst_11 [1] : vector<32x8x32xf32> to vector<32x32xf32>
    %c0_12 = arith.constant 0 : index
    %c0_13 = arith.constant 0 : index
    %35 = vector.load %arg6[%c0_12, %c0_13] : memref<32x32xf32, #tpu.memory_space<vmem>>, vector<32x32xf32>
    tpu.vector_store %arg6[%c0_12, %c0_13], %34 {strides = array<i32>} : memref<32x32xf32, #tpu.memory_space<vmem>>, vector<32x32xf32>,
    return
  }
  func.func @transform_0(%arg0: i32) -> (i32, i32) {
    %c0_i32 = arith.constant 0 : i32
    %c0_i32_0 = arith.constant 0 : i32
    return %arg0, %c0_i32 : i32, i32
  }
  func.func @transform_1(%arg0: i32) -> (i32, i32) {
    %c0_i32 = arith.constant 0 : i32
    %c0_i32_0 = arith.constant 0 : i32
    %c0_i32_1 = arith.constant 0 : i32
    return %c0_i32, %c0_i32_0 : i32, i32
  }
  func.func @transform_2(%arg0: i32) -> (i32, i32) {
    %c0_i32 = arith.constant 0 : i32
    %c0_i32_0 = arith.constant 0 : i32
    %c0_i32_1 = arith.constant 0 : i32
    return %c0_i32, %c0_i32_0 : i32, i32
  }
  func.func @transform_3(%arg0: i32) -> (i32, i32) {
    %c0_i32 = arith.constant 0 : i32
    %c0_i32_0 = arith.constant 0 : i32
    %c0_i32_1 = arith.constant 0 : i32
    return %c0_i32, %c0_i32_0 : i32, i32
  }
  func.func @transform_4(%arg0: i32) -> (i32, i32) {
    %c0_i32 = arith.constant 0 : i32
    %c0_i32_0 = arith.constant 0 : i32
    %c0_i32_1 = arith.constant 0 : i32
    return %c0_i32, %c0_i32_0 : i32, i32
  }
  func.func @transform_5(%arg0: i32) -> (i32, i32) {
    %c0_i32 = arith.constant 0 : i32
    %c0_i32_0 = arith.constant 0 : i32
    return %arg0, %c0_i32 : i32, i32
  }
}

module attributes {stable_mosaic.version = 11 : i64} {
  func.func @kernel(%arg0: i32, %arg1: memref<128x35xf32, #tpu.memory_space<vmem>>, %arg2: memref<35x64xbf16, #tpu.memory_space<vmem>>, %arg3: memref<1x64xf32, #tpu.memory_space<vmem>>, %arg4: memref<16x64xf32, #tpu.memory_space<vmem>>) attributes {dimension_semantics = [#tpu.dimension_semantics<parallel>], iteration_bounds = array<i64: 1>, scalar_prefetch = 0 : i64, scratch_operands = 0 : i64, tpu.core_type = #tpu.core_type<tc>, window_params = [{transform_indices = @transform_0, window_bounds = array<i64: 128, 35>}, {pipeline_mode = #tpu.pipeline_mode<synchronous>, transform_indices = @transform_1, window_bounds = array<i64: 35, 64>}, {pipeline_mode = #tpu.pipeline_mode<synchronous>, transform_indices = @transform_2, window_bounds = array<i64: 1, 64>}, {transform_indices = @transform_3, window_bounds = array<i64: 16, 64>}]} {
    %c0 = arith.constant 0 : index
    %c0_0 = arith.constant 0 : index
    %0 = vector.load %arg1[%c0, %c0_0] : memref<128x35xf32, #tpu.memory_space<vmem>>, vector<128x35xf32>
    %c0_1 = arith.constant 0 : index
    %c0_2 = arith.constant 0 : index
    %1 = vector.load %arg2[%c0_1, %c0_2] : memref<35x64xbf16, #tpu.memory_space<vmem>>, vector<35x64xbf16>
    %c0_3 = arith.constant 0 : index
    %c0_4 = arith.constant 0 : index
    %2 = vector.load %arg3[%c0_3, %c0_4] : memref<1x64xf32, #tpu.memory_space<vmem>>, vector<1x64xf32>
    %3 = arith.truncf %0 : vector<128x35xf32> to vector<128x35xbf16>
    %cst = arith.constant dense<0.000000e+00> : vector<128x64xf32>
    %4 = tpu.matmul %3, %1, %cst {dimension_numbers = #tpu.dot_dimension_numbers<[1], [0], [0], [1], [0, 0, 1, 1], [], []>} : vector<128x35xbf16>, vector<35x64xbf16>, vector<128x64xf32> -> vector<128x64xf32>
    %5 = vector.broadcast %2 : vector<1x64xf32> to vector<128x64xf32>
    %6 = arith.addf %4, %5 : vector<128x64xf32>
    %cst_5 = arith.constant 0.000000e+00 : f32
    %7 = vector.broadcast %cst_5 : f32 to vector<128x64xf32>
    %8 = arith.maximumf %6, %7 : vector<128x64xf32>
    %9 = vector.shape_cast %8 : vector<128x64xf32> to vector<16x8x64xf32>
    %cst_6 = arith.constant dense<0xFF800000> : vector<16x64xf32>
    %10 = vector.multi_reduction <maximumf>, %9, %cst_6 [1] : vector<16x8x64xf32> to vector<16x64xf32>
    %c0_7 = arith.constant 0 : index
    %c0_8 = arith.constant 0 : index
    %11 = vector.load %arg4[%c0_7, %c0_8] : memref<16x64xf32, #tpu.memory_space<vmem>>, vector<16x64xf32>
    tpu.vector_store %arg4[%c0_7, %c0_8], %10 {strides = array<i32>} : memref<16x64xf32, #tpu.memory_space<vmem>>, vector<16x64xf32>,
    return
  }
  func.func @transform_0(%arg0: i32) -> (i32, i32) {
    %c0_i32 = arith.constant 0 : i32
    %c0_i32_0 = arith.constant 0 : i32
    return %arg0, %c0_i32 : i32, i32
  }
  func.func @transform_1(%arg0: i32) -> (i32, i32) {
    %c0_i32 = arith.constant 0 : i32
    %c0_i32_0 = arith.constant 0 : i32
    %c0_i32_1 = arith.constant 0 : i32
    return %c0_i32, %c0_i32_0 : i32, i32
  }
  func.func @transform_2(%arg0: i32) -> (i32, i32) {
    %c0_i32 = arith.constant 0 : i32
    %c0_i32_0 = arith.constant 0 : i32
    %c0_i32_1 = arith.constant 0 : i32
    return %c0_i32, %c0_i32_0 : i32, i32
  }
  func.func @transform_3(%arg0: i32) -> (i32, i32) {
    %c0_i32 = arith.constant 0 : i32
    %c0_i32_0 = arith.constant 0 : i32
    return %arg0, %c0_i32 : i32, i32
  }
}

module attributes {stable_mosaic.version = 11 : i64} {
  func.func @kernel(%arg0: i32, %arg1: memref<32x3xi32, #tpu.memory_space<vmem>>, %arg2: memref<32x3xf32, #tpu.memory_space<vmem>>, %arg3: memref<16x64xf32, #tpu.memory_space<vmem>>, %arg4: memref<32x32xf32, #tpu.memory_space<vmem>>, %arg5: memref<32x64xbf16, #tpu.memory_space<vmem>>, %arg6: memref<64x64xbf16, #tpu.memory_space<vmem>>, %arg7: memref<1x64xf32, #tpu.memory_space<vmem>>, %arg8: memref<32x64xf32, #tpu.memory_space<vmem>>) attributes {dimension_semantics = [#tpu.dimension_semantics<parallel>], iteration_bounds = array<i64: 1>, scalar_prefetch = 0 : i64, scratch_operands = 0 : i64, tpu.core_type = #tpu.core_type<tc>, window_params = [{transform_indices = @transform_0, window_bounds = array<i64: 32, 3>}, {transform_indices = @transform_1, window_bounds = array<i64: 32, 3>}, {pipeline_mode = #tpu.pipeline_mode<synchronous>, transform_indices = @transform_2, window_bounds = array<i64: 16, 64>}, {transform_indices = @transform_3, window_bounds = array<i64: 32, 32>}, {pipeline_mode = #tpu.pipeline_mode<synchronous>, transform_indices = @transform_4, window_bounds = array<i64: 32, 64>}, {pipeline_mode = #tpu.pipeline_mode<synchronous>, transform_indices = @transform_5, window_bounds = array<i64: 64, 64>}, {pipeline_mode = #tpu.pipeline_mode<synchronous>, transform_indices = @transform_6, window_bounds = array<i64: 1, 64>}, {transform_indices = @transform_7, window_bounds = array<i64: 32, 64>}]} {
    %0 = tpu.iota {dimensions = array<i32: 1>} : vector<32x16xi32>
    %c0 = arith.constant 0 : index
    %c0_0 = arith.constant 0 : index
    %1 = vector.load %arg1[%c0, %c0_0] : memref<32x3xi32, #tpu.memory_space<vmem>>, vector<32x3xi32>
    %c0_1 = arith.constant 0 : index
    %c0_2 = arith.constant 0 : index
    %2 = vector.load %arg2[%c0_1, %c0_2] : memref<32x3xf32, #tpu.memory_space<vmem>>, vector<32x3xf32>
    %cst = arith.constant 0.000000e+00 : f32
    %3 = vector.broadcast %cst : f32 to vector<32x16xf32>
    %4 = vector.extract_strided_slice %1 {offsets = [0, 0], sizes = [32, 1], strides = [1, 1]} : vector<32x3xi32> to vector<32x1xi32>
    %5 = vector.broadcast %4 : vector<32x1xi32> to vector<32x16xi32>
    %6 = arith.cmpi eq, %5, %0 : vector<32x16xi32>
    %7 = arith.extui %6 : vector<32x16xi1> to vector<32x16xi32>
    %8 = arith.sitofp %7 : vector<32x16xi32> to vector<32x16xf32>
    %9 = vector.extract_strided_slice %2 {offsets = [0, 0], sizes = [32, 1], strides = [1, 1]} : vector<32x3xf32> to vector<32x1xf32>
    %10 = vector.broadcast %9 : vector<32x1xf32> to vector<32x16xf32>
    %11 = arith.mulf %10, %8 : vector<32x16xf32>
    %12 = arith.addf %3, %11 : vector<32x16xf32>
    %13 = vector.extract_strided_slice %1 {offsets = [0, 1], sizes = [32, 1], strides = [1, 1]} : vector<32x3xi32> to vector<32x1xi32>
    %14 = vector.broadcast %13 : vector<32x1xi32> to vector<32x16xi32>
    %15 = arith.cmpi eq, %14, %0 : vector<32x16xi32>
    %16 = arith.extui %15 : vector<32x16xi1> to vector<32x16xi32>
    %17 = arith.sitofp %16 : vector<32x16xi32> to vector<32x16xf32>
    %18 = vector.extract_strided_slice %2 {offsets = [0, 1], sizes = [32, 1], strides = [1, 1]} : vector<32x3xf32> to vector<32x1xf32>
    %19 = vector.broadcast %18 : vector<32x1xf32> to vector<32x16xf32>
    %20 = arith.mulf %19, %17 : vector<32x16xf32>
    %21 = arith.addf %12, %20 : vector<32x16xf32>
    %22 = vector.extract_strided_slice %1 {offsets = [0, 2], sizes = [32, 1], strides = [1, 1]} : vector<32x3xi32> to vector<32x1xi32>
    %23 = vector.broadcast %22 : vector<32x1xi32> to vector<32x16xi32>
    %24 = arith.cmpi eq, %23, %0 : vector<32x16xi32>
    %25 = arith.extui %24 : vector<32x16xi1> to vector<32x16xi32>
    %26 = arith.sitofp %25 : vector<32x16xi32> to vector<32x16xf32>
    %27 = vector.extract_strided_slice %2 {offsets = [0, 2], sizes = [32, 1], strides = [1, 1]} : vector<32x3xf32> to vector<32x1xf32>
    %28 = vector.broadcast %27 : vector<32x1xf32> to vector<32x16xf32>
    %29 = arith.mulf %28, %26 : vector<32x16xf32>
    %30 = arith.addf %21, %29 : vector<32x16xf32>
    %c0_3 = arith.constant 0 : index
    %c0_4 = arith.constant 0 : index
    %31 = vector.load %arg3[%c0_3, %c0_4] : memref<16x64xf32, #tpu.memory_space<vmem>>, vector<16x64xf32>
    %cst_5 = arith.constant dense<0.000000e+00> : vector<32x64xf32>
    %32 = tpu.matmul %30, %31, %cst_5 {dimension_numbers = #tpu.dot_dimension_numbers<[1], [0], [0], [1], [0, 0, 1, 1], [], []>} : vector<32x16xf32>, vector<16x64xf32>, vector<32x64xf32> -> vector<32x64xf32>
    %c0_6 = arith.constant 0 : index
    %c0_7 = arith.constant 0 : index
    %33 = vector.load %arg4[%c0_6, %c0_7] : memref<32x32xf32, #tpu.memory_space<vmem>>, vector<32x32xf32>
    %c0_8 = arith.constant 0 : index
    %c0_9 = arith.constant 0 : index
    %34 = vector.load %arg5[%c0_8, %c0_9] : memref<32x64xbf16, #tpu.memory_space<vmem>>, vector<32x64xbf16>
    %c0_10 = arith.constant 0 : index
    %c0_11 = arith.constant 0 : index
    %35 = vector.load %arg6[%c0_10, %c0_11] : memref<64x64xbf16, #tpu.memory_space<vmem>>, vector<64x64xbf16>
    %c0_12 = arith.constant 0 : index
    %c0_13 = arith.constant 0 : index
    %36 = vector.load %arg7[%c0_12, %c0_13] : memref<1x64xf32, #tpu.memory_space<vmem>>, vector<1x64xf32>
    %37 = arith.truncf %33 : vector<32x32xf32> to vector<32x32xbf16>
    %cst_14 = arith.constant dense<0.000000e+00> : vector<32x64xf32>
    %38 = tpu.matmul %37, %34, %cst_14 {dimension_numbers = #tpu.dot_dimension_numbers<[1], [0], [0], [1], [0, 0, 1, 1], [], []>} : vector<32x32xbf16>, vector<32x64xbf16>, vector<32x64xf32> -> vector<32x64xf32>
    %39 = arith.truncf %32 : vector<32x64xf32> to vector<32x64xbf16>
    %cst_15 = arith.constant dense<0.000000e+00> : vector<32x64xf32>
    %40 = tpu.matmul %39, %35, %cst_15 {dimension_numbers = #tpu.dot_dimension_numbers<[1], [0], [0], [1], [0, 0, 1, 1], [], []>} : vector<32x64xbf16>, vector<64x64xbf16>, vector<32x64xf32> -> vector<32x64xf32>
    %41 = arith.addf %38, %40 : vector<32x64xf32>
    %42 = vector.broadcast %36 : vector<1x64xf32> to vector<32x64xf32>
    %43 = arith.addf %41, %42 : vector<32x64xf32>
    %cst_16 = arith.constant 0.000000e+00 : f32
    %44 = vector.broadcast %cst_16 : f32 to vector<32x64xf32>
    %45 = arith.maximumf %43, %44 : vector<32x64xf32>
    %c0_17 = arith.constant 0 : index
    %c0_18 = arith.constant 0 : index
    %46 = vector.load %arg8[%c0_17, %c0_18] : memref<32x64xf32, #tpu.memory_space<vmem>>, vector<32x64xf32>
    tpu.vector_store %arg8[%c0_17, %c0_18], %45 {strides = array<i32>} : memref<32x64xf32, #tpu.memory_space<vmem>>, vector<32x64xf32>,
    return
  }
  func.func @transform_0(%arg0: i32) -> (i32, i32) {
    %c0_i32 = arith.constant 0 : i32
    %c0_i32_0 = arith.constant 0 : i32
    return %arg0, %c0_i32 : i32, i32
  }
  func.func @transform_1(%arg0: i32) -> (i32, i32) {
    %c0_i32 = arith.constant 0 : i32
    %c0_i32_0 = arith.constant 0 : i32
    return %arg0, %c0_i32 : i32, i32
  }
  func.func @transform_2(%arg0: i32) -> (i32, i32) {
    %c0_i32 = arith.constant 0 : i32
    %c0_i32_0 = arith.constant 0 : i32
    %c0_i32_1 = arith.constant 0 : i32
    return %c0_i32, %c0_i32_0 : i32, i32
  }
  func.func @transform_3(%arg0: i32) -> (i32, i32) {
    %c0_i32 = arith.constant 0 : i32
    %c0_i32_0 = arith.constant 0 : i32
    return %arg0, %c0_i32 : i32, i32
  }
  func.func @transform_4(%arg0: i32) -> (i32, i32) {
    %c0_i32 = arith.constant 0 : i32
    %c0_i32_0 = arith.constant 0 : i32
    %c0_i32_1 = arith.constant 0 : i32
    return %c0_i32, %c0_i32_0 : i32, i32
  }
  func.func @transform_5(%arg0: i32) -> (i32, i32) {
    %c0_i32 = arith.constant 0 : i32
    %c0_i32_0 = arith.constant 0 : i32
    %c0_i32_1 = arith.constant 0 : i32
    return %c0_i32, %c0_i32_0 : i32, i32
  }
  func.func @transform_6(%arg0: i32) -> (i32, i32) {
    %c0_i32 = arith.constant 0 : i32
    %c0_i32_0 = arith.constant 0 : i32
    %c0_i32_1 = arith.constant 0 : i32
    return %c0_i32, %c0_i32_0 : i32, i32
  }
  func.func @transform_7(%arg0: i32) -> (i32, i32) {
    %c0_i32 = arith.constant 0 : i32
    %c0_i32_0 = arith.constant 0 : i32
    return %arg0, %c0_i32 : i32, i32
  }
}

module attributes {stable_mosaic.version = 11 : i64} {
  func.func @kernel(%arg0: i32, %arg1: memref<64x3xi32, #tpu.memory_space<vmem>>, %arg2: memref<64x3xf32, #tpu.memory_space<vmem>>, %arg3: memref<32x64xf32, #tpu.memory_space<vmem>>, %arg4: memref<64x64xbf16, #tpu.memory_space<vmem>>, %arg5: memref<1x64xf32, #tpu.memory_space<vmem>>, %arg6: memref<64x32xbf16, #tpu.memory_space<vmem>>, %arg7: memref<1x32xf32, #tpu.memory_space<vmem>>, %arg8: memref<32x128xbf16, #tpu.memory_space<vmem>>, %arg9: memref<1x128xf32, #tpu.memory_space<vmem>>, %arg10: memref<64x128xf32, #tpu.memory_space<vmem>>) attributes {dimension_semantics = [#tpu.dimension_semantics<parallel>], iteration_bounds = array<i64: 1>, scalar_prefetch = 0 : i64, scratch_operands = 0 : i64, tpu.core_type = #tpu.core_type<tc>, window_params = [{transform_indices = @transform_0, window_bounds = array<i64: 64, 3>}, {transform_indices = @transform_1, window_bounds = array<i64: 64, 3>}, {pipeline_mode = #tpu.pipeline_mode<synchronous>, transform_indices = @transform_2, window_bounds = array<i64: 32, 64>}, {pipeline_mode = #tpu.pipeline_mode<synchronous>, transform_indices = @transform_3, window_bounds = array<i64: 64, 64>}, {pipeline_mode = #tpu.pipeline_mode<synchronous>, transform_indices = @transform_4, window_bounds = array<i64: 1, 64>}, {pipeline_mode = #tpu.pipeline_mode<synchronous>, transform_indices = @transform_5, window_bounds = array<i64: 64, 32>}, {pipeline_mode = #tpu.pipeline_mode<synchronous>, transform_indices = @transform_6, window_bounds = array<i64: 1, 32>}, {pipeline_mode = #tpu.pipeline_mode<synchronous>, transform_indices = @transform_7, window_bounds = array<i64: 32, 128>}, {pipeline_mode = #tpu.pipeline_mode<synchronous>, transform_indices = @transform_8, window_bounds = array<i64: 1, 128>}, {transform_indices = @transform_9, window_bounds = array<i64: 64, 128>}]} {
    %0 = tpu.iota {dimensions = array<i32: 1>} : vector<64x32xi32>
    %c0 = arith.constant 0 : index
    %c0_0 = arith.constant 0 : index
    %1 = vector.load %arg1[%c0, %c0_0] : memref<64x3xi32, #tpu.memory_space<vmem>>, vector<64x3xi32>
    %c0_1 = arith.constant 0 : index
    %c0_2 = arith.constant 0 : index
    %2 = vector.load %arg2[%c0_1, %c0_2] : memref<64x3xf32, #tpu.memory_space<vmem>>, vector<64x3xf32>
    %cst = arith.constant 0.000000e+00 : f32
    %3 = vector.broadcast %cst : f32 to vector<64x32xf32>
    %4 = vector.extract_strided_slice %1 {offsets = [0, 0], sizes = [64, 1], strides = [1, 1]} : vector<64x3xi32> to vector<64x1xi32>
    %5 = vector.broadcast %4 : vector<64x1xi32> to vector<64x32xi32>
    %6 = arith.cmpi eq, %5, %0 : vector<64x32xi32>
    %7 = arith.extui %6 : vector<64x32xi1> to vector<64x32xi32>
    %8 = arith.sitofp %7 : vector<64x32xi32> to vector<64x32xf32>
    %9 = vector.extract_strided_slice %2 {offsets = [0, 0], sizes = [64, 1], strides = [1, 1]} : vector<64x3xf32> to vector<64x1xf32>
    %10 = vector.broadcast %9 : vector<64x1xf32> to vector<64x32xf32>
    %11 = arith.mulf %10, %8 : vector<64x32xf32>
    %12 = arith.addf %3, %11 : vector<64x32xf32>
    %13 = vector.extract_strided_slice %1 {offsets = [0, 1], sizes = [64, 1], strides = [1, 1]} : vector<64x3xi32> to vector<64x1xi32>
    %14 = vector.broadcast %13 : vector<64x1xi32> to vector<64x32xi32>
    %15 = arith.cmpi eq, %14, %0 : vector<64x32xi32>
    %16 = arith.extui %15 : vector<64x32xi1> to vector<64x32xi32>
    %17 = arith.sitofp %16 : vector<64x32xi32> to vector<64x32xf32>
    %18 = vector.extract_strided_slice %2 {offsets = [0, 1], sizes = [64, 1], strides = [1, 1]} : vector<64x3xf32> to vector<64x1xf32>
    %19 = vector.broadcast %18 : vector<64x1xf32> to vector<64x32xf32>
    %20 = arith.mulf %19, %17 : vector<64x32xf32>
    %21 = arith.addf %12, %20 : vector<64x32xf32>
    %22 = vector.extract_strided_slice %1 {offsets = [0, 2], sizes = [64, 1], strides = [1, 1]} : vector<64x3xi32> to vector<64x1xi32>
    %23 = vector.broadcast %22 : vector<64x1xi32> to vector<64x32xi32>
    %24 = arith.cmpi eq, %23, %0 : vector<64x32xi32>
    %25 = arith.extui %24 : vector<64x32xi1> to vector<64x32xi32>
    %26 = arith.sitofp %25 : vector<64x32xi32> to vector<64x32xf32>
    %27 = vector.extract_strided_slice %2 {offsets = [0, 2], sizes = [64, 1], strides = [1, 1]} : vector<64x3xf32> to vector<64x1xf32>
    %28 = vector.broadcast %27 : vector<64x1xf32> to vector<64x32xf32>
    %29 = arith.mulf %28, %26 : vector<64x32xf32>
    %30 = arith.addf %21, %29 : vector<64x32xf32>
    %c0_3 = arith.constant 0 : index
    %c0_4 = arith.constant 0 : index
    %31 = vector.load %arg3[%c0_3, %c0_4] : memref<32x64xf32, #tpu.memory_space<vmem>>, vector<32x64xf32>
    %cst_5 = arith.constant dense<0.000000e+00> : vector<64x64xf32>
    %32 = tpu.matmul %30, %31, %cst_5 {dimension_numbers = #tpu.dot_dimension_numbers<[1], [0], [0], [1], [0, 0, 1, 1], [], []>} : vector<64x32xf32>, vector<32x64xf32>, vector<64x64xf32> -> vector<64x64xf32>
    %c0_6 = arith.constant 0 : index
    %c0_7 = arith.constant 0 : index
    %33 = vector.load %arg4[%c0_6, %c0_7] : memref<64x64xbf16, #tpu.memory_space<vmem>>, vector<64x64xbf16>
    %c0_8 = arith.constant 0 : index
    %c0_9 = arith.constant 0 : index
    %34 = vector.load %arg5[%c0_8, %c0_9] : memref<1x64xf32, #tpu.memory_space<vmem>>, vector<1x64xf32>
    %35 = arith.truncf %32 : vector<64x64xf32> to vector<64x64xbf16>
    %cst_10 = arith.constant dense<0.000000e+00> : vector<64x64xf32>
    %36 = tpu.matmul %35, %33, %cst_10 {dimension_numbers = #tpu.dot_dimension_numbers<[1], [0], [0], [1], [0, 0, 1, 1], [], []>} : vector<64x64xbf16>, vector<64x64xbf16>, vector<64x64xf32> -> vector<64x64xf32>
    %37 = vector.broadcast %34 : vector<1x64xf32> to vector<64x64xf32>
    %38 = arith.addf %36, %37 : vector<64x64xf32>
    %cst_11 = arith.constant 0.000000e+00 : f32
    %39 = vector.broadcast %cst_11 : f32 to vector<64x64xf32>
    %40 = arith.maximumf %38, %39 : vector<64x64xf32>
    %c0_12 = arith.constant 0 : index
    %c0_13 = arith.constant 0 : index
    %41 = vector.load %arg6[%c0_12, %c0_13] : memref<64x32xbf16, #tpu.memory_space<vmem>>, vector<64x32xbf16>
    %c0_14 = arith.constant 0 : index
    %c0_15 = arith.constant 0 : index
    %42 = vector.load %arg7[%c0_14, %c0_15] : memref<1x32xf32, #tpu.memory_space<vmem>>, vector<1x32xf32>
    %43 = arith.truncf %40 : vector<64x64xf32> to vector<64x64xbf16>
    %cst_16 = arith.constant dense<0.000000e+00> : vector<64x32xf32>
    %44 = tpu.matmul %43, %41, %cst_16 {dimension_numbers = #tpu.dot_dimension_numbers<[1], [0], [0], [1], [0, 0, 1, 1], [], []>} : vector<64x64xbf16>, vector<64x32xbf16>, vector<64x32xf32> -> vector<64x32xf32>
    %45 = vector.broadcast %42 : vector<1x32xf32> to vector<64x32xf32>
    %46 = arith.addf %44, %45 : vector<64x32xf32>
    %cst_17 = arith.constant 0.000000e+00 : f32
    %47 = vector.broadcast %cst_17 : f32 to vector<64x32xf32>
    %48 = arith.maximumf %46, %47 : vector<64x32xf32>
    %c0_18 = arith.constant 0 : index
    %c0_19 = arith.constant 0 : index
    %49 = vector.load %arg8[%c0_18, %c0_19] : memref<32x128xbf16, #tpu.memory_space<vmem>>, vector<32x128xbf16>
    %c0_20 = arith.constant 0 : index
    %c0_21 = arith.constant 0 : index
    %50 = vector.load %arg9[%c0_20, %c0_21] : memref<1x128xf32, #tpu.memory_space<vmem>>, vector<1x128xf32>
    %51 = arith.truncf %48 : vector<64x32xf32> to vector<64x32xbf16>
    %cst_22 = arith.constant dense<0.000000e+00> : vector<64x128xf32>
    %52 = tpu.matmul %51, %49, %cst_22 {dimension_numbers = #tpu.dot_dimension_numbers<[1], [0], [0], [1], [0, 0, 1, 1], [], []>} : vector<64x32xbf16>, vector<32x128xbf16>, vector<64x128xf32> -> vector<64x128xf32>
    %53 = vector.broadcast %50 : vector<1x128xf32> to vector<64x128xf32>
    %54 = arith.addf %52, %53 : vector<64x128xf32>
    %c0_23 = arith.constant 0 : index
    %c0_24 = arith.constant 0 : index
    %55 = vector.load %arg10[%c0_23, %c0_24] : memref<64x128xf32, #tpu.memory_space<vmem>>, vector<64x128xf32>
    tpu.vector_store %arg10[%c0_23, %c0_24], %54 {strides = array<i32>} : memref<64x128xf32, #tpu.memory_space<vmem>>, vector<64x128xf32>,
    return
  }
  func.func @transform_0(%arg0: i32) -> (i32, i32) {
    %c0_i32 = arith.constant 0 : i32
    %c0_i32_0 = arith.constant 0 : i32
    return %arg0, %c0_i32 : i32, i32
  }
  func.func @transform_1(%arg0: i32) -> (i32, i32) {
    %c0_i32 = arith.constant 0 : i32
    %c0_i32_0 = arith.constant 0 : i32
    return %arg0, %c0_i32 : i32, i32
  }
  func.func @transform_2(%arg0: i32) -> (i32, i32) {
    %c0_i32 = arith.constant 0 : i32
    %c0_i32_0 = arith.constant 0 : i32
    %c0_i32_1 = arith.constant 0 : i32
    return %c0_i32, %c0_i32_0 : i32, i32
  }
  func.func @transform_3(%arg0: i32) -> (i32, i32) {
    %c0_i32 = arith.constant 0 : i32
    %c0_i32_0 = arith.constant 0 : i32
    %c0_i32_1 = arith.constant 0 : i32
    return %c0_i32, %c0_i32_0 : i32, i32
  }
  func.func @transform_4(%arg0: i32) -> (i32, i32) {
    %c0_i32 = arith.constant 0 : i32
    %c0_i32_0 = arith.constant 0 : i32
    %c0_i32_1 = arith.constant 0 : i32
    return %c0_i32, %c0_i32_0 : i32, i32
  }
  func.func @transform_5(%arg0: i32) -> (i32, i32) {
    %c0_i32 = arith.constant 0 : i32
    %c0_i32_0 = arith.constant 0 : i32
    %c0_i32_1 = arith.constant 0 : i32
    return %c0_i32, %c0_i32_0 : i32, i32
  }
  func.func @transform_6(%arg0: i32) -> (i32, i32) {
    %c0_i32 = arith.constant 0 : i32
    %c0_i32_0 = arith.constant 0 : i32
    %c0_i32_1 = arith.constant 0 : i32
    return %c0_i32, %c0_i32_0 : i32, i32
  }
  func.func @transform_7(%arg0: i32) -> (i32, i32) {
    %c0_i32 = arith.constant 0 : i32
    %c0_i32_0 = arith.constant 0 : i32
    %c0_i32_1 = arith.constant 0 : i32
    return %c0_i32, %c0_i32_0 : i32, i32
  }
  func.func @transform_8(%arg0: i32) -> (i32, i32) {
    %c0_i32 = arith.constant 0 : i32
    %c0_i32_0 = arith.constant 0 : i32
    %c0_i32_1 = arith.constant 0 : i32
    return %c0_i32, %c0_i32_0 : i32, i32
  }
  func.func @transform_9(%arg0: i32) -> (i32, i32) {
    %c0_i32 = arith.constant 0 : i32
    %c0_i32_0 = arith.constant 0 : i32
    return %arg0, %c0_i32 : i32, i32
  }
}

</mosaic_0001>

<llo_original>
// kernel: custom-call
$region0: #{custom-call}
  %s0 = inlined_call_operand.vmem [shape: f32[64], index: 0, kind: output, shape index: {}]

// kernel: custom-call.1
$region0: #{custom-call.1}
  %s0 = inlined_call_operand.vmem [shape: f32[32], index: 0, kind: output, shape index: {}]

// kernel: pointnet2_segment_forward.4
$region0: #{pointnet2_segment_forward.4}
  #allocation0 [shape = 'u32[]', space=smem, size = 0x4, offset = 0x4, fixed_abs, tag = 'smem constant byte address 0x4 - core index']
  #allocation1 [shape = 'u32[144,128]{1,0:T(1,128)}', space=vmem, size = 0x12000, scoped, tag = 'internal scratch']
  %s0 = inlined_call_operand.vmem [shape: f32[256,3], index: 0, kind: input, shape index: {}]
  %s1 = inlined_call_operand.vmem [shape: bf16[3,16], index: 1, kind: input, shape index: {}]
  %s2 = inlined_call_operand.vmem [shape: f32[1,16], index: 2, kind: input, shape index: {}]
  %s3 = inlined_call_operand.vmem [shape: bf16[16,32], index: 3, kind: input, shape index: {}]
  %s4 = inlined_call_operand.vmem [shape: f32[1,32], index: 4, kind: input, shape index: {}]
  %s5 = inlined_call_operand.vmem [shape: f32[32,32], index: 5, kind: output, shape index: {}]
  %s6 = sld [smem:[#allocation0]]
  $region30: #{pointnet2_segment_forward.4} parent=0
    _
  %s8 = ssub.s32 1, %s6
  %s9 = scalar_select 0, %s8, %s6
  // Predicated region
  $region2: #{pointnet2_segment_forward.4} parent=0 // pred_check
    _
  $region3: #{pointnet2_segment_forward.4} parent=0 // pred_check_branch
    %11 = sbr.rel (0) target = $region5
  $region4: #{pointnet2_segment_forward.4} parent=0 // pred_region
    _
  $region5: #{pointnet2_segment_forward.4} parent=0 // pred_fallthru
    _
  // Predicated region
  $region6: #{pointnet2_segment_forward.4} parent=0 // pred_check
    _
  $region7: #{pointnet2_segment_forward.4} parent=0 // pred_check_branch
    %13 = sbr.rel (0) target = $region9
  $region8: #{pointnet2_segment_forward.4} parent=0 // pred_region
    _
  $region9: #{pointnet2_segment_forward.4} parent=0 // pred_fallthru
    _
  // Predicated region
  $region10: #{pointnet2_segment_forward.4} parent=0 // pred_check
    _
  $region11: #{pointnet2_segment_forward.4} parent=0 // pred_check_branch
    %15 = sbr.rel (0) target = $region13
  $region12: #{pointnet2_segment_forward.4} parent=0 // pred_region
    _
  $region13: #{pointnet2_segment_forward.4} parent=0 // pred_fallthru
    _
  // Predicated region
  $region14: #{pointnet2_segment_forward.4} parent=0 // pred_check
    _
  $region15: #{pointnet2_segment_forward.4} parent=0 // pred_check_branch
    %17 = sbr.rel (0) target = $region17
  $region16: #{pointnet2_segment_forward.4} parent=0 // pred_region
    _
  $region17: #{pointnet2_segment_forward.4} parent=0 // pred_fallthru
    _
  // Predicated region
  $region18: #{pointnet2_segment_forward.4} parent=0 // pred_check
    _
  $region19: #{pointnet2_segment_forward.4} parent=0 // pred_check_branch
    %19 = sbr.rel (0) target = $region21
  $region20: #{pointnet2_segment_forward.4} parent=0 // pred_region
    _
  $region21: #{pointnet2_segment_forward.4} parent=0 // pred_fallthru
    _
  %v21 = vld [vmem:[%s0] sm:$0xff]
  %v22 = vld [vmem:[%s0 + $0x8] sm:$0xff]
  %v23 = vld [vmem:[%s0 + $0x10] sm:$0xff]
  %v24 = vld [vmem:[%s0 + $0x18] sm:$0xff]
  %v25 = vld [vmem:[%s0 + $0x20] sm:$0xff]
  %v26 = vld [vmem:[%s0 + $0x28] sm:$0xff]
  %v27 = vld [vmem:[%s0 + $0x30] sm:$0xff]
  %v28 = vld [vmem:[%s0 + $0x38] sm:$0xff]
  %v29 = vld [vmem:[%s0 + $0x40] sm:$0xff]
  %v30 = vld [vmem:[%s0 + $0x48] sm:$0xff]
  %v31 = vld [vmem:[%s0 + $0x50] sm:$0xff]
  %v32 = vld [vmem:[%s0 + $0x58] sm:$0xff]
  %v33 = vld [vmem:[%s0 + $0x60] sm:$0xff]
  %v34 = vld [vmem:[%s0 + $0x68] sm:$0xff]
  %v35 = vld [vmem:[%s0 + $0x70] sm:$0xff]
  %v36 = vld [vmem:[%s0 + $0x78] sm:$0xff]
  %v37 = vld [vmem:[%s0 + $0x80] sm:$0xff]
  %v38 = vld [vmem:[%s0 + $0x88] sm:$0xff]
  %v39 = vld [vmem:[%s0 + $0x90] sm:$0xff]
  %v40 = vld [vmem:[%s0 + $0x98] sm:$0xff]
  %v41 = vld [vmem:[%s0 + $0xa0] sm:$0xff]
  %v42 = vld [vmem:[%s0 + $0xa8] sm:$0xff]
  %v43 = vld [vmem:[%s0 + $0xb0] sm:$0xff]
  %v44 = vld [vmem:[%s0 + $0xb8] sm:$0xff]
  %v45 = vld [vmem:[%s0 + $0xc0] sm:$0xff]
  %v46 = vld [vmem:[%s0 + $0xc8] sm:$0xff]
  %v47 = vld [vmem:[%s0 + $0xd0] sm:$0xff]
  %v48 = vld [vmem:[%s0 + $0xd8] sm:$0xff]
  %v49 = vld [vmem:[%s0 + $0xe0] sm:$0xff]
  %v50 = vld [vmem:[%s0 + $0xe8] sm:$0xff]
  %v51 = vld [vmem:[%s0 + $0xf0] sm:$0xff]
  %v52 = vld [vmem:[%s0 + $0xf8] sm:$0xff]
  %v53 = vld [vmem:[%s1] sm:$0x3]
  %v54 = vld [vmem:[%s2] sm:$0x1]
  %v55 = vunpack.c.l.bf16 %v53
  %57 = vset.pattern.permute.xlu0 0
  %58 = vperm.xlu0 %57, %v21
  %v59 = vpop.permute.xlu0 %58
  %62 = vset.pattern.permute.xlu0 0
  %63 = vperm.xlu0 %62, %v22
  %v64 = vpop.permute.xlu0 %63
  %67 = vset.pattern.permute.xlu0 0
  %68 = vperm.xlu0 %67, %v23
  %v69 = vpop.permute.xlu0 %68
  %72 = vset.pattern.permute.xlu0 0
  %73 = vperm.xlu0 %72, %v24
  %v74 = vpop.permute.xlu0 %73
  %77 = vset.pattern.permute.xlu0 0
  %78 = vperm.xlu0 %77, %v25
  %v79 = vpop.permute.xlu0 %78
  %82 = vset.pattern.permute.xlu0 0
  %83 = vperm.xlu0 %82, %v26
  %v84 = vpop.permute.xlu0 %83
  %87 = vset.pattern.permute.xlu0 0
  %88 = vperm.xlu0 %87, %v27
  %v89 = vpop.permute.xlu0 %88
  %92 = vset.pattern.permute.xlu0 0
  %93 = vperm.xlu0 %92, %v28
  %v94 = vpop.permute.xlu0 %93
  %97 = vset.pattern.permute.xlu0 0
  %98 = vperm.xlu0 %97, %v29
  %v99 = vpop.permute.xlu0 %98
  %102 = vset.pattern.permute.xlu0 0
  %103 = vperm.xlu0 %102, %v30
  %v104 = vpop.permute.xlu0 %103
  %107 = vset.pattern.permute.xlu0 0
  %108 = vperm.xlu0 %107, %v31
  %v109 = vpop.permute.xlu0 %108
  %112 = vset.pattern.permute.xlu0 0
  %113 = vperm.xlu0 %112, %v32
  %v114 = vpop.permute.xlu0 %113
  %117 = vset.pattern.permute.xlu0 0
  %118 = vperm.xlu0 %117, %v33
  %v119 = vpop.permute.xlu0 %118
  %122 = vset.pattern.permute.xlu0 0
  %123 = vperm.xlu0 %122, %v34
  %v124 = vpop.permute.xlu0 %123
  %127 = vset.pattern.permute.xlu0 0
  %128 = vperm.xlu0 %127, %v35
  %v129 = vpop.permute.xlu0 %128
  %132 = vset.pattern.permute.xlu0 0
  %133 = vperm.xlu0 %132, %v36
  %v134 = vpop.permute.xlu0 %133
  %137 = vset.pattern.permute.xlu0 0
  %138 = vperm.xlu0 %137, %v37
  %v139 = vpop.permute.xlu0 %138
  %142 = vset.pattern.permute.xlu0 0
  %143 = vperm.xlu0 %142, %v38
  %v144 = vpop.permute.xlu0 %143
  %147 = vset.pattern.permute.xlu0 0
  %148 = vperm.xlu0 %147, %v39
  %v149 = vpop.permute.xlu0 %148
  %152 = vset.pattern.permute.xlu0 0
  %153 = vperm.xlu0 %152, %v40
  %v154 = vpop.permute.xlu0 %153
  %157 = vset.pattern.permute.xlu0 0
  %158 = vperm.xlu0 %157, %v41
  %v159 = vpop.permute.xlu0 %158
  %162 = vset.pattern.permute.xlu0 0
  %163 = vperm.xlu0 %162, %v42
  %v164 = vpop.permute.xlu0 %163
  %167 = vset.pattern.permute.xlu0 0
  %168 = vperm.xlu0 %167, %v43
  %v169 = vpop.permute.xlu0 %168
  %172 = vset.pattern.permute.xlu0 0
  %173 = vperm.xlu0 %172, %v44
  %v174 = vpop.permute.xlu0 %173
  %177 = vset.pattern.permute.xlu0 0
  %178 = vperm.xlu0 %177, %v45
  %v179 = vpop.permute.xlu0 %178
  %182 = vset.pattern.permute.xlu0 0
  %183 = vperm.xlu0 %182, %v46
  %v184 = vpop.permute.xlu0 %183
  %187 = vset.pattern.permute.xlu0 0
  %188 = vperm.xlu0 %187, %v47
  %v189 = vpop.permute.xlu0 %188
  %192 = vset.pattern.permute.xlu0 0
  %193 = vperm.xlu0 %192, %v48
  %v194 = vpop.permute.xlu0 %193
  %197 = vset.pattern.permute.xlu0 0
  %198 = vperm.xlu0 %197, %v49
  %v199 = vpop.permute.xlu0 %198
  %202 = vset.pattern.permute.xlu0 0
  %203 = vperm.xlu0 %202, %v50
  %v204 = vpop.permute.xlu0 %203
  %207 = vset.pattern.permute.xlu0 0
  %208 = vperm.xlu0 %207, %v51
  %v209 = vpop.permute.xlu0 %208
  %212 = vset.pattern.permute.xlu0 0
  %213 = vperm.xlu0 %212, %v52
  %v214 = vpop.permute.xlu0 %213
  %v216 = vlaneseq
  %v217 = vshrl.u32 %v216, 7
  %v218 = vsub.s32 0, %v217
  %v219 = vrot.slane %v55, %v218
  %v220 = vmul.f32 %v59, %v219
  %v221 = vmul.f32 %v64, %v219
  %v222 = vmul.f32 %v69, %v219
  %v223 = vmul.f32 %v74, %v219
  %v224 = vmul.f32 %v79, %v219
  %v225 = vmul.f32 %v84, %v219
  %v226 = vmul.f32 %v89, %v219
  %v227 = vmul.f32 %v94, %v219
  %v228 = vmul.f32 %v99, %v219
  %v229 = vmul.f32 %v104, %v219
  %v230 = vmul.f32 %v109, %v219
  %v231 = vmul.f32 %v114, %v219
  %v232 = vmul.f32 %v119, %v219
  %v233 = vmul.f32 %v124, %v219
  %v234 = vmul.f32 %v129, %v219
  %v235 = vmul.f32 %v134, %v219
  %v236 = vmul.f32 %v139, %v219
  %v237 = vmul.f32 %v144, %v219
  %v238 = vmul.f32 %v149, %v219
  %v239 = vmul.f32 %v154, %v219
  %v240 = vmul.f32 %v159, %v219
  %v241 = vmul.f32 %v164, %v219
  %v242 = vmul.f32 %v169, %v219
  %v243 = vmul.f32 %v174, %v219
  %v244 = vmul.f32 %v179, %v219
  %v245 = vmul.f32 %v184, %v219
  %v246 = vmul.f32 %v189, %v219
  %v247 = vmul.f32 %v194, %v219
  %v248 = vmul.f32 %v199, %v219
  %v249 = vmul.f32 %v204, %v219
  %v250 = vmul.f32 %v209, %v219
  %v251 = vmul.f32 %v214, %v219
  %252 = vset.pattern.permute.xlu0 1
  %253 = vperm.xlu0 %252, %v21
  %v254 = vpop.permute.xlu0 %253
  %256 = vset.pattern.permute.xlu0 1
  %257 = vperm.xlu0 %256, %v22
  %v258 = vpop.permute.xlu0 %257
  %260 = vset.pattern.permute.xlu0 1
  %261 = vperm.xlu0 %260, %v23
  %v262 = vpop.permute.xlu0 %261
  %264 = vset.pattern.permute.xlu0 1
  %265 = vperm.xlu0 %264, %v24
  %v266 = vpop.permute.xlu0 %265
  %268 = vset.pattern.permute.xlu0 1
  %269 = vperm.xlu0 %268, %v25
  %v270 = vpop.permute.xlu0 %269
  %272 = vset.pattern.permute.xlu0 1
  %273 = vperm.xlu0 %272, %v26
  %v274 = vpop.permute.xlu0 %273
  %276 = vset.pattern.permute.xlu0 1
  %277 = vperm.xlu0 %276, %v27
  %v278 = vpop.permute.xlu0 %277
  %280 = vset.pattern.permute.xlu0 1
  %281 = vperm.xlu0 %280, %v28
  %v282 = vpop.permute.xlu0 %281
  %284 = vset.pattern.permute.xlu0 1
  %285 = vperm.xlu0 %284, %v29
  %v286 = vpop.permute.xlu0 %285
  %288 = vset.pattern.permute.xlu0 1
  %289 = vperm.xlu0 %288, %v30
  %v290 = vpop.permute.xlu0 %289
  %292 = vset.pattern.permute.xlu0 1
  %293 = vperm.xlu0 %292, %v31
  %v294 = vpop.permute.xlu0 %293
  %296 = vset.pattern.permute.xlu0 1
  %297 = vperm.xlu0 %296, %v32
  %v298 = vpop.permute.xlu0 %297
  %300 = vset.pattern.permute.xlu0 1
  %301 = vperm.xlu0 %300, %v33
  %v302 = vpop.permute.xlu0 %301
  %304 = vset.pattern.permute.xlu0 1
  %305 = vperm.xlu0 %304, %v34
  %v306 = vpop.permute.xlu0 %305
  %308 = vset.pattern.permute.xlu0 1
  %309 = vperm.xlu0 %308, %v35
  %v310 = vpop.permute.xlu0 %309
  %312 = vset.pattern.permute.xlu0 1
  %313 = vperm.xlu0 %312, %v36
  %v314 = vpop.permute.xlu0 %313
  %316 = vset.pattern.permute.xlu0 1
  %317 = vperm.xlu0 %316, %v37
  %v318 = vpop.permute.xlu0 %317
  %320 = vset.pattern.permute.xlu0 1
  %321 = vperm.xlu0 %320, %v38
  %v322 = vpop.permute.xlu0 %321
  %324 = vset.pattern.permute.xlu0 1
  %325 = vperm.xlu0 %324, %v39
  %v326 = vpop.permute.xlu0 %325
  %328 = vset.pattern.permute.xlu0 1
  %329 = vperm.xlu0 %328, %v40
  %v330 = vpop.permute.xlu0 %329
  %332 = vset.pattern.permute.xlu0 1
  %333 = vperm.xlu0 %332, %v41
  %v334 = vpop.permute.xlu0 %333
  %336 = vset.pattern.permute.xlu0 1
  %337 = vperm.xlu0 %336, %v42
  %v338 = vpop.permute.xlu0 %337
  %340 = vset.pattern.permute.xlu0 1
  %341 = vperm.xlu0 %340, %v43
  %v342 = vpop.permute.xlu0 %341
  %344 = vset.pattern.permute.xlu0 1
  %345 = vperm.xlu0 %344, %v44
  %v346 = vpop.permute.xlu0 %345
  %348 = vset.pattern.permute.xlu0 1
  %349 = vperm.xlu0 %348, %v45
  %v350 = vpop.permute.xlu0 %349
  %352 = vset.pattern.permute.xlu0 1
  %353 = vperm.xlu0 %352, %v46
  %v354 = vpop.permute.xlu0 %353
  %356 = vset.pattern.permute.xlu0 1
  %357 = vperm.xlu0 %356, %v47
  %v358 = vpop.permute.xlu0 %357
  %360 = vset.pattern.permute.xlu0 1
  %361 = vperm.xlu0 %360, %v48
  %v362 = vpop.permute.xlu0 %361
  %364 = vset.pattern.permute.xlu0 1
  %365 = vperm.xlu0 %364, %v49
  %v366 = vpop.permute.xlu0 %365
  %368 = vset.pattern.permute.xlu0 1
  %369 = vperm.xlu0 %368, %v50
  %v370 = vpop.permute.xlu0 %369
  %372 = vset.pattern.permute.xlu0 1
  %373 = vperm.xlu0 %372, %v51
  %v374 = vpop.permute.xlu0 %373
  %376 = vset.pattern.permute.xlu0 1
  %377 = vperm.xlu0 %376, %v52
  %v378 = vpop.permute.xlu0 %377
  %v380 = vlaneseq
  %v381 = vshrl.u32 %v380, 7
  %v382 = vsub.s32 1, %v381
  %v383 = vrot.slane %v55, %v382
  %v384 = vmul.f32 %v254, %v383
  %v385 = vmul.f32 %v258, %v383
  %v386 = vmul.f32 %v262, %v383
  %v387 = vmul.f32 %v266, %v383
  %v388 = vmul.f32 %v270, %v383
  %v389 = vmul.f32 %v274, %v383
  %v390 = vmul.f32 %v278, %v383
  %v391 = vmul.f32 %v282, %v383
  %v392 = vmul.f32 %v286, %v383
  %v393 = vmul.f32 %v290, %v383
  %v394 = vmul.f32 %v294, %v383
  %v395 = vmul.f32 %v298, %v383
  %v396 = vmul.f32 %v302, %v383
  %v397 = vmul.f32 %v306, %v383
  %v398 = vmul.f32 %v310, %v383
  %v399 = vmul.f32 %v314, %v383
  %v400 = vmul.f32 %v318, %v383
  %v401 = vmul.f32 %v322, %v383
  %v402 = vmul.f32 %v326, %v383
  %v403 = vmul.f32 %v330, %v383
  %v404 = vmul.f32 %v334, %v383
  %v405 = vmul.f32 %v338, %v383
  %v406 = vmul.f32 %v342, %v383
  %v407 = vmul.f32 %v346, %v383
  %v408 = vmul.f32 %v350, %v383
  %v409 = vmul.f32 %v354, %v383
  %v410 = vmul.f32 %v358, %v383
  %v411 = vmul.f32 %v362, %v383
  %v412 = vmul.f32 %v366, %v383
  %v413 = vmul.f32 %v370, %v383
  %v414 = vmul.f32 %v374, %v383
  %v415 = vmul.f32 %v378, %v383
  %v416 = vadd.f32 %v220, %v384
  %v417 = vadd.f32 %v221, %v385
  %v418 = vadd.f32 %v222, %v386
  %v419 = vadd.f32 %v223, %v387
  %v420 = vadd.f32 %v224, %v388
  %v421 = vadd.f32 %v225, %v389
  %v422 = vadd.f32 %v226, %v390
  %v423 = vadd.f32 %v227, %v391
  %v424 = vadd.f32 %v228, %v392
  %v425 = vadd.f32 %v229, %v393
  %v426 = vadd.f32 %v230, %v394
  %v427 = vadd.f32 %v231, %v395
  %v428 = vadd.f32 %v232, %v396
  %v429 = vadd.f32 %v233, %v397
  %v430 = vadd.f32 %v234, %v398
  %v431 = vadd.f32 %v235, %v399
  %v432 = vadd.f32 %v236, %v400
  %v433 = vadd.f32 %v237, %v401
  %v434 = vadd.f32 %v238, %v402
  %v435 = vadd.f32 %v239, %v403
  %v436 = vadd.f32 %v240, %v404
  %v437 = vadd.f32 %v241, %v405
  %v438 = vadd.f32 %v242, %v406
  %v439 = vadd.f32 %v243, %v407
  %v440 = vadd.f32 %v244, %v408
  %v441 = vadd.f32 %v245, %v409
  %v442 = vadd.f32 %v246, %v410
  %v443 = vadd.f32 %v247, %v411
  %v444 = vadd.f32 %v248, %v412
  %v445 = vadd.f32 %v249, %v413
  %v446 = vadd.f32 %v250, %v414
  %v447 = vadd.f32 %v251, %v415
  %448 = vset.pattern.permute.xlu0 2
  %449 = vperm.xlu0 %448, %v21
  %v450 = vpop.permute.xlu0 %449
  %452 = vset.pattern.permute.xlu0 2
  %453 = vperm.xlu0 %452, %v22
  %v454 = vpop.permute.xlu0 %453
  %456 = vset.pattern.permute.xlu0 2
  %457 = vperm.xlu0 %456, %v23
  %v458 = vpop.permute.xlu0 %457
  %460 = vset.pattern.permute.xlu0 2
  %461 = vperm.xlu0 %460, %v24
  %v462 = vpop.permute.xlu0 %461
  %464 = vset.pattern.permute.xlu0 2
  %465 = vperm.xlu0 %464, %v25
  %v466 = vpop.permute.xlu0 %465
  %468 = vset.pattern.permute.xlu0 2
  %469 = vperm.xlu0 %468, %v26
  %v470 = vpop.permute.xlu0 %469
  %472 = vset.pattern.permute.xlu0 2
  %473 = vperm.xlu0 %472, %v27
  %v474 = vpop.permute.xlu0 %473
  %476 = vset.pattern.permute.xlu0 2
  %477 = vperm.xlu0 %476, %v28
  %v478 = vpop.permute.xlu0 %477
  %480 = vset.pattern.permute.xlu0 2
  %481 = vperm.xlu0 %480, %v29
  %v482 = vpop.permute.xlu0 %481
  %484 = vset.pattern.permute.xlu0 2
  %485 = vperm.xlu0 %484, %v30
  %v486 = vpop.permute.xlu0 %485
  %488 = vset.pattern.permute.xlu0 2
  %489 = vperm.xlu0 %488, %v31
  %v490 = vpop.permute.xlu0 %489
  %492 = vset.pattern.permute.xlu0 2
  %493 = vperm.xlu0 %492, %v32
  %v494 = vpop.permute.xlu0 %493
  %496 = vset.pattern.permute.xlu0 2
  %497 = vperm.xlu0 %496, %v33
  %v498 = vpop.permute.xlu0 %497
  %500 = vset.pattern.permute.xlu0 2
  %501 = vperm.xlu0 %500, %v34
  %v502 = vpop.permute.xlu0 %501
  %504 = vset.pattern.permute.xlu0 2
  %505 = vperm.xlu0 %504, %v35
  %v506 = vpop.permute.xlu0 %505
  %508 = vset.pattern.permute.xlu0 2
  %509 = vperm.xlu0 %508, %v36
  %v510 = vpop.permute.xlu0 %509
  %512 = vset.pattern.permute.xlu0 2
  %513 = vperm.xlu0 %512, %v37
  %v514 = vpop.permute.xlu0 %513
  %516 = vset.pattern.permute.xlu0 2
  %517 = vperm.xlu0 %516, %v38
  %v518 = vpop.permute.xlu0 %517
  %520 = vset.pattern.permute.xlu0 2
  %521 = vperm.xlu0 %520, %v39
  %v522 = vpop.permute.xlu0 %521
  %524 = vset.pattern.permute.xlu0 2
  %525 = vperm.xlu0 %524, %v40
  %v526 = vpop.permute.xlu0 %525
  %528 = vset.pattern.permute.xlu0 2
  %529 = vperm.xlu0 %528, %v41
  %v530 = vpop.permute.xlu0 %529
  %532 = vset.pattern.permute.xlu0 2
  %533 = vperm.xlu0 %532, %v42
  %v534 = vpop.permute.xlu0 %533
  %536 = vset.pattern.permute.xlu0 2
  %537 = vperm.xlu0 %536, %v43
  %v538 = vpop.permute.xlu0 %537
  %540 = vset.pattern.permute.xlu0 2
  %541 = vperm.xlu0 %540, %v44
  %v542 = vpop.permute.xlu0 %541
  %544 = vset.pattern.permute.xlu0 2
  %545 = vperm.xlu0 %544, %v45
  %v546 = vpop.permute.xlu0 %545
  %548 = vset.pattern.permute.xlu0 2
  %549 = vperm.xlu0 %548, %v46
  %v550 = vpop.permute.xlu0 %549
  %552 = vset.pattern.permute.xlu0 2
  %553 = vperm.xlu0 %552, %v47
  %v554 = vpop.permute.xlu0 %553
  %556 = vset.pattern.permute.xlu0 2
  %557 = vperm.xlu0 %556, %v48
  %v558 = vpop.permute.xlu0 %557
  %560 = vset.pattern.permute.xlu0 2
  %561 = vperm.xlu0 %560, %v49
  %v562 = vpop.permute.xlu0 %561
  %564 = vset.pattern.permute.xlu0 2
  %565 = vperm.xlu0 %564, %v50
  %v566 = vpop.permute.xlu0 %565
  %568 = vset.pattern.permute.xlu0 2
  %569 = vperm.xlu0 %568, %v51
  %v570 = vpop.permute.xlu0 %569
  %572 = vset.pattern.permute.xlu0 2
  %573 = vperm.xlu0 %572, %v52
  %v574 = vpop.permute.xlu0 %573
  %v576 = vlaneseq
  %v577 = vshrl.u32 %v576, 7
  %v578 = vsub.s32 2, %v577
  %v579 = vrot.slane %v55, %v578
  %v580 = vmul.f32 %v450, %v579
  %v581 = vmul.f32 %v454, %v579
  %v582 = vmul.f32 %v458, %v579
  %v583 = vmul.f32 %v462, %v579
  %v584 = vmul.f32 %v466, %v579
  %v585 = vmul.f32 %v470, %v579
  %v586 = vmul.f32 %v474, %v579
  %v587 = vmul.f32 %v478, %v579
  %v588 = vmul.f32 %v482, %v579
  %v589 = vmul.f32 %v486, %v579
  %v590 = vmul.f32 %v490, %v579
  %v591 = vmul.f32 %v494, %v579
  %v592 = vmul.f32 %v498, %v579
  %v593 = vmul.f32 %v502, %v579
  %v594 = vmul.f32 %v506, %v579
  %v595 = vmul.f32 %v510, %v579
  %v596 = vmul.f32 %v514, %v579
  %v597 = vmul.f32 %v518, %v579
  %v598 = vmul.f32 %v522, %v579
  %v599 = vmul.f32 %v526, %v579
  %v600 = vmul.f32 %v530, %v579
  %v601 = vmul.f32 %v534, %v579
  %v602 = vmul.f32 %v538, %v579
  %v603 = vmul.f32 %v542, %v579
  %v604 = vmul.f32 %v546, %v579
  %v605 = vmul.f32 %v550, %v579
  %v606 = vmul.f32 %v554, %v579
  %v607 = vmul.f32 %v558, %v579
  %v608 = vmul.f32 %v562, %v579
  %v609 = vmul.f32 %v566, %v579
  %v610 = vmul.f32 %v570, %v579
  %v611 = vmul.f32 %v574, %v579
  %v612 = vadd.f32 %v416, %v580
  %v613 = vadd.f32 %v417, %v581
  %v614 = vadd.f32 %v418, %v582
  %v615 = vadd.f32 %v419, %v583
  %v616 = vadd.f32 %v420, %v584
  %v617 = vadd.f32 %v421, %v585
  %v618 = vadd.f32 %v422, %v586
  %v619 = vadd.f32 %v423, %v587
  %v620 = vadd.f32 %v424, %v588
  %v621 = vadd.f32 %v425, %v589
  %v622 = vadd.f32 %v426, %v590
  %v623 = vadd.f32 %v427, %v591
  %v624 = vadd.f32 %v428, %v592
  %v625 = vadd.f32 %v429, %v593
  %v626 = vadd.f32 %v430, %v594
  %v627 = vadd.f32 %v431, %v595
  %v628 = vadd.f32 %v432, %v596
  %v629 = vadd.f32 %v433, %v597
  %v630 = vadd.f32 %v434, %v598
  %v631 = vadd.f32 %v435, %v599
  %v632 = vadd.f32 %v436, %v600
  %v633 = vadd.f32 %v437, %v601
  %v634 = vadd.f32 %v438, %v602
  %v635 = vadd.f32 %v439, %v603
  %v636 = vadd.f32 %v440, %v604
  %v637 = vadd.f32 %v441, %v605
  %v638 = vadd.f32 %v442, %v606
  %v639 = vadd.f32 %v443, %v607
  %v640 = vadd.f32 %v444, %v608
  %v641 = vadd.f32 %v445, %v609
  %v642 = vadd.f32 %v446, %v610
  %v643 = vadd.f32 %v447, %v611
  %v645 = vlaneseq
  %v646 = vshrl.u32 %v645, 7
  %v647 = vsub.s32 0, %v646
  %v648 = vrot.slane %v54, %v647
  %v650 = vadd.f32 %v612, %v648
  %v651 = vadd.f32 %v613, %v648
  %v652 = vadd.f32 %v614, %v648
  %v653 = vadd.f32 %v615, %v648
  %v654 = vadd.f32 %v616, %v648
  %v655 = vadd.f32 %v617, %v648
  %v656 = vadd.f32 %v618, %v648
  %v657 = vadd.f32 %v619, %v648
  %v658 = vadd.f32 %v620, %v648
  %v659 = vadd.f32 %v621, %v648
  %v660 = vadd.f32 %v622, %v648
  %v661 = vadd.f32 %v623, %v648
  %v662 = vadd.f32 %v624, %v648
  %v663 = vadd.f32 %v625, %v648
  %v664 = vadd.f32 %v626, %v648
  %v665 = vadd.f32 %v627, %v648
  %v666 = vadd.f32 %v628, %v648
  %v667 = vadd.f32 %v629, %v648
  %v668 = vadd.f32 %v630, %v648
  %v669 = vadd.f32 %v631, %v648
  %v670 = vadd.f32 %v632, %v648
  %v671 = vadd.f32 %v633, %v648
  %v672 = vadd.f32 %v634, %v648
  %v673 = vadd.f32 %v635, %v648
  %v674 = vadd.f32 %v636, %v648
  %v675 = vadd.f32 %v637, %v648
  %v676 = vadd.f32 %v638, %v648
  %v677 = vadd.f32 %v639, %v648
  %v678 = vadd.f32 %v640, %v648
  %v679 = vadd.f32 %v641, %v648
  %v680 = vadd.f32 %v642, %v648
  %v681 = vadd.f32 %v643, %v648
  %v682 = vmax.f32 %v650, 0.0
  %v683 = vmax.f32 %v651, 0.0
  %v684 = vmax.f32 %v652, 0.0
  %v685 = vmax.f32 %v653, 0.0
  %v686 = vmax.f32 %v654, 0.0
  %v687 = vmax.f32 %v655, 0.0
  %v688 = vmax.f32 %v656, 0.0
  %v689 = vmax.f32 %v657, 0.0
  %v690 = vmax.f32 %v658, 0.0
  %v691 = vmax.f32 %v659, 0.0
  %v692 = vmax.f32 %v660, 0.0
  %v693 = vmax.f32 %v661, 0.0
  %v694 = vmax.f32 %v662, 0.0
  %v695 = vmax.f32 %v663, 0.0
  %v696 = vmax.f32 %v664, 0.0
  %v697 = vmax.f32 %v665, 0.0
  %v698 = vmax.f32 %v666, 0.0
  %v699 = vmax.f32 %v667, 0.0
  %v700 = vmax.f32 %v668, 0.0
  %v701 = vmax.f32 %v669, 0.0
  %v702 = vmax.f32 %v670, 0.0
  %v703 = vmax.f32 %v671, 0.0
  %v704 = vmax.f32 %v672, 0.0
  %v705 = vmax.f32 %v673, 0.0
  %v706 = vmax.f32 %v674, 0.0
  %v707 = vmax.f32 %v675, 0.0
  %v708 = vmax.f32 %v676, 0.0
  %v709 = vmax.f32 %v677, 0.0
  %v710 = vmax.f32 %v678, 0.0
  %v711 = vmax.f32 %v679, 0.0
  %v712 = vmax.f32 %v680, 0.0
  %v713 = vmax.f32 %v681, 0.0
  %v714 = vld [vmem:[%s3] sm:$0xf]
  %v715 = vld [vmem:[%s3 + $0x4] sm:$0xf]
  %v716 = vld [vmem:[%s4] sm:$0x1]
  %v717 = vpack.c.bf16 %v683, %v682
  %v718 = vpack.c.bf16 %v685, %v684
  %v719 = vpack.c.bf16 %v687, %v686
  %v720 = vpack.c.bf16 %v689, %v688
  %v721 = vpack.c.bf16 %v691, %v690
  %v722 = vpack.c.bf16 %v693, %v692
  %v723 = vpack.c.bf16 %v695, %v694
  %v724 = vpack.c.bf16 %v697, %v696
  %v725 = vpack.c.bf16 %v699, %v698
  %v726 = vpack.c.bf16 %v701, %v700
  %v727 = vpack.c.bf16 %v703, %v702
  %v728 = vpack.c.bf16 %v705, %v704
  %v729 = vpack.c.bf16 %v707, %v706
  %v730 = vpack.c.bf16 %v709, %v708
  %v731 = vpack.c.bf16 %v711, %v710
  %v732 = vpack.c.bf16 %v713, %v712
  %v734 = vlaneseq
  %v735 = vshrl.u32 %v734, 7
  %v736 = vsub.s32 0, %v735
  %v737 = vrot.slane %v716, %v736
  %v741 = vunpack.c.l.b16 %v714
  %v742 = vunpack.c.l.b16 %v715
  %v743 = vpack.c.b16 %v742, %v741
  %vm745 = vcmask 130048
  %v747 = vsel %vm745, %v717, 0
  %v750 = vsel %vm745, %v718, 0
  %v753 = vsel %vm745, %v719, 0
  %v756 = vsel %vm745, %v720, 0
  %v759 = vsel %vm745, %v721, 0
  %v762 = vsel %vm745, %v722, 0
  %v765 = vsel %vm745, %v723, 0
  %v768 = vsel %vm745, %v724, 0
  %v771 = vsel %vm745, %v725, 0
  %v774 = vsel %vm745, %v726, 0
  %v777 = vsel %vm745, %v727, 0
  %v780 = vsel %vm745, %v728, 0
  %v783 = vsel %vm745, %v729, 0
  %v786 = vsel %vm745, %v730, 0
  %v789 = vsel %vm745, %v731, 0
  %v792 = vsel %vm745, %v732, 0
  %794 = vmatprep.subr.bf16.mxu0 0
  %795 = vmatpush1.bf16.msra.mxu0 0
  %796 = vmatprep.subr.bf16.mxu0 0
  %797 = vmatpush1.bf16.msra.mxu0 0
  %798 = vmatprep.subr.bf16.mxu0 0
  %799 = vmatpush1.bf16.msra.mxu0 0
  %800 = vmatprep.subr.bf16.mxu0 0
  %801 = vmatpush1.bf16.msra.mxu0 0
  %802 = vmatprep.subr.bf16.mxu0 0
  %803 = vmatpush1.bf16.msra.mxu0 0
  %804 = vmatprep.subr.bf16.mxu0 0
  %805 = vmatpush1.bf16.msra.mxu0 0
  %806 = vmatprep.subr.bf16.mxu0 0
  %807 = vmatpush1.bf16.msra.mxu0 0
  %808 = vmatprep.subr.bf16.mxu0 0
  %809 = vmatpush1.bf16.msra.mxu0 %v743
  %810 = vmatprep.subr.bf16.mxu0 0
  %811 = vmatpush2.bf16.msra.mxu0 0
  %812 = vmatprep.subr.bf16.mxu0 0
  %813 = vmatpush2.bf16.msra.mxu0 0
  %814 = vmatprep.subr.bf16.mxu0 0
  %815 = vmatpush2.bf16.msra.mxu0 0
  %816 = vmatprep.subr.bf16.mxu0 0
  %817 = vmatpush2.bf16.msra.mxu0 0
  %818 = vmatprep.subr.bf16.mxu0 0
  %819 = vmatpush2.bf16.msra.mxu0 0
  %820 = vmatprep.subr.bf16.mxu0 0
  %821 = vmatpush2.bf16.msra.mxu0 0
  %822 = vmatprep.subr.bf16.mxu0 0
  %823 = vmatpush2.bf16.msra.mxu0 0
  %824 = vmatprep.subr.bf16.mxu0 0
  %825 = vmatpush2.bf16.msra.mxu0 0
  %826 = vmatprep.mubr.bf16.mxu0 0
  %827 = vmatmul.mubr.bf16.gmra.mxu0 %v747
  %v828 = vpop.f32.mrf.mxu0
  %v829 = vadd.f32 %v737, %v828
  %v830 = vpop.f32.mrf.mxu0
  %v831 = vpop.f32.mrf.mxu0
  %v832 = vadd.f32 %v737, %v831
  %v833 = vpop.f32.mrf.mxu0
  %834 = vmatprep.mubr.bf16.mxu0 0
  %835 = vmatmul.mubr.bf16.gmra.mxu0 %v750
  %v836 = vpop.f32.mrf.mxu0
  %v837 = vadd.f32 %v737, %v836
  %v838 = vpop.f32.mrf.mxu0
  %v839 = vpop.f32.mrf.mxu0
  %v840 = vadd.f32 %v737, %v839
  %v841 = vpop.f32.mrf.mxu0
  %842 = vmatprep.mubr.bf16.mxu0 0
  %843 = vmatmul.mubr.bf16.gmra.mxu0 %v753
  %v844 = vpop.f32.mrf.mxu0
  %v845 = vadd.f32 %v737, %v844
  %v846 = vpop.f32.mrf.mxu0
  %v847 = vpop.f32.mrf.mxu0
  %v848 = vadd.f32 %v737, %v847
  %v849 = vpop.f32.mrf.mxu0
  %850 = vmatprep.mubr.bf16.mxu0 0
  %851 = vmatmul.mubr.bf16.gmra.mxu0 %v756
  %v852 = vpop.f32.mrf.mxu0
  %v853 = vadd.f32 %v737, %v852
  %v854 = vpop.f32.mrf.mxu0
  %v855 = vpop.f32.mrf.mxu0
  %v856 = vadd.f32 %v737, %v855
  %v857 = vpop.f32.mrf.mxu0
  %858 = vmatprep.mubr.bf16.mxu0 0
  %859 = vmatmul.mubr.bf16.gmra.mxu0 %v759
  %v860 = vpop.f32.mrf.mxu0
  %v861 = vadd.f32 %v737, %v860
  %v862 = vpop.f32.mrf.mxu0
  %v863 = vpop.f32.mrf.mxu0
  %v864 = vadd.f32 %v737, %v863
  %v865 = vpop.f32.mrf.mxu0
  %866 = vmatprep.mubr.bf16.mxu0 0
  %867 = vmatmul.mubr.bf16.gmra.mxu0 %v762
  %v868 = vpop.f32.mrf.mxu0
  %v869 = vadd.f32 %v737, %v868
  %v870 = vpop.f32.mrf.mxu0
  %v871 = vpop.f32.mrf.mxu0
  %v872 = vadd.f32 %v737, %v871
  %v873 = vpop.f32.mrf.mxu0
  %874 = vmatprep.mubr.bf16.mxu0 0
  %875 = vmatmul.mubr.bf16.gmra.mxu0 %v765
  %v876 = vpop.f32.mrf.mxu0
  %v877 = vadd.f32 %v737, %v876
  %v878 = vpop.f32.mrf.mxu0
  %v879 = vpop.f32.mrf.mxu0
  %v880 = vadd.f32 %v737, %v879
  %v881 = vpop.f32.mrf.mxu0
  %882 = vmatprep.mubr.bf16.mxu0 0
  %883 = vmatmul.mubr.bf16.gmra.mxu0 %v768
  %v884 = vpop.f32.mrf.mxu0
  %v885 = vadd.f32 %v737, %v884
  %v886 = vpop.f32.mrf.mxu0
  %v887 = vpop.f32.mrf.mxu0
  %v888 = vadd.f32 %v737, %v887
  %v889 = vpop.f32.mrf.mxu0
  %890 = vmatprep.mubr.bf16.mxu0 0
  %891 = vmatmul.mubr.bf16.gmra.mxu0 %v771
  %v892 = vpop.f32.mrf.mxu0
  %v893 = vadd.f32 %v737, %v892
  %v894 = vpop.f32.mrf.mxu0
  %v895 = vpop.f32.mrf.mxu0
  %v896 = vadd.f32 %v737, %v895
  %v897 = vpop.f32.mrf.mxu0
  %898 = vmatprep.mubr.bf16.mxu0 0
  %899 = vmatmul.mubr.bf16.gmra.mxu0 %v774
  %v900 = vpop.f32.mrf.mxu0
  %v901 = vadd.f32 %v737, %v900
  %v902 = vpop.f32.mrf.mxu0
  %v903 = vpop.f32.mrf.mxu0
  %v904 = vadd.f32 %v737, %v903
  %v905 = vpop.f32.mrf.mxu0
  %906 = vmatprep.mubr.bf16.mxu0 0
  %907 = vmatmul.mubr.bf16.gmra.mxu0 %v777
  %v908 = vpop.f32.mrf.mxu0
  %v909 = vadd.f32 %v737, %v908
  %v910 = vpop.f32.mrf.mxu0
  %v911 = vpop.f32.mrf.mxu0
  %v912 = vadd.f32 %v737, %v911
  %v913 = vpop.f32.mrf.mxu0
  %914 = vmatprep.mubr.bf16.mxu0 0
  %915 = vmatmul.mubr.bf16.gmra.mxu0 %v780
  %v916 = vpop.f32.mrf.mxu0
  %v917 = vadd.f32 %v737, %v916
  %v918 = vpop.f32.mrf.mxu0
  %v919 = vpop.f32.mrf.mxu0
  %v920 = vadd.f32 %v737, %v919
  %v921 = vpop.f32.mrf.mxu0
  %922 = vmatprep.mubr.bf16.mxu0 0
  %923 = vmatmul.mubr.bf16.gmra.mxu0 %v783
  %v924 = vpop.f32.mrf.mxu0
  %v925 = vadd.f32 %v737, %v924
  %v926 = vpop.f32.mrf.mxu0
  %v927 = vpop.f32.mrf.mxu0
  %v928 = vadd.f32 %v737, %v927
  %v929 = vpop.f32.mrf.mxu0
  %930 = vmatprep.mubr.bf16.mxu0 0
  %931 = vmatmul.mubr.bf16.gmra.mxu0 %v786
  %v932 = vpop.f32.mrf.mxu0
  %v933 = vadd.f32 %v737, %v932
  %v934 = vpop.f32.mrf.mxu0
  %v935 = vpop.f32.mrf.mxu0
  %v936 = vadd.f32 %v737, %v935
  %v937 = vpop.f32.mrf.mxu0
  %938 = vmatprep.mubr.bf16.mxu0 0
  %939 = vmatmul.mubr.bf16.gmra.mxu0 %v789
  %v940 = vpop.f32.mrf.mxu0
  %v941 = vadd.f32 %v737, %v940
  %v942 = vpop.f32.mrf.mxu0
  %v943 = vpop.f32.mrf.mxu0
  %v944 = vadd.f32 %v737, %v943
  %v945 = vpop.f32.mrf.mxu0
  %946 = vmatprep.mubr.bf16.mxu0 0
  %947 = vmatmul.mubr.bf16.gmra.mxu0 %v792
  %v948 = vpop.f32.mrf.mxu0
  %v949 = vadd.f32 %v737, %v948
  %v950 = vpop.f32.mrf.mxu0
  %v951 = vpop.f32.mrf.mxu0
  %v952 = vadd.f32 %v737, %v951
  %v953 = vpop.f32.mrf.mxu0
  %954 = vdwg.mxu0
  %v955 = vmax.f32 %v829, 0.0
  %v956 = vmax.f32 %v832, 0.0
  %v957 = vmax.f32 %v837, 0.0
  %v958 = vmax.f32 %v840, 0.0
  %v959 = vmax.f32 %v845, 0.0
  %v960 = vmax.f32 %v848, 0.0
  %v961 = vmax.f32 %v853, 0.0
  %v962 = vmax.f32 %v856, 0.0
  %v963 = vmax.f32 %v861, 0.0
  %v964 = vmax.f32 %v864, 0.0
  %v965 = vmax.f32 %v869, 0.0
  %v966 = vmax.f32 %v872, 0.0
  %v967 = vmax.f32 %v877, 0.0
  %v968 = vmax.f32 %v880, 0.0
  %v969 = vmax.f32 %v885, 0.0
  %v970 = vmax.f32 %v888, 0.0
  %v971 = vmax.f32 %v893, 0.0
  %v972 = vmax.f32 %v896, 0.0
  %v973 = vmax.f32 %v901, 0.0
  %v974 = vmax.f32 %v904, 0.0
  %v975 = vmax.f32 %v909, 0.0
  %v976 = vmax.f32 %v912, 0.0
  %v977 = vmax.f32 %v917, 0.0
  %v978 = vmax.f32 %v920, 0.0
  %v979 = vmax.f32 %v925, 0.0
  %v980 = vmax.f32 %v928, 0.0
  %v981 = vmax.f32 %v933, 0.0
  %v982 = vmax.f32 %v936, 0.0
  %v983 = vmax.f32 %v941, 0.0
  %v984 = vmax.f32 %v944, 0.0
  %v985 = vmax.f32 %v949, 0.0
  %v986 = vmax.f32 %v952, 0.0
  %vm987 = vcmask 261120
  %v988 = vsel %vm987, %v955, -inf
  %v989 = vrot.slane %v988, 4
  %v990 = vmax.f32 %v988, %v989
  %v991 = vrot.slane %v990, 2
  %v992 = vmax.f32 %v990, %v991
  %v993 = vrot.slane %v992, 1
  %v994 = vmax.f32 %v992, %v993
  %v995 = vsel %vm987, %v956, -inf
  %v996 = vrot.slane %v995, 4
  %v997 = vmax.f32 %v995, %v996
  %v998 = vrot.slane %v997, 2
  %v999 = vmax.f32 %v997, %v998
  %v1000 = vrot.slane %v999, 1
  %v1001 = vmax.f32 %v999, %v1000
  %v1002 = vsel %vm987, %v957, -inf
  %v1003 = vrot.slane %v1002, 4
  %v1004 = vmax.f32 %v1002, %v1003
  %v1005 = vrot.slane %v1004, 2
  %v1006 = vmax.f32 %v1004, %v1005
  %v1007 = vrot.slane %v1006, 1
  %v1008 = vmax.f32 %v1006, %v1007
  %v1009 = vsel %vm987, %v958, -inf
  %v1010 = vrot.slane %v1009, 4
  %v1011 = vmax.f32 %v1009, %v1010
  %v1012 = vrot.slane %v1011, 2
  %v1013 = vmax.f32 %v1011, %v1012
  %v1014 = vrot.slane %v1013, 1
  %v1015 = vmax.f32 %v1013, %v1014
  %v1016 = vsel %vm987, %v959, -inf
  %v1017 = vrot.slane %v1016, 4
  %v1018 = vmax.f32 %v1016, %v1017
  %v1019 = vrot.slane %v1018, 2
  %v1020 = vmax.f32 %v1018, %v1019
  %v1021 = vrot.slane %v1020, 1
  %v1022 = vmax.f32 %v1020, %v1021
  %v1023 = vsel %vm987, %v960, -inf
  %v1024 = vrot.slane %v1023, 4
  %v1025 = vmax.f32 %v1023, %v1024
  %v1026 = vrot.slane %v1025, 2
  %v1027 = vmax.f32 %v1025, %v1026
  %v1028 = vrot.slane %v1027, 1
  %v1029 = vmax.f32 %v1027, %v1028
  %v1030 = vsel %vm987, %v961, -inf
  %v1031 = vrot.slane %v1030, 4
  %v1032 = vmax.f32 %v1030, %v1031
  %v1033 = vrot.slane %v1032, 2
  %v1034 = vmax.f32 %v1032, %v1033
  %v1035 = vrot.slane %v1034, 1
  %v1036 = vmax.f32 %v1034, %v1035
  %v1037 = vsel %vm987, %v962, -inf
  %v1038 = vrot.slane %v1037, 4
  %v1039 = vmax.f32 %v1037, %v1038
  %v1040 = vrot.slane %v1039, 2
  %v1041 = vmax.f32 %v1039, %v1040
  %v1042 = vrot.slane %v1041, 1
  %v1043 = vmax.f32 %v1041, %v1042
  %v1044 = vsel %vm987, %v963, -inf
  %v1045 = vrot.slane %v1044, 4
  %v1046 = vmax.f32 %v1044, %v1045
  %v1047 = vrot.slane %v1046, 2
  %v1048 = vmax.f32 %v1046, %v1047
  %v1049 = vrot.slane %v1048, 1
  %v1050 = vmax.f32 %v1048, %v1049
  %v1051 = vsel %vm987, %v964, -inf
  %v1052 = vrot.slane %v1051, 4
  %v1053 = vmax.f32 %v1051, %v1052
  %v1054 = vrot.slane %v1053, 2
  %v1055 = vmax.f32 %v1053, %v1054
  %v1056 = vrot.slane %v1055, 1
  %v1057 = vmax.f32 %v1055, %v1056
  %v1058 = vsel %vm987, %v965, -inf
  %v1059 = vrot.slane %v1058, 4
  %v1060 = vmax.f32 %v1058, %v1059
  %v1061 = vrot.slane %v1060, 2
  %v1062 = vmax.f32 %v1060, %v1061
  %v1063 = vrot.slane %v1062, 1
  %v1064 = vmax.f32 %v1062, %v1063
  %v1065 = vsel %vm987, %v966, -inf
  %v1066 = vrot.slane %v1065, 4
  %v1067 = vmax.f32 %v1065, %v1066
  %v1068 = vrot.slane %v1067, 2
  %v1069 = vmax.f32 %v1067, %v1068
  %v1070 = vrot.slane %v1069, 1
  %v1071 = vmax.f32 %v1069, %v1070
  %v1072 = vsel %vm987, %v967, -inf
  %v1073 = vrot.slane %v1072, 4
  %v1074 = vmax.f32 %v1072, %v1073
  %v1075 = vrot.slane %v1074, 2
  %v1076 = vmax.f32 %v1074, %v1075
  %v1077 = vrot.slane %v1076, 1
  %v1078 = vmax.f32 %v1076, %v1077
  %v1079 = vsel %vm987, %v968, -inf
  %v1080 = vrot.slane %v1079, 4
  %v1081 = vmax.f32 %v1079, %v1080
  %v1082 = vrot.slane %v1081, 2
  %v1083 = vmax.f32 %v1081, %v1082
  %v1084 = vrot.slane %v1083, 1
  %v1085 = vmax.f32 %v1083, %v1084
  %v1086 = vsel %vm987, %v969, -inf
  %v1087 = vrot.slane %v1086, 4
  %v1088 = vmax.f32 %v1086, %v1087
  %v1089 = vrot.slane %v1088, 2
  %v1090 = vmax.f32 %v1088, %v1089
  %v1091 = vrot.slane %v1090, 1
  %v1092 = vmax.f32 %v1090, %v1091
  %v1093 = vsel %vm987, %v970, -inf
  %v1094 = vrot.slane %v1093, 4
  %v1095 = vmax.f32 %v1093, %v1094
  %v1096 = vrot.slane %v1095, 2
  %v1097 = vmax.f32 %v1095, %v1096
  %v1098 = vrot.slane %v1097, 1
  %v1099 = vmax.f32 %v1097, %v1098
  %v1100 = vsel %vm987, %v971, -inf
  %v1101 = vrot.slane %v1100, 4
  %v1102 = vmax.f32 %v1100, %v1101
  %v1103 = vrot.slane %v1102, 2
  %v1104 = vmax.f32 %v1102, %v1103
  %v1105 = vrot.slane %v1104, 1
  %v1106 = vmax.f32 %v1104, %v1105
  %v1107 = vsel %vm987, %v972, -inf
  %v1108 = vrot.slane %v1107, 4
  %v1109 = vmax.f32 %v1107, %v1108
  %v1110 = vrot.slane %v1109, 2
  %v1111 = vmax.f32 %v1109, %v1110
  %v1112 = vrot.slane %v1111, 1
  %v1113 = vmax.f32 %v1111, %v1112
  %v1114 = vsel %vm987, %v973, -inf
  %v1115 = vrot.slane %v1114, 4
  %v1116 = vmax.f32 %v1114, %v1115
  %v1117 = vrot.slane %v1116, 2
  %v1118 = vmax.f32 %v1116, %v1117
  %v1119 = vrot.slane %v1118, 1
  %v1120 = vmax.f32 %v1118, %v1119
  %v1121 = vsel %vm987, %v974, -inf
  %v1122 = vrot.slane %v1121, 4
  %v1123 = vmax.f32 %v1121, %v1122
  %v1124 = vrot.slane %v1123, 2
  %v1125 = vmax.f32 %v1123, %v1124
  %v1126 = vrot.slane %v1125, 1
  %v1127 = vmax.f32 %v1125, %v1126
  %v1128 = vsel %vm987, %v975, -inf
  %v1129 = vrot.slane %v1128, 4
  %v1130 = vmax.f32 %v1128, %v1129
  %v1131 = vrot.slane %v1130, 2
  %v1132 = vmax.f32 %v1130, %v1131
  %v1133 = vrot.slane %v1132, 1
  %v1134 = vmax.f32 %v1132, %v1133
  %v1135 = vsel %vm987, %v976, -inf
  %v1136 = vrot.slane %v1135, 4
  %v1137 = vmax.f32 %v1135, %v1136
  %v1138 = vrot.slane %v1137, 2
  %v1139 = vmax.f32 %v1137, %v1138
  %v1140 = vrot.slane %v1139, 1
  %v1141 = vmax.f32 %v1139, %v1140
  %v1142 = vsel %vm987, %v977, -inf
  %v1143 = vrot.slane %v1142, 4
  %v1144 = vmax.f32 %v1142, %v1143
  %v1145 = vrot.slane %v1144, 2
  %v1146 = vmax.f32 %v1144, %v1145
  %v1147 = vrot.slane %v1146, 1
  %v1148 = vmax.f32 %v1146, %v1147
  %v1149 = vsel %vm987, %v978, -inf
  %v1150 = vrot.slane %v1149, 4
  %v1151 = vmax.f32 %v1149, %v1150
  %v1152 = vrot.slane %v1151, 2
  %v1153 = vmax.f32 %v1151, %v1152
  %v1154 = vrot.slane %v1153, 1
  %v1155 = vmax.f32 %v1153, %v1154
  %v1156 = vsel %vm987, %v979, -inf
  %v1157 = vrot.slane %v1156, 4
  %v1158 = vmax.f32 %v1156, %v1157
  %v1159 = vrot.slane %v1158, 2
  %v1160 = vmax.f32 %v1158, %v1159
  %v1161 = vrot.slane %v1160, 1
  %v1162 = vmax.f32 %v1160, %v1161
  %v1163 = vsel %vm987, %v980, -inf
  %v1164 = vrot.slane %v1163, 4
  %v1165 = vmax.f32 %v1163, %v1164
  %v1166 = vrot.slane %v1165, 2
  %v1167 = vmax.f32 %v1165, %v1166
  %v1168 = vrot.slane %v1167, 1
  %v1169 = vmax.f32 %v1167, %v1168
  %v1170 = vsel %vm987, %v981, -inf
  %v1171 = vrot.slane %v1170, 4
  %v1172 = vmax.f32 %v1170, %v1171
  %v1173 = vrot.slane %v1172, 2
  %v1174 = vmax.f32 %v1172, %v1173
  %v1175 = vrot.slane %v1174, 1
  %v1176 = vmax.f32 %v1174, %v1175
  %v1177 = vsel %vm987, %v982, -inf
  %v1178 = vrot.slane %v1177, 4
  %v1179 = vmax.f32 %v1177, %v1178
  %v1180 = vrot.slane %v1179, 2
  %v1181 = vmax.f32 %v1179, %v1180
  %v1182 = vrot.slane %v1181, 1
  %v1183 = vmax.f32 %v1181, %v1182
  %v1184 = vsel %vm987, %v983, -inf
  %v1185 = vrot.slane %v1184, 4
  %v1186 = vmax.f32 %v1184, %v1185
  %v1187 = vrot.slane %v1186, 2
  %v1188 = vmax.f32 %v1186, %v1187
  %v1189 = vrot.slane %v1188, 1
  %v1190 = vmax.f32 %v1188, %v1189
  %v1191 = vsel %vm987, %v984, -inf
  %v1192 = vrot.slane %v1191, 4
  %v1193 = vmax.f32 %v1191, %v1192
  %v1194 = vrot.slane %v1193, 2
  %v1195 = vmax.f32 %v1193, %v1194
  %v1196 = vrot.slane %v1195, 1
  %v1197 = vmax.f32 %v1195, %v1196
  %v1198 = vsel %vm987, %v985, -inf
  %v1199 = vrot.slane %v1198, 4
  %v1200 = vmax.f32 %v1198, %v1199
  %v1201 = vrot.slane %v1200, 2
  %v1202 = vmax.f32 %v1200, %v1201
  %v1203 = vrot.slane %v1202, 1
  %v1204 = vmax.f32 %v1202, %v1203
  %v1205 = vsel %vm987, %v986, -inf
  %v1206 = vrot.slane %v1205, 4
  %v1207 = vmax.f32 %v1205, %v1206
  %v1208 = vrot.slane %v1207, 2
  %v1209 = vmax.f32 %v1207, %v1208
  %v1210 = vrot.slane %v1209, 1
  %v1211 = vmax.f32 %v1209, %v1210
  %vm1244 = vcmask 1041409
  %v1245 = vsel %vm1244, %v1001, %v994
  %vm1246 = vcmask 1042434
  %v1247 = vsel %vm1246, %v1008, %v1245
  %vm1248 = vcmask 1043459
  %v1249 = vsel %vm1248, %v1015, %v1247
  %vm1250 = vcmask 1044484
  %v1251 = vsel %vm1250, %v1022, %v1249
  %vm1252 = vcmask 1045509
  %v1253 = vsel %vm1252, %v1029, %v1251
  %vm1254 = vcmask 1046534
  %v1255 = vsel %vm1254, %v1036, %v1253
  %vm1256 = vcmask 1047559
  %v1257 = vsel %vm1256, %v1043, %v1255
  %v1258 = vsel %vm1244, %v1057, %v1050
  %v1259 = vsel %vm1246, %v1064, %v1258
  %v1260 = vsel %vm1248, %v1071, %v1259
  %v1261 = vsel %vm1250, %v1078, %v1260
  %v1262 = vsel %vm1252, %v1085, %v1261
  %v1263 = vsel %vm1254, %v1092, %v1262
  %v1264 = vsel %vm1256, %v1099, %v1263
  %v1265 = vsel %vm1244, %v1113, %v1106
  %v1266 = vsel %vm1246, %v1120, %v1265
  %v1267 = vsel %vm1248, %v1127, %v1266
  %v1268 = vsel %vm1250, %v1134, %v1267
  %v1269 = vsel %vm1252, %v1141, %v1268
  %v1270 = vsel %vm1254, %v1148, %v1269
  %v1271 = vsel %vm1256, %v1155, %v1270
  %v1272 = vsel %vm1244, %v1169, %v1162
  %v1273 = vsel %vm1246, %v1176, %v1272
  %v1274 = vsel %vm1248, %v1183, %v1273
  %v1275 = vsel %vm1250, %v1190, %v1274
  %v1276 = vsel %vm1252, %v1197, %v1275
  %v1277 = vsel %vm1254, %v1204, %v1276
  %v1278 = vsel %vm1256, %v1211, %v1277
  %1283 = vst.msk [vmem:[%s5] sm:$0xff] %vm987, %v1257
  %1284 = vst.msk [vmem:[%s5 + $0x8] sm:$0xff] %vm987, %v1264
  %1285 = vst.msk [vmem:[%s5 + $0x10] sm:$0xff] %vm987, %v1271
  %1286 = vst.msk [vmem:[%s5 + $0x18] sm:$0xff] %vm987, %v1278
  // Predicated region
  $region22: #{pointnet2_segment_forward.4} parent=0 // pred_check
    _
  $region23: #{pointnet2_segment_forward.4} parent=0 // pred_check_branch
    %1288 = sbr.rel (0) target = $region25
  $region24: #{pointnet2_segment_forward.4} parent=0 // pred_region
    _
  $region25: #{pointnet2_segment_forward.4} parent=0 // pred_fallthru
    _
  // Predicated region
  $region26: #{pointnet2_segment_forward.4} parent=0 // pred_check
    _
  $region27: #{pointnet2_segment_forward.4} parent=0 // pred_check_branch
    %1290 = sbr.rel (0) target = $region29
  $region28: #{pointnet2_segment_forward.4} parent=0 // pred_region
    _
  $region29: #{pointnet2_segment_forward.4} parent=0 // pred_fallthru
    _

// kernel: pointnet2_segment_forward.5
$region0: #{pointnet2_segment_forward.5}
  #allocation0 [shape = 'u32[]', space=smem, size = 0x4, offset = 0x4, fixed_abs, tag = 'smem constant byte address 0x4 - core index']
  #allocation1 [shape = 'u32[144,128]{1,0:T(1,128)}', space=vmem, size = 0x12000, scoped, tag = 'internal scratch']
  %s0 = inlined_call_operand.vmem [shape: f32[128,35], index: 0, kind: input, shape index: {}]
  %s1 = inlined_call_operand.vmem [shape: bf16[35,64], index: 1, kind: input, shape index: {}]
  %s2 = inlined_call_operand.vmem [shape: f32[1,64], index: 2, kind: input, shape index: {}]
  %s3 = inlined_call_operand.vmem [shape: f32[16,64], index: 3, kind: output, shape index: {}]
  %s4 = sld [smem:[#allocation0]]
  $region22: #{pointnet2_segment_forward.5} parent=0
    _
  %s6 = ssub.s32 1, %s4
  %s7 = scalar_select 0, %s6, %s4
  // Predicated region
  $region2: #{pointnet2_segment_forward.5} parent=0 // pred_check
    _
  $region3: #{pointnet2_segment_forward.5} parent=0 // pred_check_branch
    %9 = sbr.rel (0) target = $region5
  $region4: #{pointnet2_segment_forward.5} parent=0 // pred_region
    _
  $region5: #{pointnet2_segment_forward.5} parent=0 // pred_fallthru
    _
  // Predicated region
  $region6: #{pointnet2_segment_forward.5} parent=0 // pred_check
    _
  $region7: #{pointnet2_segment_forward.5} parent=0 // pred_check_branch
    %11 = sbr.rel (0) target = $region9
  $region8: #{pointnet2_segment_forward.5} parent=0 // pred_region
    _
  $region9: #{pointnet2_segment_forward.5} parent=0 // pred_fallthru
    _
  // Predicated region
  $region10: #{pointnet2_segment_forward.5} parent=0 // pred_check
    _
  $region11: #{pointnet2_segment_forward.5} parent=0 // pred_check_branch
    %13 = sbr.rel (0) target = $region13
  $region12: #{pointnet2_segment_forward.5} parent=0 // pred_region
    _
  $region13: #{pointnet2_segment_forward.5} parent=0 // pred_fallthru
    _
  %v15 = vld [vmem:[%s0] sm:$0xff]
  %v16 = vld [vmem:[%s0 + $0x8] sm:$0xff]
  %v17 = vld [vmem:[%s0 + $0x10] sm:$0xff]
  %v18 = vld [vmem:[%s0 + $0x18] sm:$0xff]
  %v19 = vld [vmem:[%s0 + $0x20] sm:$0xff]
  %v20 = vld [vmem:[%s0 + $0x28] sm:$0xff]
  %v21 = vld [vmem:[%s0 + $0x30] sm:$0xff]
  %v22 = vld [vmem:[%s0 + $0x38] sm:$0xff]
  %v23 = vld [vmem:[%s0 + $0x40] sm:$0xff]
  %v24 = vld [vmem:[%s0 + $0x48] sm:$0xff]
  %v25 = vld [vmem:[%s0 + $0x50] sm:$0xff]
  %v26 = vld [vmem:[%s0 + $0x58] sm:$0xff]
  %v27 = vld [vmem:[%s0 + $0x60] sm:$0xff]
  %v28 = vld [vmem:[%s0 + $0x68] sm:$0xff]
  %v29 = vld [vmem:[%s0 + $0x70] sm:$0xff]
  %v30 = vld [vmem:[%s0 + $0x78] sm:$0xff]
  %v31 = vld [vmem:[%s1] sm:$0xf]
  %v32 = vld [vmem:[%s1 + $0x4] sm:$0xf]
  %v33 = vld [vmem:[%s1 + $0x8] sm:$0xf]
  %v34 = vld [vmem:[%s1 + $0xc] sm:$0xf]
  %v35 = vld [vmem:[%s1 + $0x10] sm:$0x3]
  %v36 = vld [vmem:[%s2] sm:$0x1]
  %v37 = vpack.c.bf16 %v16, %v15
  %v38 = vpack.c.bf16 %v18, %v17
  %v39 = vpack.c.bf16 %v20, %v19
  %v40 = vpack.c.bf16 %v22, %v21
  %v41 = vpack.c.bf16 %v24, %v23
  %v42 = vpack.c.bf16 %v26, %v25
  %v43 = vpack.c.bf16 %v28, %v27
  %v44 = vpack.c.bf16 %v30, %v29
  %v46 = vlaneseq
  %v47 = vshrl.u32 %v46, 7
  %v48 = vsub.s32 0, %v47
  %v49 = vrot.slane %v36, %v48
  %v56 = vunpack.c.l.b16 %v31
  %v57 = vunpack.c.l.b16 %v32
  %v58 = vunpack.c.l.b16 %v33
  %v59 = vunpack.c.l.b16 %v34
  %v60 = vunpack.c.l.b16 %v35
  %v61 = vpack.c.b16 %v57, %v56
  %v62 = vpack.c.b16 %v59, %v58
  %v63 = vpack.c.b16 %v60, %v60
  %vm66 = vcmask 285696
  %v68 = vsel %vm66, %v37, 0
  %v71 = vsel %vm66, %v38, 0
  %v74 = vsel %vm66, %v39, 0
  %v77 = vsel %vm66, %v40, 0
  %v80 = vsel %vm66, %v41, 0
  %v83 = vsel %vm66, %v42, 0
  %v86 = vsel %vm66, %v43, 0
  %v89 = vsel %vm66, %v44, 0
  %vm91 = vcmask 1040384
  %vm92 = vcmask 1041408
  %v93 = vsel %vm91, 4294967295, 65535
  %v94 = vsel %vm92, %v93, 0
  %v96 = vand.u32 %v63, %v94
  %98 = vmatprep.subr.bf16.mxu0 0
  %99 = vmatpush1.bf16.msra.mxu0 0
  %100 = vmatprep.subr.bf16.mxu0 0
  %101 = vmatpush1.bf16.msra.mxu0 0
  %102 = vmatprep.subr.bf16.mxu0 0
  %103 = vmatpush1.bf16.msra.mxu0 0
  %104 = vmatprep.subr.bf16.mxu0 0
  %105 = vmatpush1.bf16.msra.mxu0 0
  %106 = vmatprep.subr.bf16.mxu0 0
  %107 = vmatpush1.bf16.msra.mxu0 0
  %108 = vmatprep.subr.bf16.mxu0 0
  %109 = vmatpush1.bf16.msra.mxu0 %v96
  %110 = vmatprep.subr.bf16.mxu0 0
  %111 = vmatpush1.bf16.msra.mxu0 %v62
  %112 = vmatprep.subr.bf16.mxu0 0
  %113 = vmatpush1.bf16.msra.mxu0 %v61
  %114 = vmatprep.subr.bf16.mxu0 0
  %115 = vmatpush2.bf16.msra.mxu0 0
  %116 = vmatprep.subr.bf16.mxu0 0
  %117 = vmatpush2.bf16.msra.mxu0 0
  %118 = vmatprep.subr.bf16.mxu0 0
  %119 = vmatpush2.bf16.msra.mxu0 0
  %120 = vmatprep.subr.bf16.mxu0 0
  %121 = vmatpush2.bf16.msra.mxu0 0
  %122 = vmatprep.subr.bf16.mxu0 0
  %123 = vmatpush2.bf16.msra.mxu0 0
  %124 = vmatprep.subr.bf16.mxu0 0
  %125 = vmatpush2.bf16.msra.mxu0 0
  %126 = vmatprep.subr.bf16.mxu0 0
  %127 = vmatpush2.bf16.msra.mxu0 0
  %128 = vmatprep.subr.bf16.mxu0 0
  %129 = vmatpush2.bf16.msra.mxu0 0
  %130 = vmatprep.mubr.bf16.mxu0 0
  %131 = vmatmul.mubr.bf16.gmra.mxu0 %v68
  %v132 = vpop.f32.mrf.mxu0
  %v133 = vadd.f32 %v49, %v132
  %v134 = vpop.f32.mrf.mxu0
  %v135 = vpop.f32.mrf.mxu0
  %v136 = vadd.f32 %v49, %v135
  %v137 = vpop.f32.mrf.mxu0
  %138 = vmatprep.mubr.bf16.mxu0 0
  %139 = vmatmul.mubr.bf16.gmra.mxu0 %v71
  %v140 = vpop.f32.mrf.mxu0
  %v141 = vadd.f32 %v49, %v140
  %v142 = vpop.f32.mrf.mxu0
  %v143 = vpop.f32.mrf.mxu0
  %v144 = vadd.f32 %v49, %v143
  %v145 = vpop.f32.mrf.mxu0
  %146 = vmatprep.mubr.bf16.mxu0 0
  %147 = vmatmul.mubr.bf16.gmra.mxu0 %v74
  %v148 = vpop.f32.mrf.mxu0
  %v149 = vadd.f32 %v49, %v148
  %v150 = vpop.f32.mrf.mxu0
  %v151 = vpop.f32.mrf.mxu0
  %v152 = vadd.f32 %v49, %v151
  %v153 = vpop.f32.mrf.mxu0
  %154 = vmatprep.mubr.bf16.mxu0 0
  %155 = vmatmul.mubr.bf16.gmra.mxu0 %v77
  %v156 = vpop.f32.mrf.mxu0
  %v157 = vadd.f32 %v49, %v156
  %v158 = vpop.f32.mrf.mxu0
  %v159 = vpop.f32.mrf.mxu0
  %v160 = vadd.f32 %v49, %v159
  %v161 = vpop.f32.mrf.mxu0
  %162 = vmatprep.mubr.bf16.mxu0 0
  %163 = vmatmul.mubr.bf16.gmra.mxu0 %v80
  %v164 = vpop.f32.mrf.mxu0
  %v165 = vadd.f32 %v49, %v164
  %v166 = vpop.f32.mrf.mxu0
  %v167 = vpop.f32.mrf.mxu0
  %v168 = vadd.f32 %v49, %v167
  %v169 = vpop.f32.mrf.mxu0
  %170 = vmatprep.mubr.bf16.mxu0 0
  %171 = vmatmul.mubr.bf16.gmra.mxu0 %v83
  %v172 = vpop.f32.mrf.mxu0
  %v173 = vadd.f32 %v49, %v172
  %v174 = vpop.f32.mrf.mxu0
  %v175 = vpop.f32.mrf.mxu0
  %v176 = vadd.f32 %v49, %v175
  %v177 = vpop.f32.mrf.mxu0
  %178 = vmatprep.mubr.bf16.mxu0 0
  %179 = vmatmul.mubr.bf16.gmra.mxu0 %v86
  %v180 = vpop.f32.mrf.mxu0
  %v181 = vadd.f32 %v49, %v180
  %v182 = vpop.f32.mrf.mxu0
  %v183 = vpop.f32.mrf.mxu0
  %v184 = vadd.f32 %v49, %v183
  %v185 = vpop.f32.mrf.mxu0
  %186 = vmatprep.mubr.bf16.mxu0 0
  %187 = vmatmul.mubr.bf16.gmra.mxu0 %v89
  %v188 = vpop.f32.mrf.mxu0
  %v189 = vadd.f32 %v49, %v188
  %v190 = vpop.f32.mrf.mxu0
  %v191 = vpop.f32.mrf.mxu0
  %v192 = vadd.f32 %v49, %v191
  %v193 = vpop.f32.mrf.mxu0
  %194 = vdwg.mxu0
  %v195 = vmax.f32 %v133, 0.0
  %v196 = vmax.f32 %v136, 0.0
  %v197 = vmax.f32 %v141, 0.0
  %v198 = vmax.f32 %v144, 0.0
  %v199 = vmax.f32 %v149, 0.0
  %v200 = vmax.f32 %v152, 0.0
  %v201 = vmax.f32 %v157, 0.0
  %v202 = vmax.f32 %v160, 0.0
  %v203 = vmax.f32 %v165, 0.0
  %v204 = vmax.f32 %v168, 0.0
  %v205 = vmax.f32 %v173, 0.0
  %v206 = vmax.f32 %v176, 0.0
  %v207 = vmax.f32 %v181, 0.0
  %v208 = vmax.f32 %v184, 0.0
  %v209 = vmax.f32 %v189, 0.0
  %v210 = vmax.f32 %v192, 0.0
  %vm211 = vcmask 523264
  %v212 = vsel %vm211, %v195, -inf
  %v213 = vrot.slane %v212, 4
  %v214 = vmax.f32 %v212, %v213
  %v215 = vrot.slane %v214, 2
  %v216 = vmax.f32 %v214, %v215
  %v217 = vrot.slane %v216, 1
  %v218 = vmax.f32 %v216, %v217
  %v219 = vsel %vm211, %v196, -inf
  %v220 = vrot.slane %v219, 4
  %v221 = vmax.f32 %v219, %v220
  %v222 = vrot.slane %v221, 2
  %v223 = vmax.f32 %v221, %v222
  %v224 = vrot.slane %v223, 1
  %v225 = vmax.f32 %v223, %v224
  %v226 = vsel %vm211, %v197, -inf
  %v227 = vrot.slane %v226, 4
  %v228 = vmax.f32 %v226, %v227
  %v229 = vrot.slane %v228, 2
  %v230 = vmax.f32 %v228, %v229
  %v231 = vrot.slane %v230, 1
  %v232 = vmax.f32 %v230, %v231
  %v233 = vsel %vm211, %v198, -inf
  %v234 = vrot.slane %v233, 4
  %v235 = vmax.f32 %v233, %v234
  %v236 = vrot.slane %v235, 2
  %v237 = vmax.f32 %v235, %v236
  %v238 = vrot.slane %v237, 1
  %v239 = vmax.f32 %v237, %v238
  %v240 = vsel %vm211, %v199, -inf
  %v241 = vrot.slane %v240, 4
  %v242 = vmax.f32 %v240, %v241
  %v243 = vrot.slane %v242, 2
  %v244 = vmax.f32 %v242, %v243
  %v245 = vrot.slane %v244, 1
  %v246 = vmax.f32 %v244, %v245
  %v247 = vsel %vm211, %v200, -inf
  %v248 = vrot.slane %v247, 4
  %v249 = vmax.f32 %v247, %v248
  %v250 = vrot.slane %v249, 2
  %v251 = vmax.f32 %v249, %v250
  %v252 = vrot.slane %v251, 1
  %v253 = vmax.f32 %v251, %v252
  %v254 = vsel %vm211, %v201, -inf
  %v255 = vrot.slane %v254, 4
  %v256 = vmax.f32 %v254, %v255
  %v257 = vrot.slane %v256, 2
  %v258 = vmax.f32 %v256, %v257
  %v259 = vrot.slane %v258, 1
  %v260 = vmax.f32 %v258, %v259
  %v261 = vsel %vm211, %v202, -inf
  %v262 = vrot.slane %v261, 4
  %v263 = vmax.f32 %v261, %v262
  %v264 = vrot.slane %v263, 2
  %v265 = vmax.f32 %v263, %v264
  %v266 = vrot.slane %v265, 1
  %v267 = vmax.f32 %v265, %v266
  %v268 = vsel %vm211, %v203, -inf
  %v269 = vrot.slane %v268, 4
  %v270 = vmax.f32 %v268, %v269
  %v271 = vrot.slane %v270, 2
  %v272 = vmax.f32 %v270, %v271
  %v273 = vrot.slane %v272, 1
  %v274 = vmax.f32 %v272, %v273
  %v275 = vsel %vm211, %v204, -inf
  %v276 = vrot.slane %v275, 4
  %v277 = vmax.f32 %v275, %v276
  %v278 = vrot.slane %v277, 2
  %v279 = vmax.f32 %v277, %v278
  %v280 = vrot.slane %v279, 1
  %v281 = vmax.f32 %v279, %v280
  %v282 = vsel %vm211, %v205, -inf
  %v283 = vrot.slane %v282, 4
  %v284 = vmax.f32 %v282, %v283
  %v285 = vrot.slane %v284, 2
  %v286 = vmax.f32 %v284, %v285
  %v287 = vrot.slane %v286, 1
  %v288 = vmax.f32 %v286, %v287
  %v289 = vsel %vm211, %v206, -inf
  %v290 = vrot.slane %v289, 4
  %v291 = vmax.f32 %v289, %v290
  %v292 = vrot.slane %v291, 2
  %v293 = vmax.f32 %v291, %v292
  %v294 = vrot.slane %v293, 1
  %v295 = vmax.f32 %v293, %v294
  %v296 = vsel %vm211, %v207, -inf
  %v297 = vrot.slane %v296, 4
  %v298 = vmax.f32 %v296, %v297
  %v299 = vrot.slane %v298, 2
  %v300 = vmax.f32 %v298, %v299
  %v301 = vrot.slane %v300, 1
  %v302 = vmax.f32 %v300, %v301
  %v303 = vsel %vm211, %v208, -inf
  %v304 = vrot.slane %v303, 4
  %v305 = vmax.f32 %v303, %v304
  %v306 = vrot.slane %v305, 2
  %v307 = vmax.f32 %v305, %v306
  %v308 = vrot.slane %v307, 1
  %v309 = vmax.f32 %v307, %v308
  %v310 = vsel %vm211, %v209, -inf
  %v311 = vrot.slane %v310, 4
  %v312 = vmax.f32 %v310, %v311
  %v313 = vrot.slane %v312, 2
  %v314 = vmax.f32 %v312, %v313
  %v315 = vrot.slane %v314, 1
  %v316 = vmax.f32 %v314, %v315
  %v317 = vsel %vm211, %v210, -inf
  %v318 = vrot.slane %v317, 4
  %v319 = vmax.f32 %v317, %v318
  %v320 = vrot.slane %v319, 2
  %v321 = vmax.f32 %v319, %v320
  %v322 = vrot.slane %v321, 1
  %v323 = vmax.f32 %v321, %v322
  %vm340 = vcmask 1041409
  %v341 = vsel %vm340, %v225, %v218
  %vm342 = vcmask 1042434
  %v343 = vsel %vm342, %v232, %v341
  %vm344 = vcmask 1043459
  %v345 = vsel %vm344, %v239, %v343
  %vm346 = vcmask 1044484
  %v347 = vsel %vm346, %v246, %v345
  %vm348 = vcmask 1045509
  %v349 = vsel %vm348, %v253, %v347
  %vm350 = vcmask 1046534
  %v351 = vsel %vm350, %v260, %v349
  %vm352 = vcmask 1047559
  %v353 = vsel %vm352, %v267, %v351
  %v354 = vsel %vm340, %v281, %v274
  %v355 = vsel %vm342, %v288, %v354
  %v356 = vsel %vm344, %v295, %v355
  %v357 = vsel %vm346, %v302, %v356
  %v358 = vsel %vm348, %v309, %v357
  %v359 = vsel %vm350, %v316, %v358
  %v360 = vsel %vm352, %v323, %v359
  %363 = vst.msk [vmem:[%s3] sm:$0xff] %vm211, %v353
  %364 = vst.msk [vmem:[%s3 + $0x8] sm:$0xff] %vm211, %v360
  // Predicated region
  $region14: #{pointnet2_segment_forward.5} parent=0 // pred_check
    _
  $region15: #{pointnet2_segment_forward.5} parent=0 // pred_check_branch
    %366 = sbr.rel (0) target = $region17
  $region16: #{pointnet2_segment_forward.5} parent=0 // pred_region
    _
  $region17: #{pointnet2_segment_forward.5} parent=0 // pred_fallthru
    _
  // Predicated region
  $region18: #{pointnet2_segment_forward.5} parent=0 // pred_check
    _
  $region19: #{pointnet2_segment_forward.5} parent=0 // pred_check_branch
    %368 = sbr.rel (0) target = $region21
  $region20: #{pointnet2_segment_forward.5} parent=0 // pred_region
    _
  $region21: #{pointnet2_segment_forward.5} parent=0 // pred_fallthru
    _

// kernel: pointnet2_segment_forward.6
$region0: #{pointnet2_segment_forward.6}
  #allocation0 [shape = 'u32[]', space=smem, size = 0x4, offset = 0x4, fixed_abs, tag = 'smem constant byte address 0x4 - core index']
  #allocation1 [shape = 'u32[144,128]{1,0:T(1,128)}', space=vmem, size = 0x12000, scoped, tag = 'internal scratch']
  %s0 = inlined_call_operand.vmem [shape: s32[32,3], index: 0, kind: input, shape index: {}]
  %s1 = inlined_call_operand.vmem [shape: f32[32,3], index: 1, kind: input, shape index: {}]
  %s2 = inlined_call_operand.vmem [shape: f32[16,64], index: 2, kind: input, shape index: {}]
  %s3 = inlined_call_operand.vmem [shape: f32[32,32], index: 3, kind: input, shape index: {}]
  %s4 = inlined_call_operand.vmem [shape: bf16[32,64], index: 4, kind: input, shape index: {}]
  %s5 = inlined_call_operand.vmem [shape: bf16[64,64], index: 5, kind: input, shape index: {}]
  %s6 = inlined_call_operand.vmem [shape: f32[1,64], index: 6, kind: input, shape index: {}]
  %s7 = inlined_call_operand.vmem [shape: f32[32,64], index: 7, kind: output, shape index: {}]
  %s8 = sld [smem:[#allocation0]]
  $region38: #{pointnet2_segment_forward.6} parent=0
    _
  %s10 = ssub.s32 1, %s8
  %s11 = scalar_select 0, %s10, %s8
  // Predicated region
  $region2: #{pointnet2_segment_forward.6} parent=0 // pred_check
    _
  $region3: #{pointnet2_segment_forward.6} parent=0 // pred_check_branch
    %13 = sbr.rel (0) target = $region5
  $region4: #{pointnet2_segment_forward.6} parent=0 // pred_region
    _
  $region5: #{pointnet2_segment_forward.6} parent=0 // pred_fallthru
    _
  // Predicated region
  $region6: #{pointnet2_segment_forward.6} parent=0 // pred_check
    _
  $region7: #{pointnet2_segment_forward.6} parent=0 // pred_check_branch
    %15 = sbr.rel (0) target = $region9
  $region8: #{pointnet2_segment_forward.6} parent=0 // pred_region
    _
  $region9: #{pointnet2_segment_forward.6} parent=0 // pred_fallthru
    _
  // Predicated region
  $region10: #{pointnet2_segment_forward.6} parent=0 // pred_check
    _
  $region11: #{pointnet2_segment_forward.6} parent=0 // pred_check_branch
    %17 = sbr.rel (0) target = $region13
  $region12: #{pointnet2_segment_forward.6} parent=0 // pred_region
    _
  $region13: #{pointnet2_segment_forward.6} parent=0 // pred_fallthru
    _
  // Predicated region
  $region14: #{pointnet2_segment_forward.6} parent=0 // pred_check
    _
  $region15: #{pointnet2_segment_forward.6} parent=0 // pred_check_branch
    %19 = sbr.rel (0) target = $region17
  $region16: #{pointnet2_segment_forward.6} parent=0 // pred_region
    _
  $region17: #{pointnet2_segment_forward.6} parent=0 // pred_fallthru
    _
  // Predicated region
  $region18: #{pointnet2_segment_forward.6} parent=0 // pred_check
    _
  $region19: #{pointnet2_segment_forward.6} parent=0 // pred_check_branch
    %21 = sbr.rel (0) target = $region21
  $region20: #{pointnet2_segment_forward.6} parent=0 // pred_region
    _
  $region21: #{pointnet2_segment_forward.6} parent=0 // pred_fallthru
    _
  // Predicated region
  $region22: #{pointnet2_segment_forward.6} parent=0 // pred_check
    _
  $region23: #{pointnet2_segment_forward.6} parent=0 // pred_check_branch
    %23 = sbr.rel (0) target = $region25
  $region24: #{pointnet2_segment_forward.6} parent=0 // pred_region
    _
  $region25: #{pointnet2_segment_forward.6} parent=0 // pred_fallthru
    _
  // Predicated region
  $region26: #{pointnet2_segment_forward.6} parent=0 // pred_check
    _
  $region27: #{pointnet2_segment_forward.6} parent=0 // pred_check_branch
    %25 = sbr.rel (0) target = $region29
  $region28: #{pointnet2_segment_forward.6} parent=0 // pred_region
    _
  $region29: #{pointnet2_segment_forward.6} parent=0 // pred_fallthru
    _
  %v27 = vlaneseq
  %v28 = vand.u32 %v27, 127
  %v29 = vld [vmem:[%s0] sm:$0xff]
  %v30 = vld [vmem:[%s0 + $0x8] sm:$0xff]
  %v31 = vld [vmem:[%s0 + $0x10] sm:$0xff]
  %v32 = vld [vmem:[%s0 + $0x18] sm:$0xff]
  %v33 = vld [vmem:[%s1] sm:$0xff]
  %v34 = vld [vmem:[%s1 + $0x8] sm:$0xff]
  %v35 = vld [vmem:[%s1 + $0x10] sm:$0xff]
  %v36 = vld [vmem:[%s1 + $0x18] sm:$0xff]
  %37 = vset.pattern.permute.xlu0 0
  %38 = vperm.xlu0 %37, %v29
  %v39 = vpop.permute.xlu0 %38
  %40 = vset.pattern.permute.xlu0 0
  %41 = vperm.xlu0 %40, %v30
  %v42 = vpop.permute.xlu0 %41
  %43 = vset.pattern.permute.xlu0 0
  %44 = vperm.xlu0 %43, %v31
  %v45 = vpop.permute.xlu0 %44
  %46 = vset.pattern.permute.xlu0 0
  %47 = vperm.xlu0 %46, %v32
  %v48 = vpop.permute.xlu0 %47
  %vm49 = vcmp.eq.s32.totalorder %v39, %v28
  %vm50 = vcmp.eq.s32.totalorder %v42, %v28
  %vm51 = vcmp.eq.s32.totalorder %v45, %v28
  %vm52 = vcmp.eq.s32.totalorder %v48, %v28
  %v53 = vsel %vm49, 1, 0
  %v54 = vsel %vm50, 1, 0
  %v55 = vsel %vm51, 1, 0
  %v56 = vsel %vm52, 1, 0
  %v57 = vcvt.s32.f32 %v53
  %v58 = vcvt.s32.f32 %v54
  %v59 = vcvt.s32.f32 %v55
  %v60 = vcvt.s32.f32 %v56
  %62 = vset.pattern.permute.xlu0 0
  %63 = vperm.xlu0 %62, %v33
  %v64 = vpop.permute.xlu0 %63
  %67 = vset.pattern.permute.xlu0 0
  %68 = vperm.xlu0 %67, %v34
  %v69 = vpop.permute.xlu0 %68
  %72 = vset.pattern.permute.xlu0 0
  %73 = vperm.xlu0 %72, %v35
  %v74 = vpop.permute.xlu0 %73
  %77 = vset.pattern.permute.xlu0 0
  %78 = vperm.xlu0 %77, %v36
  %v79 = vpop.permute.xlu0 %78
  %v81 = vmul.f32 %v64, %v57
  %v82 = vmul.f32 %v69, %v58
  %v83 = vmul.f32 %v74, %v59
  %v84 = vmul.f32 %v79, %v60
  %v85 = vadd.f32 %v81, 0.0
  %v86 = vadd.f32 %v82, 0.0
  %v87 = vadd.f32 %v83, 0.0
  %v88 = vadd.f32 %v84, 0.0
  %89 = vset.pattern.permute.xlu0 1
  %90 = vperm.xlu0 %89, %v29
  %v91 = vpop.permute.xlu0 %90
  %92 = vset.pattern.permute.xlu0 1
  %93 = vperm.xlu0 %92, %v30
  %v94 = vpop.permute.xlu0 %93
  %95 = vset.pattern.permute.xlu0 1
  %96 = vperm.xlu0 %95, %v31
  %v97 = vpop.permute.xlu0 %96
  %98 = vset.pattern.permute.xlu0 1
  %99 = vperm.xlu0 %98, %v32
  %v100 = vpop.permute.xlu0 %99
  %vm101 = vcmp.eq.s32.totalorder %v91, %v28
  %vm102 = vcmp.eq.s32.totalorder %v94, %v28
  %vm103 = vcmp.eq.s32.totalorder %v97, %v28
  %vm104 = vcmp.eq.s32.totalorder %v100, %v28
  %v105 = vsel %vm101, 1, 0
  %v106 = vsel %vm102, 1, 0
  %v107 = vsel %vm103, 1, 0
  %v108 = vsel %vm104, 1, 0
  %v109 = vcvt.s32.f32 %v105
  %v110 = vcvt.s32.f32 %v106
  %v111 = vcvt.s32.f32 %v107
  %v112 = vcvt.s32.f32 %v108
  %113 = vset.pattern.permute.xlu0 1
  %114 = vperm.xlu0 %113, %v33
  %v115 = vpop.permute.xlu0 %114
  %117 = vset.pattern.permute.xlu0 1
  %118 = vperm.xlu0 %117, %v34
  %v119 = vpop.permute.xlu0 %118
  %121 = vset.pattern.permute.xlu0 1
  %122 = vperm.xlu0 %121, %v35
  %v123 = vpop.permute.xlu0 %122
  %125 = vset.pattern.permute.xlu0 1
  %126 = vperm.xlu0 %125, %v36
  %v127 = vpop.permute.xlu0 %126
  %v129 = vmul.f32 %v115, %v109
  %v130 = vmul.f32 %v119, %v110
  %v131 = vmul.f32 %v123, %v111
  %v132 = vmul.f32 %v127, %v112
  %v133 = vadd.f32 %v85, %v129
  %v134 = vadd.f32 %v86, %v130
  %v135 = vadd.f32 %v87, %v131
  %v136 = vadd.f32 %v88, %v132
  %137 = vset.pattern.permute.xlu0 2
  %138 = vperm.xlu0 %137, %v29
  %v139 = vpop.permute.xlu0 %138
  %140 = vset.pattern.permute.xlu0 2
  %141 = vperm.xlu0 %140, %v30
  %v142 = vpop.permute.xlu0 %141
  %143 = vset.pattern.permute.xlu0 2
  %144 = vperm.xlu0 %143, %v31
  %v145 = vpop.permute.xlu0 %144
  %146 = vset.pattern.permute.xlu0 2
  %147 = vperm.xlu0 %146, %v32
  %v148 = vpop.permute.xlu0 %147
  %vm149 = vcmp.eq.s32.totalorder %v139, %v28
  %vm150 = vcmp.eq.s32.totalorder %v142, %v28
  %vm151 = vcmp.eq.s32.totalorder %v145, %v28
  %vm152 = vcmp.eq.s32.totalorder %v148, %v28
  %v153 = vsel %vm149, 1, 0
  %v154 = vsel %vm150, 1, 0
  %v155 = vsel %vm151, 1, 0
  %v156 = vsel %vm152, 1, 0
  %v157 = vcvt.s32.f32 %v153
  %v158 = vcvt.s32.f32 %v154
  %v159 = vcvt.s32.f32 %v155
  %v160 = vcvt.s32.f32 %v156
  %161 = vset.pattern.permute.xlu0 2
  %162 = vperm.xlu0 %161, %v33
  %v163 = vpop.permute.xlu0 %162
  %165 = vset.pattern.permute.xlu0 2
  %166 = vperm.xlu0 %165, %v34
  %v167 = vpop.permute.xlu0 %166
  %169 = vset.pattern.permute.xlu0 2
  %170 = vperm.xlu0 %169, %v35
  %v171 = vpop.permute.xlu0 %170
  %173 = vset.pattern.permute.xlu0 2
  %174 = vperm.xlu0 %173, %v36
  %v175 = vpop.permute.xlu0 %174
  %v177 = vmul.f32 %v163, %v157
  %v178 = vmul.f32 %v167, %v158
  %v179 = vmul.f32 %v171, %v159
  %v180 = vmul.f32 %v175, %v160
  %v181 = vadd.f32 %v133, %v177
  %v182 = vadd.f32 %v134, %v178
  %v183 = vadd.f32 %v135, %v179
  %v184 = vadd.f32 %v136, %v180
  %v185 = vld [vmem:[%s2] sm:$0xff]
  %v186 = vld [vmem:[%s2 + $0x8] sm:$0xff]
  %vm187 = vcmask 130048
  %v189 = vsel %vm187, %v181, 0
  %v192 = vsel %vm187, %v182, 0
  %v195 = vsel %vm187, %v183, 0
  %v198 = vsel %vm187, %v184, 0
  %200 = vmatprep.subr.mxu0 0.0
  %201 = vmatpush1.msra.mxu0 0.0
  %202 = vmatprep.subr.mxu0 0.0
  %203 = vmatpush1.msra.mxu0 0.0
  %204 = vmatprep.subr.mxu0 0.0
  %205 = vmatpush1.msra.mxu0 0.0
  %206 = vmatprep.subr.mxu0 0.0
  %207 = vmatpush1.msra.mxu0 0.0
  %208 = vmatprep.subr.mxu0 0.0
  %209 = vmatpush1.msra.mxu0 0.0
  %210 = vmatprep.subr.mxu0 0.0
  %211 = vmatpush1.msra.mxu0 0.0
  %212 = vmatprep.subr.mxu0 0.0
  %213 = vmatpush1.msra.mxu0 0.0
  %214 = vmatprep.subr.mxu0 0.0
  %215 = vmatpush1.msra.mxu0 0.0
  %216 = vmatprep.subr.mxu0 0.0
  %217 = vmatpush1.msra.mxu0 0.0
  %218 = vmatprep.subr.mxu0 0.0
  %219 = vmatpush1.msra.mxu0 0.0
  %220 = vmatprep.subr.mxu0 0.0
  %221 = vmatpush1.msra.mxu0 0.0
  %222 = vmatprep.subr.mxu0 0.0
  %223 = vmatpush1.msra.mxu0 0.0
  %224 = vmatprep.subr.mxu0 0.0
  %225 = vmatpush1.msra.mxu0 0.0
  %226 = vmatprep.subr.mxu0 0.0
  %227 = vmatpush1.msra.mxu0 0.0
  %228 = vmatprep.subr.mxu0 0.0
  %229 = vmatpush1.msra.mxu0 %v186
  %230 = vmatprep.subr.mxu0 0.0
  %231 = vmatpush1.msra.mxu0 %v185
  %232 = vmatprep.subr.mxu0 0.0
  %233 = vmatpush2.msra.mxu0 0.0
  %234 = vmatprep.subr.mxu0 0.0
  %235 = vmatpush2.msra.mxu0 0.0
  %236 = vmatprep.subr.mxu0 0.0
  %237 = vmatpush2.msra.mxu0 0.0
  %238 = vmatprep.subr.mxu0 0.0
  %239 = vmatpush2.msra.mxu0 0.0
  %240 = vmatprep.subr.mxu0 0.0
  %241 = vmatpush2.msra.mxu0 0.0
  %242 = vmatprep.subr.mxu0 0.0
  %243 = vmatpush2.msra.mxu0 0.0
  %244 = vmatprep.subr.mxu0 0.0
  %245 = vmatpush2.msra.mxu0 0.0
  %246 = vmatprep.subr.mxu0 0.0
  %247 = vmatpush2.msra.mxu0 0.0
  %248 = vmatprep.subr.mxu0 0.0
  %249 = vmatpush2.msra.mxu0 0.0
  %250 = vmatprep.subr.mxu0 0.0
  %251 = vmatpush2.msra.mxu0 0.0
  %252 = vmatprep.subr.mxu0 0.0
  %253 = vmatpush2.msra.mxu0 0.0
  %254 = vmatprep.subr.mxu0 0.0
  %255 = vmatpush2.msra.mxu0 0.0
  %256 = vmatprep.subr.mxu0 0.0
  %257 = vmatpush2.msra.mxu0 0.0
  %258 = vmatprep.subr.mxu0 0.0
  %259 = vmatpush2.msra.mxu0 0.0
  %260 = vmatprep.subr.mxu0 0.0
  %261 = vmatpush2.msra.mxu0 0.0
  %262 = vmatprep.subr.mxu0 0.0
  %263 = vmatpush2.msra.mxu0 0.0
  %264 = vmatprep.mubr.f32.mxu0 0.0
  %265 = vmatmul.mubr.f32.gmra.mxu0 %v189
  %v266 = vpop.f32.mrf.mxu0
  %v267 = vadd.f32 0.0, %v266
  %v268 = vpop.f32.mrf.mxu0
  %269 = vmatprep.mubr.f32.mxu0 0.0
  %270 = vmatmul.mubr.f32.gmra.mxu0 %v192
  %v271 = vpop.f32.mrf.mxu0
  %v272 = vadd.f32 0.0, %v271
  %v273 = vpop.f32.mrf.mxu0
  %274 = vmatprep.mubr.f32.mxu0 0.0
  %275 = vmatmul.mubr.f32.gmra.mxu0 %v195
  %v276 = vpop.f32.mrf.mxu0
  %v277 = vadd.f32 0.0, %v276
  %v278 = vpop.f32.mrf.mxu0
  %279 = vmatprep.mubr.f32.mxu0 0.0
  %280 = vmatmul.mubr.f32.gmra.mxu0 %v198
  %v281 = vpop.f32.mrf.mxu0
  %v282 = vadd.f32 0.0, %v281
  %v283 = vpop.f32.mrf.mxu0
  %284 = vdwg.mxu0
  %v285 = vld [vmem:[%s3] sm:$0xff]
  %v286 = vld [vmem:[%s3 + $0x8] sm:$0xff]
  %v287 = vld [vmem:[%s3 + $0x10] sm:$0xff]
  %v288 = vld [vmem:[%s3 + $0x18] sm:$0xff]
  %v289 = vld [vmem:[%s4] sm:$0xf]
  %v290 = vld [vmem:[%s4 + $0x4] sm:$0xf]
  %v291 = vld [vmem:[%s4 + $0x8] sm:$0xf]
  %v292 = vld [vmem:[%s4 + $0xc] sm:$0xf]
  %v293 = vld [vmem:[%s5] sm:$0xf]
  %v294 = vld [vmem:[%s5 + $0x4] sm:$0xf]
  %v295 = vld [vmem:[%s5 + $0x8] sm:$0xf]
  %v296 = vld [vmem:[%s5 + $0xc] sm:$0xf]
  %v297 = vld [vmem:[%s5 + $0x10] sm:$0xf]
  %v298 = vld [vmem:[%s5 + $0x14] sm:$0xf]
  %v299 = vld [vmem:[%s5 + $0x18] sm:$0xf]
  %v300 = vld [vmem:[%s5 + $0x1c] sm:$0xf]
  %v301 = vld [vmem:[%s6] sm:$0x1]
  %v302 = vpack.c.bf16 %v286, %v285
  %v303 = vpack.c.bf16 %v288, %v287
  %v304 = vpack.c.bf16 %v272, %v267
  %v305 = vpack.c.bf16 %v282, %v277
  %v314 = vunpack.c.l.b16 %v293
  %v315 = vunpack.c.l.b16 %v294
  %v316 = vunpack.c.l.b16 %v295
  %v317 = vunpack.c.l.b16 %v296
  %v318 = vunpack.c.l.b16 %v297
  %v319 = vunpack.c.l.b16 %v298
  %v320 = vunpack.c.l.b16 %v299
  %v321 = vunpack.c.l.b16 %v300
  %v322 = vpack.c.b16 %v315, %v314
  %v323 = vpack.c.b16 %v317, %v316
  %v324 = vpack.c.b16 %v319, %v318
  %v325 = vpack.c.b16 %v321, %v320
  %vm330 = vcmask 523264
  %v332 = vsel %vm330, %v304, 0
  %v335 = vsel %vm330, %v305, 0
  %337 = vmatprep.subr.bf16.mxu0 0
  %338 = vmatpush1.bf16.msra.mxu0 0
  %339 = vmatprep.subr.bf16.mxu0 0
  %340 = vmatpush1.bf16.msra.mxu0 0
  %341 = vmatprep.subr.bf16.mxu0 0
  %342 = vmatpush1.bf16.msra.mxu0 0
  %343 = vmatprep.subr.bf16.mxu0 0
  %344 = vmatpush1.bf16.msra.mxu0 0
  %345 = vmatprep.subr.bf16.mxu0 0
  %346 = vmatpush1.bf16.msra.mxu0 %v325
  %347 = vmatprep.subr.bf16.mxu0 0
  %348 = vmatpush1.bf16.msra.mxu0 %v324
  %349 = vmatprep.subr.bf16.mxu0 0
  %350 = vmatpush1.bf16.msra.mxu0 %v323
  %351 = vmatprep.subr.bf16.mxu0 0
  %352 = vmatpush1.bf16.msra.mxu0 %v322
  %353 = vmatprep.subr.bf16.mxu0 0
  %354 = vmatpush2.bf16.msra.mxu0 0
  %355 = vmatprep.subr.bf16.mxu0 0
  %356 = vmatpush2.bf16.msra.mxu0 0
  %357 = vmatprep.subr.bf16.mxu0 0
  %358 = vmatpush2.bf16.msra.mxu0 0
  %359 = vmatprep.subr.bf16.mxu0 0
  %360 = vmatpush2.bf16.msra.mxu0 0
  %361 = vmatprep.subr.bf16.mxu0 0
  %362 = vmatpush2.bf16.msra.mxu0 0
  %363 = vmatprep.subr.bf16.mxu0 0
  %364 = vmatpush2.bf16.msra.mxu0 0
  %365 = vmatprep.subr.bf16.mxu0 0
  %366 = vmatpush2.bf16.msra.mxu0 0
  %367 = vmatprep.subr.bf16.mxu0 0
  %368 = vmatpush2.bf16.msra.mxu0 0
  %369 = vmatprep.mubr.bf16.mxu0 0
  %370 = vmatmul.mubr.bf16.gmra.mxu0 %v332
  %v371 = vpop.f32.mrf.mxu0
  %v372 = vadd.f32 0.0, %v371
  %v373 = vpop.f32.mrf.mxu0
  %v374 = vpop.f32.mrf.mxu0
  %v375 = vadd.f32 0.0, %v374
  %v376 = vpop.f32.mrf.mxu0
  %377 = vmatprep.mubr.bf16.mxu0 0
  %378 = vmatmul.mubr.bf16.gmra.mxu0 %v335
  %v379 = vpop.f32.mrf.mxu0
  %v380 = vadd.f32 0.0, %v379
  %v381 = vpop.f32.mrf.mxu0
  %v382 = vpop.f32.mrf.mxu0
  %v383 = vadd.f32 0.0, %v382
  %v384 = vpop.f32.mrf.mxu0
  %385 = vdwg.mxu0
  %v390 = vunpack.c.l.b16 %v289
  %v391 = vunpack.c.l.b16 %v290
  %v392 = vunpack.c.l.b16 %v291
  %v393 = vunpack.c.l.b16 %v292
  %v394 = vpack.c.b16 %v391, %v390
  %v395 = vpack.c.b16 %v393, %v392
  %vm398 = vcmask 261120
  %v400 = vsel %vm398, %v302, 0
  %v403 = vsel %vm398, %v303, 0
  %405 = vmatprep.subr.bf16.mxu0 0
  %406 = vmatpush1.bf16.msra.mxu0 0
  %407 = vmatprep.subr.bf16.mxu0 0
  %408 = vmatpush1.bf16.msra.mxu0 0
  %409 = vmatprep.subr.bf16.mxu0 0
  %410 = vmatpush1.bf16.msra.mxu0 0
  %411 = vmatprep.subr.bf16.mxu0 0
  %412 = vmatpush1.bf16.msra.mxu0 0
  %413 = vmatprep.subr.bf16.mxu0 0
  %414 = vmatpush1.bf16.msra.mxu0 0
  %415 = vmatprep.subr.bf16.mxu0 0
  %416 = vmatpush1.bf16.msra.mxu0 0
  %417 = vmatprep.subr.bf16.mxu0 0
  %418 = vmatpush1.bf16.msra.mxu0 %v395
  %419 = vmatprep.subr.bf16.mxu0 0
  %420 = vmatpush1.bf16.msra.mxu0 %v394
  %421 = vmatprep.subr.bf16.mxu0 0
  %422 = vmatpush2.bf16.msra.mxu0 0
  %423 = vmatprep.subr.bf16.mxu0 0
  %424 = vmatpush2.bf16.msra.mxu0 0
  %425 = vmatprep.subr.bf16.mxu0 0
  %426 = vmatpush2.bf16.msra.mxu0 0
  %427 = vmatprep.subr.bf16.mxu0 0
  %428 = vmatpush2.bf16.msra.mxu0 0
  %429 = vmatprep.subr.bf16.mxu0 0
  %430 = vmatpush2.bf16.msra.mxu0 0
  %431 = vmatprep.subr.bf16.mxu0 0
  %432 = vmatpush2.bf16.msra.mxu0 0
  %433 = vmatprep.subr.bf16.mxu0 0
  %434 = vmatpush2.bf16.msra.mxu0 0
  %435 = vmatprep.subr.bf16.mxu0 0
  %436 = vmatpush2.bf16.msra.mxu0 0
  %437 = vmatprep.mubr.bf16.mxu0 0
  %438 = vmatmul.mubr.bf16.gmra.mxu0 %v400
  %v439 = vpop.f32.mrf.mxu0
  %v440 = vadd.f32 %v372, %v439
  %v441 = vpop.f32.mrf.mxu0
  %v442 = vpop.f32.mrf.mxu0
  %v443 = vadd.f32 %v375, %v442
  %v444 = vpop.f32.mrf.mxu0
  %445 = vmatprep.mubr.bf16.mxu0 0
  %446 = vmatmul.mubr.bf16.gmra.mxu0 %v403
  %v447 = vpop.f32.mrf.mxu0
  %v448 = vadd.f32 %v380, %v447
  %v449 = vpop.f32.mrf.mxu0
  %v450 = vpop.f32.mrf.mxu0
  %v451 = vadd.f32 %v383, %v450
  %v452 = vpop.f32.mrf.mxu0
  %453 = vdwg.mxu0
  %v455 = vlaneseq
  %v456 = vshrl.u32 %v455, 7
  %v457 = vsub.s32 0, %v456
  %v458 = vrot.slane %v301, %v457
  %v460 = vadd.f32 %v440, %v458
  %v461 = vadd.f32 %v443, %v458
  %v462 = vadd.f32 %v448, %v458
  %v463 = vadd.f32 %v451, %v458
  %v464 = vmax.f32 %v460, 0.0
  %v465 = vmax.f32 %v461, 0.0
  %v466 = vmax.f32 %v462, 0.0
  %v467 = vmax.f32 %v463, 0.0
  %468 = vst.msk [vmem:[%s7] sm:$0xff] %vm330, %v464
  %469 = vst.msk [vmem:[%s7 + $0x8] sm:$0xff] %vm330, %v465
  %470 = vst.msk [vmem:[%s7 + $0x10] sm:$0xff] %vm330, %v466
  %471 = vst.msk [vmem:[%s7 + $0x18] sm:$0xff] %vm330, %v467
  // Predicated region
  $region30: #{pointnet2_segment_forward.6} parent=0 // pred_check
    _
  $region31: #{pointnet2_segment_forward.6} parent=0 // pred_check_branch
    %473 = sbr.rel (0) target = $region33
  $region32: #{pointnet2_segment_forward.6} parent=0 // pred_region
    _
  $region33: #{pointnet2_segment_forward.6} parent=0 // pred_fallthru
    _
  // Predicated region
  $region34: #{pointnet2_segment_forward.6} parent=0 // pred_check
    _
  $region35: #{pointnet2_segment_forward.6} parent=0 // pred_check_branch
    %475 = sbr.rel (0) target = $region37
  $region36: #{pointnet2_segment_forward.6} parent=0 // pred_region
    _
  $region37: #{pointnet2_segment_forward.6} parent=0 // pred_fallthru
    _

// kernel: pointnet2_segment_forward.7
$region0: #{pointnet2_segment_forward.7}
  #allocation0 [shape = 'u32[]', space=smem, size = 0x4, offset = 0x4, fixed_abs, tag = 'smem constant byte address 0x4 - core index']
  #allocation1 [shape = 'u32[144,128]{1,0:T(1,128)}', space=vmem, size = 0x12000, scoped, tag = 'internal scratch']
  %s0 = inlined_call_operand.vmem [shape: s32[64,3], index: 0, kind: input, shape index: {}]
  %s1 = inlined_call_operand.vmem [shape: f32[64,3], index: 1, kind: input, shape index: {}]
  %s2 = inlined_call_operand.vmem [shape: f32[32,64], index: 2, kind: input, shape index: {}]
  %s3 = inlined_call_operand.vmem [shape: bf16[64,64], index: 3, kind: input, shape index: {}]
  %s4 = inlined_call_operand.vmem [shape: f32[1,64], index: 4, kind: input, shape index: {}]
  %s5 = inlined_call_operand.vmem [shape: bf16[64,32], index: 5, kind: input, shape index: {}]
  %s6 = inlined_call_operand.vmem [shape: f32[1,32], index: 6, kind: input, shape index: {}]
  %s7 = inlined_call_operand.vmem [shape: bf16[32,128], index: 7, kind: input, shape index: {}]
  %s8 = inlined_call_operand.vmem [shape: f32[1,128], index: 8, kind: input, shape index: {}]
  %s9 = inlined_call_operand.vmem [shape: f32[64,128], index: 9, kind: output, shape index: {}]
  %s10 = sld [smem:[#allocation0]]
  $region46: #{pointnet2_segment_forward.7} parent=0
    _
  %s12 = ssub.s32 1, %s10
  %s13 = scalar_select 0, %s12, %s10
  // Predicated region
  $region2: #{pointnet2_segment_forward.7} parent=0 // pred_check
    _
  $region3: #{pointnet2_segment_forward.7} parent=0 // pred_check_branch
    %15 = sbr.rel (0) target = $region5
  $region4: #{pointnet2_segment_forward.7} parent=0 // pred_region
    _
  $region5: #{pointnet2_segment_forward.7} parent=0 // pred_fallthru
    _
  // Predicated region
  $region6: #{pointnet2_segment_forward.7} parent=0 // pred_check
    _
  $region7: #{pointnet2_segment_forward.7} parent=0 // pred_check_branch
    %17 = sbr.rel (0) target = $region9
  $region8: #{pointnet2_segment_forward.7} parent=0 // pred_region
    _
  $region9: #{pointnet2_segment_forward.7} parent=0 // pred_fallthru
    _
  // Predicated region
  $region10: #{pointnet2_segment_forward.7} parent=0 // pred_check
    _
  $region11: #{pointnet2_segment_forward.7} parent=0 // pred_check_branch
    %19 = sbr.rel (0) target = $region13
  $region12: #{pointnet2_segment_forward.7} parent=0 // pred_region
    _
  $region13: #{pointnet2_segment_forward.7} parent=0 // pred_fallthru
    _
  // Predicated region
  $region14: #{pointnet2_segment_forward.7} parent=0 // pred_check
    _
  $region15: #{pointnet2_segment_forward.7} parent=0 // pred_check_branch
    %21 = sbr.rel (0) target = $region17
  $region16: #{pointnet2_segment_forward.7} parent=0 // pred_region
    _
  $region17: #{pointnet2_segment_forward.7} parent=0 // pred_fallthru
    _
  // Predicated region
  $region18: #{pointnet2_segment_forward.7} parent=0 // pred_check
    _
  $region19: #{pointnet2_segment_forward.7} parent=0 // pred_check_branch
    %23 = sbr.rel (0) target = $region21
  $region20: #{pointnet2_segment_forward.7} parent=0 // pred_region
    _
  $region21: #{pointnet2_segment_forward.7} parent=0 // pred_fallthru
    _
  // Predicated region
  $region22: #{pointnet2_segment_forward.7} parent=0 // pred_check
    _
  $region23: #{pointnet2_segment_forward.7} parent=0 // pred_check_branch
    %25 = sbr.rel (0) target = $region25
  $region24: #{pointnet2_segment_forward.7} parent=0 // pred_region
    _
  $region25: #{pointnet2_segment_forward.7} parent=0 // pred_fallthru
    _
  // Predicated region
  $region26: #{pointnet2_segment_forward.7} parent=0 // pred_check
    _
  $region27: #{pointnet2_segment_forward.7} parent=0 // pred_check_branch
    %27 = sbr.rel (0) target = $region29
  $region28: #{pointnet2_segment_forward.7} parent=0 // pred_region
    _
  $region29: #{pointnet2_segment_forward.7} parent=0 // pred_fallthru
    _
  // Predicated region
  $region30: #{pointnet2_segment_forward.7} parent=0 // pred_check
    _
  $region31: #{pointnet2_segment_forward.7} parent=0 // pred_check_branch
    %29 = sbr.rel (0) target = $region33
  $region32: #{pointnet2_segment_forward.7} parent=0 // pred_region
    _
  $region33: #{pointnet2_segment_forward.7} parent=0 // pred_fallthru
    _
  // Predicated region
  $region34: #{pointnet2_segment_forward.7} parent=0 // pred_check
    _
  $region35: #{pointnet2_segment_forward.7} parent=0 // pred_check_branch
    %31 = sbr.rel (0) target = $region37
  $region36: #{pointnet2_segment_forward.7} parent=0 // pred_region
    _
  $region37: #{pointnet2_segment_forward.7} parent=0 // pred_fallthru
    _
  %v33 = vlaneseq
  %v34 = vand.u32 %v33, 127
  %v35 = vld [vmem:[%s0] sm:$0xff]
  %v36 = vld [vmem:[%s0 + $0x8] sm:$0xff]
  %v37 = vld [vmem:[%s0 + $0x10] sm:$0xff]
  %v38 = vld [vmem:[%s0 + $0x18] sm:$0xff]
  %v39 = vld [vmem:[%s0 + $0x20] sm:$0xff]
  %v40 = vld [vmem:[%s0 + $0x28] sm:$0xff]
  %v41 = vld [vmem:[%s0 + $0x30] sm:$0xff]
  %v42 = vld [vmem:[%s0 + $0x38] sm:$0xff]
  %v43 = vld [vmem:[%s1] sm:$0xff]
  %v44 = vld [vmem:[%s1 + $0x8] sm:$0xff]
  %v45 = vld [vmem:[%s1 + $0x10] sm:$0xff]
  %v46 = vld [vmem:[%s1 + $0x18] sm:$0xff]
  %v47 = vld [vmem:[%s1 + $0x20] sm:$0xff]
  %v48 = vld [vmem:[%s1 + $0x28] sm:$0xff]
  %v49 = vld [vmem:[%s1 + $0x30] sm:$0xff]
  %v50 = vld [vmem:[%s1 + $0x38] sm:$0xff]
  %51 = vset.pattern.permute.xlu0 0
  %52 = vperm.xlu0 %51, %v35
  %v53 = vpop.permute.xlu0 %52
  %54 = vset.pattern.permute.xlu0 0
  %55 = vperm.xlu0 %54, %v36
  %v56 = vpop.permute.xlu0 %55
  %57 = vset.pattern.permute.xlu0 0
  %58 = vperm.xlu0 %57, %v37
  %v59 = vpop.permute.xlu0 %58
  %60 = vset.pattern.permute.xlu0 0
  %61 = vperm.xlu0 %60, %v38
  %v62 = vpop.permute.xlu0 %61
  %63 = vset.pattern.permute.xlu0 0
  %64 = vperm.xlu0 %63, %v39
  %v65 = vpop.permute.xlu0 %64
  %66 = vset.pattern.permute.xlu0 0
  %67 = vperm.xlu0 %66, %v40
  %v68 = vpop.permute.xlu0 %67
  %69 = vset.pattern.permute.xlu0 0
  %70 = vperm.xlu0 %69, %v41
  %v71 = vpop.permute.xlu0 %70
  %72 = vset.pattern.permute.xlu0 0
  %73 = vperm.xlu0 %72, %v42
  %v74 = vpop.permute.xlu0 %73
  %vm75 = vcmp.eq.s32.totalorder %v53, %v34
  %vm76 = vcmp.eq.s32.totalorder %v56, %v34
  %vm77 = vcmp.eq.s32.totalorder %v59, %v34
  %vm78 = vcmp.eq.s32.totalorder %v62, %v34
  %vm79 = vcmp.eq.s32.totalorder %v65, %v34
  %vm80 = vcmp.eq.s32.totalorder %v68, %v34
  %vm81 = vcmp.eq.s32.totalorder %v71, %v34
  %vm82 = vcmp.eq.s32.totalorder %v74, %v34
  %v83 = vsel %vm75, 1, 0
  %v84 = vsel %vm76, 1, 0
  %v85 = vsel %vm77, 1, 0
  %v86 = vsel %vm78, 1, 0
  %v87 = vsel %vm79, 1, 0
  %v88 = vsel %vm80, 1, 0
  %v89 = vsel %vm81, 1, 0
  %v90 = vsel %vm82, 1, 0
  %v91 = vcvt.s32.f32 %v83
  %v92 = vcvt.s32.f32 %v84
  %v93 = vcvt.s32.f32 %v85
  %v94 = vcvt.s32.f32 %v86
  %v95 = vcvt.s32.f32 %v87
  %v96 = vcvt.s32.f32 %v88
  %v97 = vcvt.s32.f32 %v89
  %v98 = vcvt.s32.f32 %v90
  %100 = vset.pattern.permute.xlu0 0
  %101 = vperm.xlu0 %100, %v43
  %v102 = vpop.permute.xlu0 %101
  %105 = vset.pattern.permute.xlu0 0
  %106 = vperm.xlu0 %105, %v44
  %v107 = vpop.permute.xlu0 %106
  %110 = vset.pattern.permute.xlu0 0
  %111 = vperm.xlu0 %110, %v45
  %v112 = vpop.permute.xlu0 %111
  %115 = vset.pattern.permute.xlu0 0
  %116 = vperm.xlu0 %115, %v46
  %v117 = vpop.permute.xlu0 %116
  %120 = vset.pattern.permute.xlu0 0
  %121 = vperm.xlu0 %120, %v47
  %v122 = vpop.permute.xlu0 %121
  %125 = vset.pattern.permute.xlu0 0
  %126 = vperm.xlu0 %125, %v48
  %v127 = vpop.permute.xlu0 %126
  %130 = vset.pattern.permute.xlu0 0
  %131 = vperm.xlu0 %130, %v49
  %v132 = vpop.permute.xlu0 %131
  %135 = vset.pattern.permute.xlu0 0
  %136 = vperm.xlu0 %135, %v50
  %v137 = vpop.permute.xlu0 %136
  %v139 = vmul.f32 %v102, %v91
  %v140 = vmul.f32 %v107, %v92
  %v141 = vmul.f32 %v112, %v93
  %v142 = vmul.f32 %v117, %v94
  %v143 = vmul.f32 %v122, %v95
  %v144 = vmul.f32 %v127, %v96
  %v145 = vmul.f32 %v132, %v97
  %v146 = vmul.f32 %v137, %v98
  %v147 = vadd.f32 %v139, 0.0
  %v148 = vadd.f32 %v140, 0.0
  %v149 = vadd.f32 %v141, 0.0
  %v150 = vadd.f32 %v142, 0.0
  %v151 = vadd.f32 %v143, 0.0
  %v152 = vadd.f32 %v144, 0.0
  %v153 = vadd.f32 %v145, 0.0
  %v154 = vadd.f32 %v146, 0.0
  %155 = vset.pattern.permute.xlu0 1
  %156 = vperm.xlu0 %155, %v35
  %v157 = vpop.permute.xlu0 %156
  %158 = vset.pattern.permute.xlu0 1
  %159 = vperm.xlu0 %158, %v36
  %v160 = vpop.permute.xlu0 %159
  %161 = vset.pattern.permute.xlu0 1
  %162 = vperm.xlu0 %161, %v37
  %v163 = vpop.permute.xlu0 %162
  %164 = vset.pattern.permute.xlu0 1
  %165 = vperm.xlu0 %164, %v38
  %v166 = vpop.permute.xlu0 %165
  %167 = vset.pattern.permute.xlu0 1
  %168 = vperm.xlu0 %167, %v39
  %v169 = vpop.permute.xlu0 %168
  %170 = vset.pattern.permute.xlu0 1
  %171 = vperm.xlu0 %170, %v40
  %v172 = vpop.permute.xlu0 %171
  %173 = vset.pattern.permute.xlu0 1
  %174 = vperm.xlu0 %173, %v41
  %v175 = vpop.permute.xlu0 %174
  %176 = vset.pattern.permute.xlu0 1
  %177 = vperm.xlu0 %176, %v42
  %v178 = vpop.permute.xlu0 %177
  %vm179 = vcmp.eq.s32.totalorder %v157, %v34
  %vm180 = vcmp.eq.s32.totalorder %v160, %v34
  %vm181 = vcmp.eq.s32.totalorder %v163, %v34
  %vm182 = vcmp.eq.s32.totalorder %v166, %v34
  %vm183 = vcmp.eq.s32.totalorder %v169, %v34
  %vm184 = vcmp.eq.s32.totalorder %v172, %v34
  %vm185 = vcmp.eq.s32.totalorder %v175, %v34
  %vm186 = vcmp.eq.s32.totalorder %v178, %v34
  %v187 = vsel %vm179, 1, 0
  %v188 = vsel %vm180, 1, 0
  %v189 = vsel %vm181, 1, 0
  %v190 = vsel %vm182, 1, 0
  %v191 = vsel %vm183, 1, 0
  %v192 = vsel %vm184, 1, 0
  %v193 = vsel %vm185, 1, 0
  %v194 = vsel %vm186, 1, 0
  %v195 = vcvt.s32.f32 %v187
  %v196 = vcvt.s32.f32 %v188
  %v197 = vcvt.s32.f32 %v189
  %v198 = vcvt.s32.f32 %v190
  %v199 = vcvt.s32.f32 %v191
  %v200 = vcvt.s32.f32 %v192
  %v201 = vcvt.s32.f32 %v193
  %v202 = vcvt.s32.f32 %v194
  %203 = vset.pattern.permute.xlu0 1
  %204 = vperm.xlu0 %203, %v43
  %v205 = vpop.permute.xlu0 %204
  %207 = vset.pattern.permute.xlu0 1
  %208 = vperm.xlu0 %207, %v44
  %v209 = vpop.permute.xlu0 %208
  %211 = vset.pattern.permute.xlu0 1
  %212 = vperm.xlu0 %211, %v45
  %v213 = vpop.permute.xlu0 %212
  %215 = vset.pattern.permute.xlu0 1
  %216 = vperm.xlu0 %215, %v46
  %v217 = vpop.permute.xlu0 %216
  %219 = vset.pattern.permute.xlu0 1
  %220 = vperm.xlu0 %219, %v47
  %v221 = vpop.permute.xlu0 %220
  %223 = vset.pattern.permute.xlu0 1
  %224 = vperm.xlu0 %223, %v48
  %v225 = vpop.permute.xlu0 %224
  %227 = vset.pattern.permute.xlu0 1
  %228 = vperm.xlu0 %227, %v49
  %v229 = vpop.permute.xlu0 %228
  %231 = vset.pattern.permute.xlu0 1
  %232 = vperm.xlu0 %231, %v50
  %v233 = vpop.permute.xlu0 %232
  %v235 = vmul.f32 %v205, %v195
  %v236 = vmul.f32 %v209, %v196
  %v237 = vmul.f32 %v213, %v197
  %v238 = vmul.f32 %v217, %v198
  %v239 = vmul.f32 %v221, %v199
  %v240 = vmul.f32 %v225, %v200
  %v241 = vmul.f32 %v229, %v201
  %v242 = vmul.f32 %v233, %v202
  %v243 = vadd.f32 %v147, %v235
  %v244 = vadd.f32 %v148, %v236
  %v245 = vadd.f32 %v149, %v237
  %v246 = vadd.f32 %v150, %v238
  %v247 = vadd.f32 %v151, %v239
  %v248 = vadd.f32 %v152, %v240
  %v249 = vadd.f32 %v153, %v241
  %v250 = vadd.f32 %v154, %v242
  %251 = vset.pattern.permute.xlu0 2
  %252 = vperm.xlu0 %251, %v35
  %v253 = vpop.permute.xlu0 %252
  %254 = vset.pattern.permute.xlu0 2
  %255 = vperm.xlu0 %254, %v36
  %v256 = vpop.permute.xlu0 %255
  %257 = vset.pattern.permute.xlu0 2
  %258 = vperm.xlu0 %257, %v37
  %v259 = vpop.permute.xlu0 %258
  %260 = vset.pattern.permute.xlu0 2
  %261 = vperm.xlu0 %260, %v38
  %v262 = vpop.permute.xlu0 %261
  %263 = vset.pattern.permute.xlu0 2
  %264 = vperm.xlu0 %263, %v39
  %v265 = vpop.permute.xlu0 %264
  %266 = vset.pattern.permute.xlu0 2
  %267 = vperm.xlu0 %266, %v40
  %v268 = vpop.permute.xlu0 %267
  %269 = vset.pattern.permute.xlu0 2
  %270 = vperm.xlu0 %269, %v41
  %v271 = vpop.permute.xlu0 %270
  %272 = vset.pattern.permute.xlu0 2
  %273 = vperm.xlu0 %272, %v42
  %v274 = vpop.permute.xlu0 %273
  %vm275 = vcmp.eq.s32.totalorder %v253, %v34
  %vm276 = vcmp.eq.s32.totalorder %v256, %v34
  %vm277 = vcmp.eq.s32.totalorder %v259, %v34
  %vm278 = vcmp.eq.s32.totalorder %v262, %v34
  %vm279 = vcmp.eq.s32.totalorder %v265, %v34
  %vm280 = vcmp.eq.s32.totalorder %v268, %v34
  %vm281 = vcmp.eq.s32.totalorder %v271, %v34
  %vm282 = vcmp.eq.s32.totalorder %v274, %v34
  %v283 = vsel %vm275, 1, 0
  %v284 = vsel %vm276, 1, 0
  %v285 = vsel %vm277, 1, 0
  %v286 = vsel %vm278, 1, 0
  %v287 = vsel %vm279, 1, 0
  %v288 = vsel %vm280, 1, 0
  %v289 = vsel %vm281, 1, 0
  %v290 = vsel %vm282, 1, 0
  %v291 = vcvt.s32.f32 %v283
  %v292 = vcvt.s32.f32 %v284
  %v293 = vcvt.s32.f32 %v285
  %v294 = vcvt.s32.f32 %v286
  %v295 = vcvt.s32.f32 %v287
  %v296 = vcvt.s32.f32 %v288
  %v297 = vcvt.s32.f32 %v289
  %v298 = vcvt.s32.f32 %v290
  %299 = vset.pattern.permute.xlu0 2
  %300 = vperm.xlu0 %299, %v43
  %v301 = vpop.permute.xlu0 %300
  %303 = vset.pattern.permute.xlu0 2
  %304 = vperm.xlu0 %303, %v44
  %v305 = vpop.permute.xlu0 %304
  %307 = vset.pattern.permute.xlu0 2
  %308 = vperm.xlu0 %307, %v45
  %v309 = vpop.permute.xlu0 %308
  %311 = vset.pattern.permute.xlu0 2
  %312 = vperm.xlu0 %311, %v46
  %v313 = vpop.permute.xlu0 %312
  %315 = vset.pattern.permute.xlu0 2
  %316 = vperm.xlu0 %315, %v47
  %v317 = vpop.permute.xlu0 %316
  %319 = vset.pattern.permute.xlu0 2
  %320 = vperm.xlu0 %319, %v48
  %v321 = vpop.permute.xlu0 %320
  %323 = vset.pattern.permute.xlu0 2
  %324 = vperm.xlu0 %323, %v49
  %v325 = vpop.permute.xlu0 %324
  %327 = vset.pattern.permute.xlu0 2
  %328 = vperm.xlu0 %327, %v50
  %v329 = vpop.permute.xlu0 %328
  %v331 = vmul.f32 %v301, %v291
  %v332 = vmul.f32 %v305, %v292
  %v333 = vmul.f32 %v309, %v293
  %v334 = vmul.f32 %v313, %v294
  %v335 = vmul.f32 %v317, %v295
  %v336 = vmul.f32 %v321, %v296
  %v337 = vmul.f32 %v325, %v297
  %v338 = vmul.f32 %v329, %v298
  %v339 = vadd.f32 %v243, %v331
  %v340 = vadd.f32 %v244, %v332
  %v341 = vadd.f32 %v245, %v333
  %v342 = vadd.f32 %v246, %v334
  %v343 = vadd.f32 %v247, %v335
  %v344 = vadd.f32 %v248, %v336
  %v345 = vadd.f32 %v249, %v337
  %v346 = vadd.f32 %v250, %v338
  %v347 = vld [vmem:[%s2] sm:$0xff]
  %v348 = vld [vmem:[%s2 + $0x8] sm:$0xff]
  %v349 = vld [vmem:[%s2 + $0x10] sm:$0xff]
  %v350 = vld [vmem:[%s2 + $0x18] sm:$0xff]
  %vm351 = vcmask 261120
  %v353 = vsel %vm351, %v339, 0
  %v356 = vsel %vm351, %v340, 0
  %v359 = vsel %vm351, %v341, 0
  %v362 = vsel %vm351, %v342, 0
  %v365 = vsel %vm351, %v343, 0
  %v368 = vsel %vm351, %v344, 0
  %v371 = vsel %vm351, %v345, 0
  %v374 = vsel %vm351, %v346, 0
  %376 = vmatprep.subr.mxu0 0.0
  %377 = vmatpush1.msra.mxu0 0.0
  %378 = vmatprep.subr.mxu0 0.0
  %379 = vmatpush1.msra.mxu0 0.0
  %380 = vmatprep.subr.mxu0 0.0
  %381 = vmatpush1.msra.mxu0 0.0
  %382 = vmatprep.subr.mxu0 0.0
  %383 = vmatpush1.msra.mxu0 0.0
  %384 = vmatprep.subr.mxu0 0.0
  %385 = vmatpush1.msra.mxu0 0.0
  %386 = vmatprep.subr.mxu0 0.0
  %387 = vmatpush1.msra.mxu0 0.0
  %388 = vmatprep.subr.mxu0 0.0
  %389 = vmatpush1.msra.mxu0 0.0
  %390 = vmatprep.subr.mxu0 0.0
  %391 = vmatpush1.msra.mxu0 0.0
  %392 = vmatprep.subr.mxu0 0.0
  %393 = vmatpush1.msra.mxu0 0.0
  %394 = vmatprep.subr.mxu0 0.0
  %395 = vmatpush1.msra.mxu0 0.0
  %396 = vmatprep.subr.mxu0 0.0
  %397 = vmatpush1.msra.mxu0 0.0
  %398 = vmatprep.subr.mxu0 0.0
  %399 = vmatpush1.msra.mxu0 0.0
  %400 = vmatprep.subr.mxu0 0.0
  %401 = vmatpush1.msra.mxu0 %v350
  %402 = vmatprep.subr.mxu0 0.0
  %403 = vmatpush1.msra.mxu0 %v349
  %404 = vmatprep.subr.mxu0 0.0
  %405 = vmatpush1.msra.mxu0 %v348
  %406 = vmatprep.subr.mxu0 0.0
  %407 = vmatpush1.msra.mxu0 %v347
  %408 = vmatprep.subr.mxu0 0.0
  %409 = vmatpush2.msra.mxu0 0.0
  %410 = vmatprep.subr.mxu0 0.0
  %411 = vmatpush2.msra.mxu0 0.0
  %412 = vmatprep.subr.mxu0 0.0
  %413 = vmatpush2.msra.mxu0 0.0
  %414 = vmatprep.subr.mxu0 0.0
  %415 = vmatpush2.msra.mxu0 0.0
  %416 = vmatprep.subr.mxu0 0.0
  %417 = vmatpush2.msra.mxu0 0.0
  %418 = vmatprep.subr.mxu0 0.0
  %419 = vmatpush2.msra.mxu0 0.0
  %420 = vmatprep.subr.mxu0 0.0
  %421 = vmatpush2.msra.mxu0 0.0
  %422 = vmatprep.subr.mxu0 0.0
  %423 = vmatpush2.msra.mxu0 0.0
  %424 = vmatprep.subr.mxu0 0.0
  %425 = vmatpush2.msra.mxu0 0.0
  %426 = vmatprep.subr.mxu0 0.0
  %427 = vmatpush2.msra.mxu0 0.0
  %428 = vmatprep.subr.mxu0 0.0
  %429 = vmatpush2.msra.mxu0 0.0
  %430 = vmatprep.subr.mxu0 0.0
  %431 = vmatpush2.msra.mxu0 0.0
  %432 = vmatprep.subr.mxu0 0.0
  %433 = vmatpush2.msra.mxu0 0.0
  %434 = vmatprep.subr.mxu0 0.0
  %435 = vmatpush2.msra.mxu0 0.0
  %436 = vmatprep.subr.mxu0 0.0
  %437 = vmatpush2.msra.mxu0 0.0
  %438 = vmatprep.subr.mxu0 0.0
  %439 = vmatpush2.msra.mxu0 0.0
  %440 = vmatprep.mubr.f32.mxu0 0.0
  %441 = vmatmul.mubr.f32.gmra.mxu0 %v353
  %v442 = vpop.f32.mrf.mxu0
  %v443 = vadd.f32 0.0, %v442
  %v444 = vpop.f32.mrf.mxu0
  %445 = vmatprep.mubr.f32.mxu0 0.0
  %446 = vmatmul.mubr.f32.gmra.mxu0 %v356
  %v447 = vpop.f32.mrf.mxu0
  %v448 = vadd.f32 0.0, %v447
  %v449 = vpop.f32.mrf.mxu0
  %450 = vmatprep.mubr.f32.mxu0 0.0
  %451 = vmatmul.mubr.f32.gmra.mxu0 %v359
  %v452 = vpop.f32.mrf.mxu0
  %v453 = vadd.f32 0.0, %v452
  %v454 = vpop.f32.mrf.mxu0
  %455 = vmatprep.mubr.f32.mxu0 0.0
  %456 = vmatmul.mubr.f32.gmra.mxu0 %v362
  %v457 = vpop.f32.mrf.mxu0
  %v458 = vadd.f32 0.0, %v457
  %v459 = vpop.f32.mrf.mxu0
  %460 = vmatprep.mubr.f32.mxu0 0.0
  %461 = vmatmul.mubr.f32.gmra.mxu0 %v365
  %v462 = vpop.f32.mrf.mxu0
  %v463 = vadd.f32 0.0, %v462
  %v464 = vpop.f32.mrf.mxu0
  %465 = vmatprep.mubr.f32.mxu0 0.0
  %466 = vmatmul.mubr.f32.gmra.mxu0 %v368
  %v467 = vpop.f32.mrf.mxu0
  %v468 = vadd.f32 0.0, %v467
  %v469 = vpop.f32.mrf.mxu0
  %470 = vmatprep.mubr.f32.mxu0 0.0
  %471 = vmatmul.mubr.f32.gmra.mxu0 %v371
  %v472 = vpop.f32.mrf.mxu0
  %v473 = vadd.f32 0.0, %v472
  %v474 = vpop.f32.mrf.mxu0
  %475 = vmatprep.mubr.f32.mxu0 0.0
  %476 = vmatmul.mubr.f32.gmra.mxu0 %v374
  %v477 = vpop.f32.mrf.mxu0
  %v478 = vadd.f32 0.0, %v477
  %v479 = vpop.f32.mrf.mxu0
  %480 = vdwg.mxu0
  %v481 = vld [vmem:[%s3] sm:$0xf]
  %v482 = vld [vmem:[%s3 + $0x4] sm:$0xf]
  %v483 = vld [vmem:[%s3 + $0x8] sm:$0xf]
  %v484 = vld [vmem:[%s3 + $0xc] sm:$0xf]
  %v485 = vld [vmem:[%s3 + $0x10] sm:$0xf]
  %v486 = vld [vmem:[%s3 + $0x14] sm:$0xf]
  %v487 = vld [vmem:[%s3 + $0x18] sm:$0xf]
  %v488 = vld [vmem:[%s3 + $0x1c] sm:$0xf]
  %v489 = vld [vmem:[%s4] sm:$0x1]
  %v490 = vpack.c.bf16 %v448, %v443
  %v491 = vpack.c.bf16 %v458, %v453
  %v492 = vpack.c.bf16 %v468, %v463
  %v493 = vpack.c.bf16 %v478, %v473
  %v495 = vlaneseq
  %v496 = vshrl.u32 %v495, 7
  %v497 = vsub.s32 0, %v496
  %v498 = vrot.slane %v489, %v497
  %v508 = vunpack.c.l.b16 %v481
  %v509 = vunpack.c.l.b16 %v482
  %v510 = vunpack.c.l.b16 %v483
  %v511 = vunpack.c.l.b16 %v484
  %v512 = vunpack.c.l.b16 %v485
  %v513 = vunpack.c.l.b16 %v486
  %v514 = vunpack.c.l.b16 %v487
  %v515 = vunpack.c.l.b16 %v488
  %v516 = vpack.c.b16 %v509, %v508
  %v517 = vpack.c.b16 %v511, %v510
  %v518 = vpack.c.b16 %v513, %v512
  %v519 = vpack.c.b16 %v515, %v514
  %vm524 = vcmask 523264
  %v526 = vsel %vm524, %v490, 0
  %v529 = vsel %vm524, %v491, 0
  %v532 = vsel %vm524, %v492, 0
  %v535 = vsel %vm524, %v493, 0
  %537 = vmatprep.subr.bf16.mxu0 0
  %538 = vmatpush1.bf16.msra.mxu0 0
  %539 = vmatprep.subr.bf16.mxu0 0
  %540 = vmatpush1.bf16.msra.mxu0 0
  %541 = vmatprep.subr.bf16.mxu0 0
  %542 = vmatpush1.bf16.msra.mxu0 0
  %543 = vmatprep.subr.bf16.mxu0 0
  %544 = vmatpush1.bf16.msra.mxu0 0
  %545 = vmatprep.subr.bf16.mxu0 0
  %546 = vmatpush1.bf16.msra.mxu0 %v519
  %547 = vmatprep.subr.bf16.mxu0 0
  %548 = vmatpush1.bf16.msra.mxu0 %v518
  %549 = vmatprep.subr.bf16.mxu0 0
  %550 = vmatpush1.bf16.msra.mxu0 %v517
  %551 = vmatprep.subr.bf16.mxu0 0
  %552 = vmatpush1.bf16.msra.mxu0 %v516
  %553 = vmatprep.subr.bf16.mxu0 0
  %554 = vmatpush2.bf16.msra.mxu0 0
  %555 = vmatprep.subr.bf16.mxu0 0
  %556 = vmatpush2.bf16.msra.mxu0 0
  %557 = vmatprep.subr.bf16.mxu0 0
  %558 = vmatpush2.bf16.msra.mxu0 0
  %559 = vmatprep.subr.bf16.mxu0 0
  %560 = vmatpush2.bf16.msra.mxu0 0
  %561 = vmatprep.subr.bf16.mxu0 0
  %562 = vmatpush2.bf16.msra.mxu0 0
  %563 = vmatprep.subr.bf16.mxu0 0
  %564 = vmatpush2.bf16.msra.mxu0 0
  %565 = vmatprep.subr.bf16.mxu0 0
  %566 = vmatpush2.bf16.msra.mxu0 0
  %567 = vmatprep.subr.bf16.mxu0 0
  %568 = vmatpush2.bf16.msra.mxu0 0
  %569 = vmatprep.mubr.bf16.mxu0 0
  %570 = vmatmul.mubr.bf16.gmra.mxu0 %v526
  %v571 = vpop.f32.mrf.mxu0
  %v572 = vadd.f32 %v498, %v571
  %v573 = vpop.f32.mrf.mxu0
  %v574 = vpop.f32.mrf.mxu0
  %v575 = vadd.f32 %v498, %v574
  %v576 = vpop.f32.mrf.mxu0
  %577 = vmatprep.mubr.bf16.mxu0 0
  %578 = vmatmul.mubr.bf16.gmra.mxu0 %v529
  %v579 = vpop.f32.mrf.mxu0
  %v580 = vadd.f32 %v498, %v579
  %v581 = vpop.f32.mrf.mxu0
  %v582 = vpop.f32.mrf.mxu0
  %v583 = vadd.f32 %v498, %v582
  %v584 = vpop.f32.mrf.mxu0
  %585 = vmatprep.mubr.bf16.mxu0 0
  %586 = vmatmul.mubr.bf16.gmra.mxu0 %v532
  %v587 = vpop.f32.mrf.mxu0
  %v588 = vadd.f32 %v498, %v587
  %v589 = vpop.f32.mrf.mxu0
  %v590 = vpop.f32.mrf.mxu0
  %v591 = vadd.f32 %v498, %v590
  %v592 = vpop.f32.mrf.mxu0
  %593 = vmatprep.mubr.bf16.mxu0 0
  %594 = vmatmul.mubr.bf16.gmra.mxu0 %v535
  %v595 = vpop.f32.mrf.mxu0
  %v596 = vadd.f32 %v498, %v595
  %v597 = vpop.f32.mrf.mxu0
  %v598 = vpop.f32.mrf.mxu0
  %v599 = vadd.f32 %v498, %v598
  %v600 = vpop.f32.mrf.mxu0
  %601 = vdwg.mxu0
  %v602 = vmax.f32 %v572, 0.0
  %v603 = vmax.f32 %v575, 0.0
  %v604 = vmax.f32 %v580, 0.0
  %v605 = vmax.f32 %v583, 0.0
  %v606 = vmax.f32 %v588, 0.0
  %v607 = vmax.f32 %v591, 0.0
  %v608 = vmax.f32 %v596, 0.0
  %v609 = vmax.f32 %v599, 0.0
  %v610 = vld [vmem:[%s5] sm:$0xf]
  %v611 = vld [vmem:[%s5 + $0x4] sm:$0xf]
  %v612 = vld [vmem:[%s5 + $0x8] sm:$0xf]
  %v613 = vld [vmem:[%s5 + $0xc] sm:$0xf]
  %v614 = vld [vmem:[%s5 + $0x10] sm:$0xf]
  %v615 = vld [vmem:[%s5 + $0x14] sm:$0xf]
  %v616 = vld [vmem:[%s5 + $0x18] sm:$0xf]
  %v617 = vld [vmem:[%s5 + $0x1c] sm:$0xf]
  %v618 = vld [vmem:[%s6] sm:$0x1]
  %v619 = vpack.c.bf16 %v603, %v602
  %v620 = vpack.c.bf16 %v605, %v604
  %v621 = vpack.c.bf16 %v607, %v606
  %v622 = vpack.c.bf16 %v609, %v608
  %v624 = vlaneseq
  %v625 = vshrl.u32 %v624, 7
  %v626 = vsub.s32 0, %v625
  %v627 = vrot.slane %v618, %v626
  %v637 = vunpack.c.l.b16 %v610
  %v638 = vunpack.c.l.b16 %v611
  %v639 = vunpack.c.l.b16 %v612
  %v640 = vunpack.c.l.b16 %v613
  %v641 = vunpack.c.l.b16 %v614
  %v642 = vunpack.c.l.b16 %v615
  %v643 = vunpack.c.l.b16 %v616
  %v644 = vunpack.c.l.b16 %v617
  %v645 = vpack.c.b16 %v638, %v637
  %v646 = vpack.c.b16 %v640, %v639
  %v647 = vpack.c.b16 %v642, %v641
  %v648 = vpack.c.b16 %v644, %v643
  %v654 = vsel %vm524, %v619, 0
  %v657 = vsel %vm524, %v620, 0
  %v660 = vsel %vm524, %v621, 0
  %v663 = vsel %vm524, %v622, 0
  %665 = vmatprep.subr.bf16.mxu0 0
  %666 = vmatpush1.bf16.msra.mxu0 0
  %667 = vmatprep.subr.bf16.mxu0 0
  %668 = vmatpush1.bf16.msra.mxu0 0
  %669 = vmatprep.subr.bf16.mxu0 0
  %670 = vmatpush1.bf16.msra.mxu0 0
  %671 = vmatprep.subr.bf16.mxu0 0
  %672 = vmatpush1.bf16.msra.mxu0 0
  %673 = vmatprep.subr.bf16.mxu0 0
  %674 = vmatpush1.bf16.msra.mxu0 %v648
  %675 = vmatprep.subr.bf16.mxu0 0
  %676 = vmatpush1.bf16.msra.mxu0 %v647
  %677 = vmatprep.subr.bf16.mxu0 0
  %678 = vmatpush1.bf16.msra.mxu0 %v646
  %679 = vmatprep.subr.bf16.mxu0 0
  %680 = vmatpush1.bf16.msra.mxu0 %v645
  %681 = vmatprep.subr.bf16.mxu0 0
  %682 = vmatpush2.bf16.msra.mxu0 0
  %683 = vmatprep.subr.bf16.mxu0 0
  %684 = vmatpush2.bf16.msra.mxu0 0
  %685 = vmatprep.subr.bf16.mxu0 0
  %686 = vmatpush2.bf16.msra.mxu0 0
  %687 = vmatprep.subr.bf16.mxu0 0
  %688 = vmatpush2.bf16.msra.mxu0 0
  %689 = vmatprep.subr.bf16.mxu0 0
  %690 = vmatpush2.bf16.msra.mxu0 0
  %691 = vmatprep.subr.bf16.mxu0 0
  %692 = vmatpush2.bf16.msra.mxu0 0
  %693 = vmatprep.subr.bf16.mxu0 0
  %694 = vmatpush2.bf16.msra.mxu0 0
  %695 = vmatprep.subr.bf16.mxu0 0
  %696 = vmatpush2.bf16.msra.mxu0 0
  %697 = vmatprep.mubr.bf16.mxu0 0
  %698 = vmatmul.mubr.bf16.gmra.mxu0 %v654
  %v699 = vpop.f32.mrf.mxu0
  %v700 = vadd.f32 %v627, %v699
  %v701 = vpop.f32.mrf.mxu0
  %v702 = vpop.f32.mrf.mxu0
  %v703 = vadd.f32 %v627, %v702
  %v704 = vpop.f32.mrf.mxu0
  %705 = vmatprep.mubr.bf16.mxu0 0
  %706 = vmatmul.mubr.bf16.gmra.mxu0 %v657
  %v707 = vpop.f32.mrf.mxu0
  %v708 = vadd.f32 %v627, %v707
  %v709 = vpop.f32.mrf.mxu0
  %v710 = vpop.f32.mrf.mxu0
  %v711 = vadd.f32 %v627, %v710
  %v712 = vpop.f32.mrf.mxu0
  %713 = vmatprep.mubr.bf16.mxu0 0
  %714 = vmatmul.mubr.bf16.gmra.mxu0 %v660
  %v715 = vpop.f32.mrf.mxu0
  %v716 = vadd.f32 %v627, %v715
  %v717 = vpop.f32.mrf.mxu0
  %v718 = vpop.f32.mrf.mxu0
  %v719 = vadd.f32 %v627, %v718
  %v720 = vpop.f32.mrf.mxu0
  %721 = vmatprep.mubr.bf16.mxu0 0
  %722 = vmatmul.mubr.bf16.gmra.mxu0 %v663
  %v723 = vpop.f32.mrf.mxu0
  %v724 = vadd.f32 %v627, %v723
  %v725 = vpop.f32.mrf.mxu0
  %v726 = vpop.f32.mrf.mxu0
  %v727 = vadd.f32 %v627, %v726
  %v728 = vpop.f32.mrf.mxu0
  %729 = vdwg.mxu0
  %v730 = vmax.f32 %v700, 0.0
  %v731 = vmax.f32 %v703, 0.0
  %v732 = vmax.f32 %v708, 0.0
  %v733 = vmax.f32 %v711, 0.0
  %v734 = vmax.f32 %v716, 0.0
  %v735 = vmax.f32 %v719, 0.0
  %v736 = vmax.f32 %v724, 0.0
  %v737 = vmax.f32 %v727, 0.0
  %v738 = vld [vmem:[%s7] sm:$0xf]
  %v739 = vld [vmem:[%s7 + $0x4] sm:$0xf]
  %v740 = vld [vmem:[%s7 + $0x8] sm:$0xf]
  %v741 = vld [vmem:[%s7 + $0xc] sm:$0xf]
  %v742 = vld [vmem:[%s8] sm:$0x1]
  %v743 = vpack.c.bf16 %v731, %v730
  %v744 = vpack.c.bf16 %v733, %v732
  %v745 = vpack.c.bf16 %v735, %v734
  %v746 = vpack.c.bf16 %v737, %v736
  %v748 = vlaneseq
  %v749 = vshrl.u32 %v748, 7
  %v750 = vsub.s32 0, %v749
  %v751 = vrot.slane %v742, %v750
  %v757 = vunpack.c.l.b16 %v738
  %v758 = vunpack.c.l.b16 %v739
  %v759 = vunpack.c.l.b16 %v740
  %v760 = vunpack.c.l.b16 %v741
  %v761 = vpack.c.b16 %v758, %v757
  %v762 = vpack.c.b16 %v760, %v759
  %v766 = vsel %vm351, %v743, 0
  %v769 = vsel %vm351, %v744, 0
  %v772 = vsel %vm351, %v745, 0
  %v775 = vsel %vm351, %v746, 0
  %777 = vmatprep.subr.bf16.mxu0 0
  %778 = vmatpush1.bf16.msra.mxu0 0
  %779 = vmatprep.subr.bf16.mxu0 0
  %780 = vmatpush1.bf16.msra.mxu0 0
  %781 = vmatprep.subr.bf16.mxu0 0
  %782 = vmatpush1.bf16.msra.mxu0 0
  %783 = vmatprep.subr.bf16.mxu0 0
  %784 = vmatpush1.bf16.msra.mxu0 0
  %785 = vmatprep.subr.bf16.mxu0 0
  %786 = vmatpush1.bf16.msra.mxu0 0
  %787 = vmatprep.subr.bf16.mxu0 0
  %788 = vmatpush1.bf16.msra.mxu0 0
  %789 = vmatprep.subr.bf16.mxu0 0
  %790 = vmatpush1.bf16.msra.mxu0 %v762
  %791 = vmatprep.subr.bf16.mxu0 0
  %792 = vmatpush1.bf16.msra.mxu0 %v761
  %793 = vmatprep.subr.bf16.mxu0 0
  %794 = vmatpush2.bf16.msra.mxu0 0
  %795 = vmatprep.subr.bf16.mxu0 0
  %796 = vmatpush2.bf16.msra.mxu0 0
  %797 = vmatprep.subr.bf16.mxu0 0
  %798 = vmatpush2.bf16.msra.mxu0 0
  %799 = vmatprep.subr.bf16.mxu0 0
  %800 = vmatpush2.bf16.msra.mxu0 0
  %801 = vmatprep.subr.bf16.mxu0 0
  %802 = vmatpush2.bf16.msra.mxu0 0
  %803 = vmatprep.subr.bf16.mxu0 0
  %804 = vmatpush2.bf16.msra.mxu0 0
  %805 = vmatprep.subr.bf16.mxu0 0
  %806 = vmatpush2.bf16.msra.mxu0 0
  %807 = vmatprep.subr.bf16.mxu0 0
  %808 = vmatpush2.bf16.msra.mxu0 0
  %809 = vmatprep.mubr.bf16.mxu0 0
  %810 = vmatmul.mubr.bf16.gmra.mxu0 %v766
  %v811 = vpop.f32.mrf.mxu0
  %v812 = vadd.f32 %v751, %v811
  %v813 = vpop.f32.mrf.mxu0
  %v814 = vpop.f32.mrf.mxu0
  %v815 = vadd.f32 %v751, %v814
  %v816 = vpop.f32.mrf.mxu0
  %817 = vmatprep.mubr.bf16.mxu0 0
  %818 = vmatmul.mubr.bf16.gmra.mxu0 %v769
  %v819 = vpop.f32.mrf.mxu0
  %v820 = vadd.f32 %v751, %v819
  %v821 = vpop.f32.mrf.mxu0
  %v822 = vpop.f32.mrf.mxu0
  %v823 = vadd.f32 %v751, %v822
  %v824 = vpop.f32.mrf.mxu0
  %825 = vmatprep.mubr.bf16.mxu0 0
  %826 = vmatmul.mubr.bf16.gmra.mxu0 %v772
  %v827 = vpop.f32.mrf.mxu0
  %v828 = vadd.f32 %v751, %v827
  %v829 = vpop.f32.mrf.mxu0
  %v830 = vpop.f32.mrf.mxu0
  %v831 = vadd.f32 %v751, %v830
  %v832 = vpop.f32.mrf.mxu0
  %833 = vmatprep.mubr.bf16.mxu0 0
  %834 = vmatmul.mubr.bf16.gmra.mxu0 %v775
  %v835 = vpop.f32.mrf.mxu0
  %v836 = vadd.f32 %v751, %v835
  %v837 = vpop.f32.mrf.mxu0
  %v838 = vpop.f32.mrf.mxu0
  %v839 = vadd.f32 %v751, %v838
  %v840 = vpop.f32.mrf.mxu0
  %841 = vdwg.mxu0
  %842 = vst [vmem:[%s9] sm:$0xff] %v812
  %843 = vst [vmem:[%s9 + $0x8] sm:$0xff] %v815
  %844 = vst [vmem:[%s9 + $0x10] sm:$0xff] %v820
  %845 = vst [vmem:[%s9 + $0x18] sm:$0xff] %v823
  %846 = vst [vmem:[%s9 + $0x20] sm:$0xff] %v828
  %847 = vst [vmem:[%s9 + $0x28] sm:$0xff] %v831
  %848 = vst [vmem:[%s9 + $0x30] sm:$0xff] %v836
  %849 = vst [vmem:[%s9 + $0x38] sm:$0xff] %v839
  // Predicated region
  $region38: #{pointnet2_segment_forward.7} parent=0 // pred_check
    _
  $region39: #{pointnet2_segment_forward.7} parent=0 // pred_check_branch
    %851 = sbr.rel (0) target = $region41
  $region40: #{pointnet2_segment_forward.7} parent=0 // pred_region
    _
  $region41: #{pointnet2_segment_forward.7} parent=0 // pred_fallthru
    _
  // Predicated region
  $region42: #{pointnet2_segment_forward.7} parent=0 // pred_check
    _
  $region43: #{pointnet2_segment_forward.7} parent=0 // pred_check_branch
    %853 = sbr.rel (0) target = $region45
  $region44: #{pointnet2_segment_forward.7} parent=0 // pred_region
    _
  $region45: #{pointnet2_segment_forward.7} parent=0 // pred_fallthru
    _

</llo_original>
